<compile_context>
chip_gen: v7x
topology: tpu7x:2x2x1
jax: 0.10.0
libtpu: 0.0.40
codegen_flags: <defaults>
</compile_context>

<pallas_src>
import functools
import math

import jax
import jax.numpy as jnp
from jax.experimental import pallas as pl
from jax.experimental.pallas import tpu as pltpu

# Matmul inputs fed to the MXU in bf16 (f32 accumulation / statistics).
# Set MXU_DTYPE=jnp.float32 and APPROX_RECIP=False for f32 parity testing.
MXU_DTYPE = jnp.bfloat16
APPROX_RECIP = True
LN_EPS = 1e-5

ROW_TILE = 512   # FFN row-tile target (multiple of 8)
Q_TILE = 128     # attention query-tile target (multiple of 8)


def _tile(n, target):
    """Whole extent if small, else a fixed multiple-of-8 tile + cdiv grid."""
    return n if n <= target else target


@functools.lru_cache(maxsize=None)
def _vmem_limit():
    """Per-generation VMEM budget: ~75% of capacity, capped at 100 MiB."""
    try:
        cap = int(pltpu.get_tpu_info().vmem_capacity_bytes)
    except Exception:
        cap = 128 * 1024 * 1024
    return max(32 * 1024 * 1024, min(cap * 3 // 4, 100 * 1024 * 1024))


def _compiler_params(semantics):
    return pltpu.CompilerParams(dimension_semantics=semantics,
                                vmem_limit_bytes=_vmem_limit())


# --------------------------------------------------------------------------
# In-kernel helpers
# --------------------------------------------------------------------------
def _layer_norm(x, gamma, beta, eps):
    mean = jnp.mean(x, axis=-1, keepdims=True)
    var = jnp.mean((x - mean) ** 2, axis=-1, keepdims=True)
    return (x - mean) * jax.lax.rsqrt(var + eps) * gamma + beta


def _mha(q, k, v, mask, num_heads, scale):
    """Multi-head attention on VMEM-resident tiles.

    q: (Sq, E) f32, k/v: (Sk, E) f32, mask: (Sq, Sk) additive f32 or None.
    Returns (Sq, E) f32 context.  Heads are a batch dim of a single
    dot_general (no per-head unroll / concatenate).
    """
    Sq, E = q.shape
    Sk = k.shape[0]
    Dh = E // num_heads
    qh = jnp.swapaxes((q * scale).astype(MXU_DTYPE).reshape(Sq, num_heads, Dh), 0, 1)
    kh = jnp.swapaxes(k.astype(MXU_DTYPE).reshape(Sk, num_heads, Dh), 0, 1)
    vh = jnp.swapaxes(v.astype(MXU_DTYPE).reshape(Sk, num_heads, Dh), 0, 1)
    # scores: (H, Sq, Sk), f32
    s = jax.lax.dot_general(qh, kh, (((2,), (2,)), ((0,), (0,))),
                            preferred_element_type=jnp.float32)
    if mask is not None:
        s = s + mask[None, :, :]
    s = s - jnp.max(s, axis=-1, keepdims=True)
    p = jnp.exp(s)
    p = p * pl.reciprocal(jnp.sum(p, axis=-1, keepdims=True), approx=APPROX_RECIP)
    o = jax.lax.dot_general(p.astype(MXU_DTYPE), vh, (((2,), (1,)), ((0,), (0,))),
                            preferred_element_type=jnp.float32)       # (H, Sq, Dh)
    return jnp.swapaxes(o, 0, 1).reshape(Sq, E)


# --------------------------------------------------------------------------
# Kernel bodies
# --------------------------------------------------------------------------
def _self_attn_block_kernel(xq_ref, xkv_ref, mask_ref,
                            wq_ref, bq_ref, wkv_ref, bkv_ref,
                            wo_ref, bo_ref, g_ref, be_ref,
                            o_ref, *, num_heads, scale, eps):
    E = o_ref.shape[-1]
    xq = xq_ref[0].astype(jnp.float32)            # (tq, E)  query rows + residual
    xkv = xkv_ref[0]                              # (S,  E)  full sequence for K/V
    q = jnp.dot(xq.astype(MXU_DTYPE), wq_ref[...],
                preferred_element_type=jnp.float32) + bq_ref[...]
    kv = jnp.dot(xkv.astype(MXU_DTYPE), wkv_ref[...],
                 preferred_element_type=jnp.float32) + bkv_ref[...]
    k = kv[:, :E]
    v = kv[:, E:]
    ctx = _mha(q, k, v, mask_ref[...].astype(jnp.float32), num_heads, scale)
    proj = jnp.dot(ctx.astype(MXU_DTYPE), wo_ref[...],
                   preferred_element_type=jnp.float32) + bo_ref[...]
    r = xq + proj
    o_ref[0] = _layer_norm(r, g_ref[...], be_ref[...], eps).astype(o_ref.dtype)


def _cross_attn_block_kernel(xq_ref, mem_ref,
                             wq_ref, bq_ref, wkv_ref, bkv_ref,
                             wo_ref, bo_ref, g_ref, be_ref,
                             o_ref, *, num_heads, scale, eps):
    E = o_ref.shape[-1]
    xq = xq_ref[0].astype(jnp.float32)            # (tq, E)
    mem = mem_ref[0]                              # (Sm, E)
    q = jnp.dot(xq.astype(MXU_DTYPE), wq_ref[...],
                preferred_element_type=jnp.float32) + bq_ref[...]
    kv = jnp.dot(mem.astype(MXU_DTYPE), wkv_ref[...],
                 preferred_element_type=jnp.float32) + bkv_ref[...]
    k = kv[:, :E]
    v = kv[:, E:]
    ctx = _mha(q, k, v, None, num_heads, scale)   # no mask on cross-attention
    proj = jnp.dot(ctx.astype(MXU_DTYPE), wo_ref[...],
                   preferred_element_type=jnp.float32) + bo_ref[...]
    r = xq + proj
    o_ref[0] = _layer_norm(r, g_ref[...], be_ref[...], eps).astype(o_ref.dtype)


def _ffn_add_ln_kernel(x_ref, w1_ref, b1_ref, w2_ref, b2_ref, g_ref, be_ref,
                       o_ref, *, eps):
    x = x_ref[...].astype(jnp.float32)
    h = jnp.dot(x.astype(MXU_DTYPE), w1_ref[...],
                preferred_element_type=jnp.float32) + b1_ref[...]
    h = jnp.maximum(h, 0.0)                       # hidden never leaves VMEM
    f = jnp.dot(h.astype(MXU_DTYPE), w2_ref[...],
                preferred_element_type=jnp.float32) + b2_ref[...]
    r = x + f
    o_ref[...] = _layer_norm(r, g_ref[...], be_ref[...], eps).astype(o_ref.dtype)


# --------------------------------------------------------------------------
# pallas_call wrappers
# --------------------------------------------------------------------------
def self_attn_block(tgt, mask, w_q, b_q, w_kv, b_kv, w_o, b_o, gamma, beta,
                    num_heads, eps=LN_EPS):
    """LayerNorm(tgt + SelfAttn(tgt, mask) @ Wo + bo), fully fused."""
    B, S, E = tgt.shape
    Dh = E // num_heads
    scale = 1.0 / math.sqrt(Dh)
    tq = _tile(S, Q_TILE)
    n_qt = pl.cdiv(S, tq)
    cost = pl.CostEstimate(
        flops=2 * B * S * E * E + 2 * B * S * E * 2 * E * n_qt
        + 4 * B * num_heads * S * S * Dh + 2 * B * S * E * E,
        transcendentals=B * num_heads * S * S,
        bytes_accessed=(2 * B * S * E + S * S) * 4 + 5 * E * E * 2,
    )
    kernel = functools.partial(_self_attn_block_kernel, num_heads=num_heads,
                               scale=scale, eps=eps)
    return pl.pallas_call(
        kernel,
        out_shape=jax.ShapeDtypeStruct((B, S, E), tgt.dtype),
        grid_spec=pltpu.PrefetchScalarGridSpec(
            num_scalar_prefetch=0,
            grid=(B, n_qt),
            in_specs=[
                pl.BlockSpec((1, tq, E), lambda b, i: (b, i, 0)),   # query rows
                pl.BlockSpec((1, S, E), lambda b, i: (b, 0, 0)),    # full seq (K/V)
                pl.BlockSpec((tq, S), lambda b, i: (i, 0)),         # mask slice
                pl.BlockSpec((E, E), lambda b, i: (0, 0)),          # w_q
                pl.BlockSpec((1, E), lambda b, i: (0, 0)),          # b_q
                pl.BlockSpec((E, 2 * E), lambda b, i: (0, 0)),      # w_kv
                pl.BlockSpec((1, 2 * E), lambda b, i: (0, 0)),      # b_kv
                pl.BlockSpec((E, E), lambda b, i: (0, 0)),          # w_out
                pl.BlockSpec((1, E), lambda b, i: (0, 0)),          # b_out
                pl.BlockSpec((1, E), lambda b, i: (0, 0)),          # gamma
                pl.BlockSpec((1, E), lambda b, i: (0, 0)),          # beta
            ],
            out_specs=pl.BlockSpec((1, tq, E), lambda b, i: (b, i, 0)),
        ),
        compiler_params=_compiler_params(("parallel", "parallel")),
        cost_estimate=cost,
    )(tgt, tgt, mask, w_q, b_q.reshape(1, E), w_kv, b_kv.reshape(1, 2 * E),
      w_o, b_o.reshape(1, E), gamma.reshape(1, E), beta.reshape(1, E))


def cross_attn_block(x, memory, w_q, b_q, w_kv, b_kv, w_o, b_o, gamma, beta,
                     num_heads, eps=LN_EPS):
    """LayerNorm(x + CrossAttn(x, memory) @ Wo + bo), fully fused (no mask)."""
    B, S, E = x.shape
    Sm = memory.shape[1]
    Dh = E // num_heads
    scale = 1.0 / math.sqrt(Dh)
    tq = _tile(S, Q_TILE)
    n_qt = pl.cdiv(S, tq)
    cost = pl.CostEstimate(
        flops=2 * B * S * E * E + 2 * B * Sm * E * 2 * E * n_qt
        + 4 * B * num_heads * S * Sm * Dh + 2 * B * S * E * E,
        transcendentals=B * num_heads * S * Sm,
        bytes_accessed=(2 * B * S * E + B * Sm * E) * 4 + 5 * E * E * 2,
    )
    kernel = functools.partial(_cross_attn_block_kernel, num_heads=num_heads,
                               scale=scale, eps=eps)
    return pl.pallas_call(
        kernel,
        out_shape=jax.ShapeDtypeStruct((B, S, E), x.dtype),
        grid_spec=pltpu.PrefetchScalarGridSpec(
            num_scalar_prefetch=0,
            grid=(B, n_qt),
            in_specs=[
                pl.BlockSpec((1, tq, E), lambda b, i: (b, i, 0)),   # query rows
                pl.BlockSpec((1, Sm, E), lambda b, i: (b, 0, 0)),   # encoder memory
                pl.BlockSpec((E, E), lambda b, i: (0, 0)),          # w_q
                pl.BlockSpec((1, E), lambda b, i: (0, 0)),          # b_q
                pl.BlockSpec((E, 2 * E), lambda b, i: (0, 0)),      # w_kv
                pl.BlockSpec((1, 2 * E), lambda b, i: (0, 0)),      # b_kv
                pl.BlockSpec((E, E), lambda b, i: (0, 0)),          # w_out
                pl.BlockSpec((1, E), lambda b, i: (0, 0)),          # b_out
                pl.BlockSpec((1, E), lambda b, i: (0, 0)),          # gamma
                pl.BlockSpec((1, E), lambda b, i: (0, 0)),          # beta
            ],
            out_specs=pl.BlockSpec((1, tq, E), lambda b, i: (b, i, 0)),
        ),
        compiler_params=_compiler_params(("parallel", "parallel")),
        cost_estimate=cost,
    )(x, memory, w_q, b_q.reshape(1, E), w_kv, b_kv.reshape(1, 2 * E),
      w_o, b_o.reshape(1, E), gamma.reshape(1, E), beta.reshape(1, E))


def ffn_add_ln(x, w1, b1, w2, b2, gamma, beta, eps=LN_EPS):
    """LayerNorm(x + relu(x @ w1 + b1) @ w2 + b2), fully fused."""
    M, E = x.shape
    H = w1.shape[1]
    tm = _tile(M, ROW_TILE)
    n_mt = pl.cdiv(M, tm)
    cost = pl.CostEstimate(
        flops=4 * M * E * H + 12 * M * E,
        transcendentals=M,
        bytes_accessed=2 * M * E * 4 + (E * H + H * E) * 2 + (H + 5 * E) * 4,
    )
    return pl.pallas_call(
        functools.partial(_ffn_add_ln_kernel, eps=eps),
        out_shape=jax.ShapeDtypeStruct((M, E), x.dtype),
        grid_spec=pltpu.PrefetchScalarGridSpec(
            num_scalar_prefetch=0,
            grid=(n_mt,),
            in_specs=[
                pl.BlockSpec((tm, E), lambda i: (i, 0)),
                pl.BlockSpec((E, H), lambda i: (0, 0)),
                pl.BlockSpec((1, H), lambda i: (0, 0)),
                pl.BlockSpec((H, E), lambda i: (0, 0)),
                pl.BlockSpec((1, E), lambda i: (0, 0)),
                pl.BlockSpec((1, E), lambda i: (0, 0)),
                pl.BlockSpec((1, E), lambda i: (0, 0)),
            ],
            out_specs=pl.BlockSpec((tm, E), lambda i: (i, 0)),
        ),
        compiler_params=_compiler_params(("parallel",)),
        cost_estimate=cost,
    )(x, w1, b1.reshape(1, H), w2, b2.reshape(1, E),
      gamma.reshape(1, E), beta.reshape(1, E))


# --------------------------------------------------------------------------
# Decoder (wrapper-side: only free reshapes, no transposes, no intermediates)
# --------------------------------------------------------------------------
def decoder_layer(tgt, memory, tgt_mask, p, num_heads):
    B, S, E = tgt.shape
    x = self_attn_block(tgt, tgt_mask,
                        p["sa_w_q"], p["sa_b_q"], p["sa_w_kv"], p["sa_b_kv"],
                        p["sa_w_out"], p["sa_b_out"], p["ln1_g"], p["ln1_b"],
                        num_heads)
    x = cross_attn_block(x, memory,
                         p["ca_w_q"], p["ca_b_q"], p["ca_w_kv"], p["ca_b_kv"],
                         p["ca_w_out"], p["ca_b_out"], p["ln2_g"], p["ln2_b"],
                         num_heads)
    x = ffn_add_ln(x.reshape(B * S, E), p["w1"], p["b1"], p["w2"], p["b2"],
                   p["ln3_g"], p["ln3_b"])
    return x.reshape(B, S, E)


def decoder(tgt, encoder_output, tgt_mask, params, num_heads):
    for p in params:
        tgt = decoder_layer(tgt, encoder_output, tgt_mask, p, num_heads)
    return tgt


# --------------------------------------------------------------------------
# Deterministic parameter init (weights stored pre-transposed, (K, N) layout,
# cast once to the MXU dtype; biases / LN params stay f32).
# --------------------------------------------------------------------------
def init_params(key, num_layers, embed_dim, hidden_dim):
    E, H = embed_dim, hidden_dim
    params = []
    for _ in range(num_layers):
        keys = jax.random.split(key, 7)
        key = keys[0]

        def w(k, shape):
            return (0.02 * jax.random.normal(k, shape, jnp.float32)).astype(MXU_DTYPE)

        sa_w_in = w(keys[1], (E, 3 * E))   # PyTorch in_proj_weight.T
        sa_w_out = w(keys[2], (E, E))
        ca_w_in = w(keys[3], (E, 3 * E))
        ca_w_out = w(keys[4], (E, E))
        params.append({
            "sa_w_q": sa_w_in[:, :E], "sa_b_q": jnp.zeros((E,), jnp.float32),
            "sa_w_kv": sa_w_in[:, E:], "sa_b_kv": jnp.zeros((2 * E,), jnp.float32),
            "sa_w_out": sa_w_out, "sa_b_out": jnp.zeros((E,), jnp.float32),
            "ca_w_q": ca_w_in[:, :E], "ca_b_q": jnp.zeros((E,), jnp.float32),
            "ca_w_kv": ca_w_in[:, E:], "ca_b_kv": jnp.zeros((2 * E,), jnp.float32),
            "ca_w_out": ca_w_out, "ca_b_out": jnp.zeros((E,), jnp.float32),
            "w1": w(keys[5], (E, H)), "b1": jnp.zeros((H,), jnp.float32),
            "w2": w(keys[6], (H, E)), "b2": jnp.zeros((E,), jnp.float32),
            "ln1_g": jnp.ones((E,), jnp.float32), "ln1_b": jnp.zeros((E,), jnp.float32),
            "ln2_g": jnp.ones((E,), jnp.float32), "ln2_b": jnp.zeros((E,), jnp.float32),
            "ln3_g": jnp.ones((E,), jnp.float32), "ln3_b": jnp.zeros((E,), jnp.float32),
        })
    return params


if __name__ == "__main__":
    num_layers, embed_dim, num_heads, hidden_dim = 2, 32, 4, 64
    B, S_tgt, S_src = 2, 8, 8

    key = jax.random.PRNGKey(0)
    k_tgt, k_mem, k_par = jax.random.split(key, 3)

    tgt = jax.random.normal(k_tgt, (B, S_tgt, embed_dim), jnp.float32)
    encoder_output = jax.random.normal(k_mem, (B, S_src, embed_dim), jnp.float32)
    # additive causal mask (0 on allowed positions, -1e9 on future positions)
    tgt_mask = jnp.where(
        jnp.triu(jnp.ones((S_tgt, S_tgt), jnp.bool_), k=1), -1e9, 0.0
    ).astype(jnp.float32)

    params = init_params(k_par, num_layers, embed_dim, hidden_dim)

    run = jax.jit(decoder, static_argnums=4)
    out = run(tgt, encoder_output, tgt_mask, params, num_heads)
    jax.block_until_ready(out)
    assert out.shape == (B, S_tgt, embed_dim)
    assert bool(jnp.all(jnp.isfinite(out)))
    print("KERNEL_OK")
</pallas_src>

<mosaic_0001>
module attributes {stable_mosaic.version = 11 : i64} {
  func.func @_ffn_add_ln_kernel(%arg0: i32, %arg1: memref<16x32xf32, #tpu.memory_space<vmem>>, %arg2: memref<32x64xbf16, #tpu.memory_space<vmem>>, %arg3: memref<1x64xf32, #tpu.memory_space<vmem>>, %arg4: memref<64x32xbf16, #tpu.memory_space<vmem>>, %arg5: memref<1x32xf32, #tpu.memory_space<vmem>>, %arg6: memref<1x32xf32, #tpu.memory_space<vmem>>, %arg7: memref<1x32xf32, #tpu.memory_space<vmem>>, %arg8: memref<16x32xf32, #tpu.memory_space<vmem>>) attributes {dimension_semantics = [#tpu.dimension_semantics<parallel>], iteration_bounds = array<i64: 1>, scalar_prefetch = 0 : i64, scratch_operands = 0 : i64, tpu.core_type = #tpu.core_type<tc>, window_params = [{transform_indices = @transform_0, window_bounds = array<i64: 16, 32>}, {pipeline_mode = #tpu.pipeline_mode<synchronous>, transform_indices = @transform_1, window_bounds = array<i64: 32, 64>}, {pipeline_mode = #tpu.pipeline_mode<synchronous>, transform_indices = @transform_2, window_bounds = array<i64: 1, 64>}, {pipeline_mode = #tpu.pipeline_mode<synchronous>, transform_indices = @transform_3, window_bounds = array<i64: 64, 32>}, {pipeline_mode = #tpu.pipeline_mode<synchronous>, transform_indices = @transform_4, window_bounds = array<i64: 1, 32>}, {pipeline_mode = #tpu.pipeline_mode<synchronous>, transform_indices = @transform_5, window_bounds = array<i64: 1, 32>}, {pipeline_mode = #tpu.pipeline_mode<synchronous>, transform_indices = @transform_6, window_bounds = array<i64: 1, 32>}, {transform_indices = @transform_7, window_bounds = array<i64: 16, 32>}]} {
    %c0 = arith.constant 0 : index
    %c0_0 = arith.constant 0 : index
    %0 = vector.load %arg1[%c0, %c0_0] : memref<16x32xf32, #tpu.memory_space<vmem>>, vector<16x32xf32>
    %1 = arith.truncf %0 : vector<16x32xf32> to vector<16x32xbf16>
    %c0_1 = arith.constant 0 : index
    %c0_2 = arith.constant 0 : index
    %2 = vector.load %arg2[%c0_1, %c0_2] : memref<32x64xbf16, #tpu.memory_space<vmem>>, vector<32x64xbf16>
    %cst = arith.constant dense<0.000000e+00> : vector<16x64xf32>
    %3 = tpu.matmul %1, %2, %cst {dimension_numbers = #tpu.dot_dimension_numbers<[1], [0], [0], [1], [0, 0, 1, 1], [], []>} : vector<16x32xbf16>, vector<32x64xbf16>, vector<16x64xf32> -> vector<16x64xf32>
    %c0_3 = arith.constant 0 : index
    %c0_4 = arith.constant 0 : index
    %4 = vector.load %arg3[%c0_3, %c0_4] : memref<1x64xf32, #tpu.memory_space<vmem>>, vector<1x64xf32>
    %5 = vector.broadcast %4 : vector<1x64xf32> to vector<16x64xf32>
    %6 = arith.addf %3, %5 : vector<16x64xf32>
    %cst_5 = arith.constant 0.000000e+00 : f32
    %7 = vector.broadcast %cst_5 : f32 to vector<16x64xf32>
    %8 = arith.maximumf %6, %7 : vector<16x64xf32>
    %9 = arith.truncf %8 : vector<16x64xf32> to vector<16x64xbf16>
    %c0_6 = arith.constant 0 : index
    %c0_7 = arith.constant 0 : index
    %10 = vector.load %arg4[%c0_6, %c0_7] : memref<64x32xbf16, #tpu.memory_space<vmem>>, vector<64x32xbf16>
    %cst_8 = arith.constant dense<0.000000e+00> : vector<16x32xf32>
    %11 = tpu.matmul %9, %10, %cst_8 {dimension_numbers = #tpu.dot_dimension_numbers<[1], [0], [0], [1], [0, 0, 1, 1], [], []>} : vector<16x64xbf16>, vector<64x32xbf16>, vector<16x32xf32> -> vector<16x32xf32>
    %c0_9 = arith.constant 0 : index
    %c0_10 = arith.constant 0 : index
    %12 = vector.load %arg5[%c0_9, %c0_10] : memref<1x32xf32, #tpu.memory_space<vmem>>, vector<1x32xf32>
    %13 = vector.broadcast %12 : vector<1x32xf32> to vector<16x32xf32>
    %14 = arith.addf %11, %13 : vector<16x32xf32>
    %15 = arith.addf %0, %14 : vector<16x32xf32>
    %c0_11 = arith.constant 0 : index
    %c0_12 = arith.constant 0 : index
    %16 = vector.load %arg6[%c0_11, %c0_12] : memref<1x32xf32, #tpu.memory_space<vmem>>, vector<1x32xf32>
    %c0_13 = arith.constant 0 : index
    %c0_14 = arith.constant 0 : index
    %17 = vector.load %arg7[%c0_13, %c0_14] : memref<1x32xf32, #tpu.memory_space<vmem>>, vector<1x32xf32>
    %cst_15 = arith.constant dense<0.000000e+00> : vector<16xf32>
    %18 = vector.multi_reduction <add>, %15, %cst_15 [1] : vector<16x32xf32> to vector<16xf32>
    %19 = vector.shape_cast %18 : vector<16xf32> to vector<16x1xf32>
    %cst_16 = arith.constant 3.200000e+01 : f32
    %20 = vector.broadcast %cst_16 : f32 to vector<16x1xf32>
    %21 = arith.divf %19, %20 : vector<16x1xf32>
    %22 = vector.broadcast %21 : vector<16x1xf32> to vector<16x32xf32>
    %23 = arith.subf %15, %22 : vector<16x32xf32>
    %24 = arith.mulf %23, %23 : vector<16x32xf32>
    %cst_17 = arith.constant dense<0.000000e+00> : vector<16xf32>
    %25 = vector.multi_reduction <add>, %24, %cst_17 [1] : vector<16x32xf32> to vector<16xf32>
    %26 = vector.shape_cast %25 : vector<16xf32> to vector<16x1xf32>
    %cst_18 = arith.constant 3.200000e+01 : f32
    %27 = vector.broadcast %cst_18 : f32 to vector<16x1xf32>
    %28 = arith.divf %26, %27 : vector<16x1xf32>
    %29 = vector.broadcast %21 : vector<16x1xf32> to vector<16x32xf32>
    %30 = arith.subf %15, %29 : vector<16x32xf32>
    %cst_19 = arith.constant 9.99999974E-6 : f32
    %31 = vector.broadcast %cst_19 : f32 to vector<16x1xf32>
    %32 = arith.addf %28, %31 : vector<16x1xf32>
    %33 = math.rsqrt %32 : vector<16x1xf32>
    %34 = vector.broadcast %33 : vector<16x1xf32> to vector<16x32xf32>
    %35 = arith.mulf %30, %34 : vector<16x32xf32>
    %36 = vector.broadcast %16 : vector<1x32xf32> to vector<16x32xf32>
    %37 = arith.mulf %35, %36 : vector<16x32xf32>
    %38 = vector.broadcast %17 : vector<1x32xf32> to vector<16x32xf32>
    %39 = arith.addf %37, %38 : vector<16x32xf32>
    %c0_20 = arith.constant 0 : index
    %c0_21 = arith.constant 0 : index
    %40 = vector.load %arg8[%c0_20, %c0_21] : memref<16x32xf32, #tpu.memory_space<vmem>>, vector<16x32xf32>
    tpu.vector_store %arg8[%c0_20, %c0_21], %39 {strides = array<i32>} : memref<16x32xf32, #tpu.memory_space<vmem>>, vector<16x32xf32>,
    return
  }
  func.func @transform_0(%arg0: i32) -> (i32, i32) {
    %c0_i32 = arith.constant 0 : i32
    %c0_i32_0 = arith.constant 0 : i32
    return %arg0, %c0_i32 : i32, i32
  }
  func.func @transform_1(%arg0: i32) -> (i32, i32) {
    %c0_i32 = arith.constant 0 : i32
    %c0_i32_0 = arith.constant 0 : i32
    %c0_i32_1 = arith.constant 0 : i32
    return %c0_i32, %c0_i32_0 : i32, i32
  }
  func.func @transform_2(%arg0: i32) -> (i32, i32) {
    %c0_i32 = arith.constant 0 : i32
    %c0_i32_0 = arith.constant 0 : i32
    %c0_i32_1 = arith.constant 0 : i32
    return %c0_i32, %c0_i32_0 : i32, i32
  }
  func.func @transform_3(%arg0: i32) -> (i32, i32) {
    %c0_i32 = arith.constant 0 : i32
    %c0_i32_0 = arith.constant 0 : i32
    %c0_i32_1 = arith.constant 0 : i32
    return %c0_i32, %c0_i32_0 : i32, i32
  }
  func.func @transform_4(%arg0: i32) -> (i32, i32) {
    %c0_i32 = arith.constant 0 : i32
    %c0_i32_0 = arith.constant 0 : i32
    %c0_i32_1 = arith.constant 0 : i32
    return %c0_i32, %c0_i32_0 : i32, i32
  }
  func.func @transform_5(%arg0: i32) -> (i32, i32) {
    %c0_i32 = arith.constant 0 : i32
    %c0_i32_0 = arith.constant 0 : i32
    %c0_i32_1 = arith.constant 0 : i32
    return %c0_i32, %c0_i32_0 : i32, i32
  }
  func.func @transform_6(%arg0: i32) -> (i32, i32) {
    %c0_i32 = arith.constant 0 : i32
    %c0_i32_0 = arith.constant 0 : i32
    %c0_i32_1 = arith.constant 0 : i32
    return %c0_i32, %c0_i32_0 : i32, i32
  }
  func.func @transform_7(%arg0: i32) -> (i32, i32) {
    %c0_i32 = arith.constant 0 : i32
    %c0_i32_0 = arith.constant 0 : i32
    return %arg0, %c0_i32 : i32, i32
  }
}

module attributes {stable_mosaic.version = 11 : i64} {
  func.func @_cross_attn_block_kernel(%arg0: i32, %arg1: i32, %arg2: memref<1x8x32xf32, #tpu.memory_space<vmem>>, %arg3: memref<1x8x32xf32, #tpu.memory_space<vmem>>, %arg4: memref<32x32xbf16, #tpu.memory_space<vmem>>, %arg5: memref<1x32xf32, #tpu.memory_space<vmem>>, %arg6: memref<32x64xbf16, #tpu.memory_space<vmem>>, %arg7: memref<1x64xf32, #tpu.memory_space<vmem>>, %arg8: memref<32x32xbf16, #tpu.memory_space<vmem>>, %arg9: memref<1x32xf32, #tpu.memory_space<vmem>>, %arg10: memref<1x32xf32, #tpu.memory_space<vmem>>, %arg11: memref<1x32xf32, #tpu.memory_space<vmem>>, %arg12: memref<1x8x32xf32, #tpu.memory_space<vmem>>) attributes {dimension_semantics = [#tpu.dimension_semantics<parallel>, #tpu.dimension_semantics<parallel>], iteration_bounds = array<i64: 2, 1>, scalar_prefetch = 0 : i64, scratch_operands = 0 : i64, tpu.core_type = #tpu.core_type<tc>, window_params = [{transform_indices = @transform_0, window_bounds = array<i64: 1, 8, 32>}, {transform_indices = @transform_1, window_bounds = array<i64: 1, 8, 32>}, {pipeline_mode = #tpu.pipeline_mode<synchronous>, transform_indices = @transform_2, window_bounds = array<i64: 32, 32>}, {pipeline_mode = #tpu.pipeline_mode<synchronous>, transform_indices = @transform_3, window_bounds = array<i64: 1, 32>}, {pipeline_mode = #tpu.pipeline_mode<synchronous>, transform_indices = @transform_4, window_bounds = array<i64: 32, 64>}, {pipeline_mode = #tpu.pipeline_mode<synchronous>, transform_indices = @transform_5, window_bounds = array<i64: 1, 64>}, {pipeline_mode = #tpu.pipeline_mode<synchronous>, transform_indices = @transform_6, window_bounds = array<i64: 32, 32>}, {pipeline_mode = #tpu.pipeline_mode<synchronous>, transform_indices = @transform_7, window_bounds = array<i64: 1, 32>}, {pipeline_mode = #tpu.pipeline_mode<synchronous>, transform_indices = @transform_8, window_bounds = array<i64: 1, 32>}, {pipeline_mode = #tpu.pipeline_mode<synchronous>, transform_indices = @transform_9, window_bounds = array<i64: 1, 32>}, {transform_indices = @transform_10, window_bounds = array<i64: 1, 8, 32>}]} {
    %c0 = arith.constant 0 : index
    %c0_0 = arith.constant 0 : index
    %c0_1 = arith.constant 0 : index
    %0 = vector.load %arg2[%c0, %c0_0, %c0_1] : memref<1x8x32xf32, #tpu.memory_space<vmem>>, vector<1x8x32xf32>
    %1 = vector.shape_cast %0 : vector<1x8x32xf32> to vector<8x32xf32>
    %c0_2 = arith.constant 0 : index
    %c0_3 = arith.constant 0 : index
    %c0_4 = arith.constant 0 : index
    %2 = vector.load %arg3[%c0_2, %c0_3, %c0_4] : memref<1x8x32xf32, #tpu.memory_space<vmem>>, vector<1x8x32xf32>
    %3 = vector.shape_cast %2 : vector<1x8x32xf32> to vector<8x32xf32>
    %4 = arith.truncf %1 : vector<8x32xf32> to vector<8x32xbf16>
    %c0_5 = arith.constant 0 : index
    %c0_6 = arith.constant 0 : index
    %5 = vector.load %arg4[%c0_5, %c0_6] : memref<32x32xbf16, #tpu.memory_space<vmem>>, vector<32x32xbf16>
    %cst = arith.constant dense<0.000000e+00> : vector<8x32xf32>
    %6 = tpu.matmul %4, %5, %cst {dimension_numbers = #tpu.dot_dimension_numbers<[1], [0], [0], [1], [0, 0, 1, 1], [], []>} : vector<8x32xbf16>, vector<32x32xbf16>, vector<8x32xf32> -> vector<8x32xf32>
    %c0_7 = arith.constant 0 : index
    %c0_8 = arith.constant 0 : index
    %7 = vector.load %arg5[%c0_7, %c0_8] : memref<1x32xf32, #tpu.memory_space<vmem>>, vector<1x32xf32>
    %8 = vector.broadcast %7 : vector<1x32xf32> to vector<8x32xf32>
    %9 = arith.addf %6, %8 : vector<8x32xf32>
    %10 = arith.truncf %3 : vector<8x32xf32> to vector<8x32xbf16>
    %c0_9 = arith.constant 0 : index
    %c0_10 = arith.constant 0 : index
    %11 = vector.load %arg6[%c0_9, %c0_10] : memref<32x64xbf16, #tpu.memory_space<vmem>>, vector<32x64xbf16>
    %cst_11 = arith.constant dense<0.000000e+00> : vector<8x64xf32>
    %12 = tpu.matmul %10, %11, %cst_11 {dimension_numbers = #tpu.dot_dimension_numbers<[1], [0], [0], [1], [0, 0, 1, 1], [], []>} : vector<8x32xbf16>, vector<32x64xbf16>, vector<8x64xf32> -> vector<8x64xf32>
    %c0_12 = arith.constant 0 : index
    %c0_13 = arith.constant 0 : index
    %13 = vector.load %arg7[%c0_12, %c0_13] : memref<1x64xf32, #tpu.memory_space<vmem>>, vector<1x64xf32>
    %14 = vector.broadcast %13 : vector<1x64xf32> to vector<8x64xf32>
    %15 = arith.addf %12, %14 : vector<8x64xf32>
    %16 = vector.extract_strided_slice %15 {offsets = [0, 0], sizes = [8, 32], strides = [1, 1]} : vector<8x64xf32> to vector<8x32xf32>
    %17 = vector.extract_strided_slice %15 {offsets = [0, 32], sizes = [8, 32], strides = [1, 1]} : vector<8x64xf32> to vector<8x32xf32>
    %cst_14 = arith.constant 0.353553385 : f32
    %18 = vector.broadcast %cst_14 : f32 to vector<8x32xf32>
    %19 = arith.mulf %9, %18 : vector<8x32xf32>
    %20 = arith.truncf %19 : vector<8x32xf32> to vector<8x32xbf16>
    %21 = vector.shape_cast %20 : vector<8x32xbf16> to vector<8x4x8xbf16>
    %22 = tpu.transpose %21, [1, 0, 2] : vector<8x4x8xbf16> -> vector<4x8x8xbf16>
    %23 = arith.truncf %16 : vector<8x32xf32> to vector<8x32xbf16>
    %24 = vector.shape_cast %23 : vector<8x32xbf16> to vector<8x4x8xbf16>
    %25 = tpu.transpose %24, [1, 0, 2] : vector<8x4x8xbf16> -> vector<4x8x8xbf16>
    %26 = arith.truncf %17 : vector<8x32xf32> to vector<8x32xbf16>
    %27 = vector.shape_cast %26 : vector<8x32xbf16> to vector<8x4x8xbf16>
    %28 = tpu.transpose %27, [1, 0, 2] : vector<8x4x8xbf16> -> vector<4x8x8xbf16>
    %cst_15 = arith.constant dense<0.000000e+00> : vector<4x8x8xf32>
    %29 = tpu.matmul %22, %25, %cst_15 {dimension_numbers = #tpu.dot_dimension_numbers<[2], [2], [1], [1], [0, 0, 0, 1, 1, 1], [0], [0]>} : vector<4x8x8xbf16>, vector<4x8x8xbf16>, vector<4x8x8xf32> -> vector<4x8x8xf32>
    %cst_16 = arith.constant dense<0xFF800000> : vector<4x8xf32>
    %30 = vector.multi_reduction <maximumf>, %29, %cst_16 [2] : vector<4x8x8xf32> to vector<4x8xf32>
    %31 = vector.shape_cast %30 : vector<4x8xf32> to vector<4x8x1xf32>
    %32 = vector.broadcast %31 : vector<4x8x1xf32> to vector<4x8x8xf32>
    %33 = arith.subf %29, %32 : vector<4x8x8xf32>
    %34 = math.exp %33 : vector<4x8x8xf32>
    %cst_17 = arith.constant dense<0.000000e+00> : vector<4x8xf32>
    %35 = vector.multi_reduction <add>, %34, %cst_17 [2] : vector<4x8x8xf32> to vector<4x8xf32>
    %36 = vector.shape_cast %35 : vector<4x8xf32> to vector<4x8x1xf32>
    %37 = tpu.reciprocal %36 {approx = true} : vector<4x8x1xf32> -> vector<4x8x1xf32>
    %38 = vector.broadcast %37 : vector<4x8x1xf32> to vector<4x8x8xf32>
    %39 = arith.mulf %34, %38 : vector<4x8x8xf32>
    %40 = arith.truncf %39 : vector<4x8x8xf32> to vector<4x8x8xbf16>
    %cst_18 = arith.constant dense<0.000000e+00> : vector<4x8x8xf32>
    %41 = tpu.matmul %40, %28, %cst_18 {dimension_numbers = #tpu.dot_dimension_numbers<[2], [1], [1], [2], [0, 0, 0, 1, 1, 2], [0], [0]>} : vector<4x8x8xbf16>, vector<4x8x8xbf16>, vector<4x8x8xf32> -> vector<4x8x8xf32>
    %42 = tpu.transpose %41, [1, 0, 2] : vector<4x8x8xf32> -> vector<8x4x8xf32>
    %43 = vector.shape_cast %42 : vector<8x4x8xf32> to vector<8x32xf32>
    %44 = arith.truncf %43 : vector<8x32xf32> to vector<8x32xbf16>
    %c0_19 = arith.constant 0 : index
    %c0_20 = arith.constant 0 : index
    %45 = vector.load %arg8[%c0_19, %c0_20] : memref<32x32xbf16, #tpu.memory_space<vmem>>, vector<32x32xbf16>
    %cst_21 = arith.constant dense<0.000000e+00> : vector<8x32xf32>
    %46 = tpu.matmul %44, %45, %cst_21 {dimension_numbers = #tpu.dot_dimension_numbers<[1], [0], [0], [1], [0, 0, 1, 1], [], []>} : vector<8x32xbf16>, vector<32x32xbf16>, vector<8x32xf32> -> vector<8x32xf32>
    %c0_22 = arith.constant 0 : index
    %c0_23 = arith.constant 0 : index
    %47 = vector.load %arg9[%c0_22, %c0_23] : memref<1x32xf32, #tpu.memory_space<vmem>>, vector<1x32xf32>
    %48 = vector.broadcast %47 : vector<1x32xf32> to vector<8x32xf32>
    %49 = arith.addf %46, %48 : vector<8x32xf32>
    %50 = arith.addf %1, %49 : vector<8x32xf32>
    %c0_24 = arith.constant 0 : index
    %c0_25 = arith.constant 0 : index
    %51 = vector.load %arg10[%c0_24, %c0_25] : memref<1x32xf32, #tpu.memory_space<vmem>>, vector<1x32xf32>
    %c0_26 = arith.constant 0 : index
    %c0_27 = arith.constant 0 : index
    %52 = vector.load %arg11[%c0_26, %c0_27] : memref<1x32xf32, #tpu.memory_space<vmem>>, vector<1x32xf32>
    %cst_28 = arith.constant dense<0.000000e+00> : vector<8xf32>
    %53 = vector.multi_reduction <add>, %50, %cst_28 [1] : vector<8x32xf32> to vector<8xf32>
    %54 = vector.shape_cast %53 : vector<8xf32> to vector<8x1xf32>
    %cst_29 = arith.constant 3.200000e+01 : f32
    %55 = vector.broadcast %cst_29 : f32 to vector<8x1xf32>
    %56 = arith.divf %54, %55 : vector<8x1xf32>
    %57 = vector.broadcast %56 : vector<8x1xf32> to vector<8x32xf32>
    %58 = arith.subf %50, %57 : vector<8x32xf32>
    %59 = arith.mulf %58, %58 : vector<8x32xf32>
    %cst_30 = arith.constant dense<0.000000e+00> : vector<8xf32>
    %60 = vector.multi_reduction <add>, %59, %cst_30 [1] : vector<8x32xf32> to vector<8xf32>
    %61 = vector.shape_cast %60 : vector<8xf32> to vector<8x1xf32>
    %cst_31 = arith.constant 3.200000e+01 : f32
    %62 = vector.broadcast %cst_31 : f32 to vector<8x1xf32>
    %63 = arith.divf %61, %62 : vector<8x1xf32>
    %64 = vector.broadcast %56 : vector<8x1xf32> to vector<8x32xf32>
    %65 = arith.subf %50, %64 : vector<8x32xf32>
    %cst_32 = arith.constant 9.99999974E-6 : f32
    %66 = vector.broadcast %cst_32 : f32 to vector<8x1xf32>
    %67 = arith.addf %63, %66 : vector<8x1xf32>
    %68 = math.rsqrt %67 : vector<8x1xf32>
    %69 = vector.broadcast %68 : vector<8x1xf32> to vector<8x32xf32>
    %70 = arith.mulf %65, %69 : vector<8x32xf32>
    %71 = vector.broadcast %51 : vector<1x32xf32> to vector<8x32xf32>
    %72 = arith.mulf %70, %71 : vector<8x32xf32>
    %73 = vector.broadcast %52 : vector<1x32xf32> to vector<8x32xf32>
    %74 = arith.addf %72, %73 : vector<8x32xf32>
    %c0_33 = arith.constant 0 : index
    %c0_34 = arith.constant 0 : index
    %c0_35 = arith.constant 0 : index
    %75 = vector.load %arg12[%c0_33, %c0_34, %c0_35] : memref<1x8x32xf32, #tpu.memory_space<vmem>>, vector<1x8x32xf32>
    %76 = vector.shape_cast %75 : vector<1x8x32xf32> to vector<8x32xf32>
    %77 = vector.shape_cast %74 : vector<8x32xf32> to vector<1x8x32xf32>
    tpu.vector_store %arg12[%c0_33, %c0_34, %c0_35], %77 {strides = array<i32>} : memref<1x8x32xf32, #tpu.memory_space<vmem>>, vector<1x8x32xf32>,
    return
  }
  func.func @transform_0(%arg0: i32, %arg1: i32) -> (i32, i32, i32) {
    %c0_i32 = arith.constant 0 : i32
    %c0_i32_0 = arith.constant 0 : i32
    return %arg0, %arg1, %c0_i32 : i32, i32, i32
  }
  func.func @transform_1(%arg0: i32, %arg1: i32) -> (i32, i32, i32) {
    %c0_i32 = arith.constant 0 : i32
    %c0_i32_0 = arith.constant 0 : i32
    %c0_i32_1 = arith.constant 0 : i32
    return %arg0, %c0_i32, %c0_i32_0 : i32, i32, i32
  }
  func.func @transform_2(%arg0: i32, %arg1: i32) -> (i32, i32) {
    %c0_i32 = arith.constant 0 : i32
    %c0_i32_0 = arith.constant 0 : i32
    %c0_i32_1 = arith.constant 0 : i32
    return %c0_i32, %c0_i32_0 : i32, i32
  }
  func.func @transform_3(%arg0: i32, %arg1: i32) -> (i32, i32) {
    %c0_i32 = arith.constant 0 : i32
    %c0_i32_0 = arith.constant 0 : i32
    %c0_i32_1 = arith.constant 0 : i32
    return %c0_i32, %c0_i32_0 : i32, i32
  }
  func.func @transform_4(%arg0: i32, %arg1: i32) -> (i32, i32) {
    %c0_i32 = arith.constant 0 : i32
    %c0_i32_0 = arith.constant 0 : i32
    %c0_i32_1 = arith.constant 0 : i32
    return %c0_i32, %c0_i32_0 : i32, i32
  }
  func.func @transform_5(%arg0: i32, %arg1: i32) -> (i32, i32) {
    %c0_i32 = arith.constant 0 : i32
    %c0_i32_0 = arith.constant 0 : i32
    %c0_i32_1 = arith.constant 0 : i32
    return %c0_i32, %c0_i32_0 : i32, i32
  }
  func.func @transform_6(%arg0: i32, %arg1: i32) -> (i32, i32) {
    %c0_i32 = arith.constant 0 : i32
    %c0_i32_0 = arith.constant 0 : i32
    %c0_i32_1 = arith.constant 0 : i32
    return %c0_i32, %c0_i32_0 : i32, i32
  }
  func.func @transform_7(%arg0: i32, %arg1: i32) -> (i32, i32) {
    %c0_i32 = arith.constant 0 : i32
    %c0_i32_0 = arith.constant 0 : i32
    %c0_i32_1 = arith.constant 0 : i32
    return %c0_i32, %c0_i32_0 : i32, i32
  }
  func.func @transform_8(%arg0: i32, %arg1: i32) -> (i32, i32) {
    %c0_i32 = arith.constant 0 : i32
    %c0_i32_0 = arith.constant 0 : i32
    %c0_i32_1 = arith.constant 0 : i32
    return %c0_i32, %c0_i32_0 : i32, i32
  }
  func.func @transform_9(%arg0: i32, %arg1: i32) -> (i32, i32) {
    %c0_i32 = arith.constant 0 : i32
    %c0_i32_0 = arith.constant 0 : i32
    %c0_i32_1 = arith.constant 0 : i32
    return %c0_i32, %c0_i32_0 : i32, i32
  }
  func.func @transform_10(%arg0: i32, %arg1: i32) -> (i32, i32, i32) {
    %c0_i32 = arith.constant 0 : i32
    %c0_i32_0 = arith.constant 0 : i32
    return %arg0, %arg1, %c0_i32 : i32, i32, i32
  }
}

module attributes {stable_mosaic.version = 11 : i64} {
  func.func @_self_attn_block_kernel(%arg0: i32, %arg1: i32, %arg2: memref<1x8x32xf32, #tpu.memory_space<vmem>>, %arg3: memref<1x8x32xf32, #tpu.memory_space<vmem>>, %arg4: memref<8x8xf32, #tpu.memory_space<vmem>>, %arg5: memref<32x32xbf16, #tpu.memory_space<vmem>>, %arg6: memref<1x32xf32, #tpu.memory_space<vmem>>, %arg7: memref<32x64xbf16, #tpu.memory_space<vmem>>, %arg8: memref<1x64xf32, #tpu.memory_space<vmem>>, %arg9: memref<32x32xbf16, #tpu.memory_space<vmem>>, %arg10: memref<1x32xf32, #tpu.memory_space<vmem>>, %arg11: memref<1x32xf32, #tpu.memory_space<vmem>>, %arg12: memref<1x32xf32, #tpu.memory_space<vmem>>, %arg13: memref<1x8x32xf32, #tpu.memory_space<vmem>>) attributes {dimension_semantics = [#tpu.dimension_semantics<parallel>, #tpu.dimension_semantics<parallel>], iteration_bounds = array<i64: 2, 1>, scalar_prefetch = 0 : i64, scratch_operands = 0 : i64, tpu.core_type = #tpu.core_type<tc>, window_params = [{transform_indices = @transform_0, window_bounds = array<i64: 1, 8, 32>}, {transform_indices = @transform_1, window_bounds = array<i64: 1, 8, 32>}, {transform_indices = @transform_2, window_bounds = array<i64: 8, 8>}, {pipeline_mode = #tpu.pipeline_mode<synchronous>, transform_indices = @transform_3, window_bounds = array<i64: 32, 32>}, {pipeline_mode = #tpu.pipeline_mode<synchronous>, transform_indices = @transform_4, window_bounds = array<i64: 1, 32>}, {pipeline_mode = #tpu.pipeline_mode<synchronous>, transform_indices = @transform_5, window_bounds = array<i64: 32, 64>}, {pipeline_mode = #tpu.pipeline_mode<synchronous>, transform_indices = @transform_6, window_bounds = array<i64: 1, 64>}, {pipeline_mode = #tpu.pipeline_mode<synchronous>, transform_indices = @transform_7, window_bounds = array<i64: 32, 32>}, {pipeline_mode = #tpu.pipeline_mode<synchronous>, transform_indices = @transform_8, window_bounds = array<i64: 1, 32>}, {pipeline_mode = #tpu.pipeline_mode<synchronous>, transform_indices = @transform_9, window_bounds = array<i64: 1, 32>}, {pipeline_mode = #tpu.pipeline_mode<synchronous>, transform_indices = @transform_10, window_bounds = array<i64: 1, 32>}, {transform_indices = @transform_11, window_bounds = array<i64: 1, 8, 32>}]} {
    %c0 = arith.constant 0 : index
    %c0_0 = arith.constant 0 : index
    %c0_1 = arith.constant 0 : index
    %0 = vector.load %arg2[%c0, %c0_0, %c0_1] : memref<1x8x32xf32, #tpu.memory_space<vmem>>, vector<1x8x32xf32>
    %1 = vector.shape_cast %0 : vector<1x8x32xf32> to vector<8x32xf32>
    %c0_2 = arith.constant 0 : index
    %c0_3 = arith.constant 0 : index
    %c0_4 = arith.constant 0 : index
    %2 = vector.load %arg3[%c0_2, %c0_3, %c0_4] : memref<1x8x32xf32, #tpu.memory_space<vmem>>, vector<1x8x32xf32>
    %3 = vector.shape_cast %2 : vector<1x8x32xf32> to vector<8x32xf32>
    %4 = arith.truncf %1 : vector<8x32xf32> to vector<8x32xbf16>
    %c0_5 = arith.constant 0 : index
    %c0_6 = arith.constant 0 : index
    %5 = vector.load %arg5[%c0_5, %c0_6] : memref<32x32xbf16, #tpu.memory_space<vmem>>, vector<32x32xbf16>
    %cst = arith.constant dense<0.000000e+00> : vector<8x32xf32>
    %6 = tpu.matmul %4, %5, %cst {dimension_numbers = #tpu.dot_dimension_numbers<[1], [0], [0], [1], [0, 0, 1, 1], [], []>} : vector<8x32xbf16>, vector<32x32xbf16>, vector<8x32xf32> -> vector<8x32xf32>
    %c0_7 = arith.constant 0 : index
    %c0_8 = arith.constant 0 : index
    %7 = vector.load %arg6[%c0_7, %c0_8] : memref<1x32xf32, #tpu.memory_space<vmem>>, vector<1x32xf32>
    %8 = vector.broadcast %7 : vector<1x32xf32> to vector<8x32xf32>
    %9 = arith.addf %6, %8 : vector<8x32xf32>
    %10 = arith.truncf %3 : vector<8x32xf32> to vector<8x32xbf16>
    %c0_9 = arith.constant 0 : index
    %c0_10 = arith.constant 0 : index
    %11 = vector.load %arg7[%c0_9, %c0_10] : memref<32x64xbf16, #tpu.memory_space<vmem>>, vector<32x64xbf16>
    %cst_11 = arith.constant dense<0.000000e+00> : vector<8x64xf32>
    %12 = tpu.matmul %10, %11, %cst_11 {dimension_numbers = #tpu.dot_dimension_numbers<[1], [0], [0], [1], [0, 0, 1, 1], [], []>} : vector<8x32xbf16>, vector<32x64xbf16>, vector<8x64xf32> -> vector<8x64xf32>
    %c0_12 = arith.constant 0 : index
    %c0_13 = arith.constant 0 : index
    %13 = vector.load %arg8[%c0_12, %c0_13] : memref<1x64xf32, #tpu.memory_space<vmem>>, vector<1x64xf32>
    %14 = vector.broadcast %13 : vector<1x64xf32> to vector<8x64xf32>
    %15 = arith.addf %12, %14 : vector<8x64xf32>
    %16 = vector.extract_strided_slice %15 {offsets = [0, 0], sizes = [8, 32], strides = [1, 1]} : vector<8x64xf32> to vector<8x32xf32>
    %17 = vector.extract_strided_slice %15 {offsets = [0, 32], sizes = [8, 32], strides = [1, 1]} : vector<8x64xf32> to vector<8x32xf32>
    %c0_14 = arith.constant 0 : index
    %c0_15 = arith.constant 0 : index
    %18 = vector.load %arg4[%c0_14, %c0_15] : memref<8x8xf32, #tpu.memory_space<vmem>>, vector<8x8xf32>
    %cst_16 = arith.constant 0.353553385 : f32
    %19 = vector.broadcast %cst_16 : f32 to vector<8x32xf32>
    %20 = arith.mulf %9, %19 : vector<8x32xf32>
    %21 = arith.truncf %20 : vector<8x32xf32> to vector<8x32xbf16>
    %22 = vector.shape_cast %21 : vector<8x32xbf16> to vector<8x4x8xbf16>
    %23 = tpu.transpose %22, [1, 0, 2] : vector<8x4x8xbf16> -> vector<4x8x8xbf16>
    %24 = arith.truncf %16 : vector<8x32xf32> to vector<8x32xbf16>
    %25 = vector.shape_cast %24 : vector<8x32xbf16> to vector<8x4x8xbf16>
    %26 = tpu.transpose %25, [1, 0, 2] : vector<8x4x8xbf16> -> vector<4x8x8xbf16>
    %27 = arith.truncf %17 : vector<8x32xf32> to vector<8x32xbf16>
    %28 = vector.shape_cast %27 : vector<8x32xbf16> to vector<8x4x8xbf16>
    %29 = tpu.transpose %28, [1, 0, 2] : vector<8x4x8xbf16> -> vector<4x8x8xbf16>
    %cst_17 = arith.constant dense<0.000000e+00> : vector<4x8x8xf32>
    %30 = tpu.matmul %23, %26, %cst_17 {dimension_numbers = #tpu.dot_dimension_numbers<[2], [2], [1], [1], [0, 0, 0, 1, 1, 1], [0], [0]>} : vector<4x8x8xbf16>, vector<4x8x8xbf16>, vector<4x8x8xf32> -> vector<4x8x8xf32>
    %31 = vector.shape_cast %18 : vector<8x8xf32> to vector<1x8x8xf32>
    %32 = vector.broadcast %31 : vector<1x8x8xf32> to vector<4x8x8xf32>
    %33 = arith.addf %30, %32 : vector<4x8x8xf32>
    %cst_18 = arith.constant dense<0xFF800000> : vector<4x8xf32>
    %34 = vector.multi_reduction <maximumf>, %33, %cst_18 [2] : vector<4x8x8xf32> to vector<4x8xf32>
    %35 = vector.shape_cast %34 : vector<4x8xf32> to vector<4x8x1xf32>
    %36 = vector.broadcast %35 : vector<4x8x1xf32> to vector<4x8x8xf32>
    %37 = arith.subf %33, %36 : vector<4x8x8xf32>
    %38 = math.exp %37 : vector<4x8x8xf32>
    %cst_19 = arith.constant dense<0.000000e+00> : vector<4x8xf32>
    %39 = vector.multi_reduction <add>, %38, %cst_19 [2] : vector<4x8x8xf32> to vector<4x8xf32>
    %40 = vector.shape_cast %39 : vector<4x8xf32> to vector<4x8x1xf32>
    %41 = tpu.reciprocal %40 {approx = true} : vector<4x8x1xf32> -> vector<4x8x1xf32>
    %42 = vector.broadcast %41 : vector<4x8x1xf32> to vector<4x8x8xf32>
    %43 = arith.mulf %38, %42 : vector<4x8x8xf32>
    %44 = arith.truncf %43 : vector<4x8x8xf32> to vector<4x8x8xbf16>
    %cst_20 = arith.constant dense<0.000000e+00> : vector<4x8x8xf32>
    %45 = tpu.matmul %44, %29, %cst_20 {dimension_numbers = #tpu.dot_dimension_numbers<[2], [1], [1], [2], [0, 0, 0, 1, 1, 2], [0], [0]>} : vector<4x8x8xbf16>, vector<4x8x8xbf16>, vector<4x8x8xf32> -> vector<4x8x8xf32>
    %46 = tpu.transpose %45, [1, 0, 2] : vector<4x8x8xf32> -> vector<8x4x8xf32>
    %47 = vector.shape_cast %46 : vector<8x4x8xf32> to vector<8x32xf32>
    %48 = arith.truncf %47 : vector<8x32xf32> to vector<8x32xbf16>
    %c0_21 = arith.constant 0 : index
    %c0_22 = arith.constant 0 : index
    %49 = vector.load %arg9[%c0_21, %c0_22] : memref<32x32xbf16, #tpu.memory_space<vmem>>, vector<32x32xbf16>
    %cst_23 = arith.constant dense<0.000000e+00> : vector<8x32xf32>
    %50 = tpu.matmul %48, %49, %cst_23 {dimension_numbers = #tpu.dot_dimension_numbers<[1], [0], [0], [1], [0, 0, 1, 1], [], []>} : vector<8x32xbf16>, vector<32x32xbf16>, vector<8x32xf32> -> vector<8x32xf32>
    %c0_24 = arith.constant 0 : index
    %c0_25 = arith.constant 0 : index
    %51 = vector.load %arg10[%c0_24, %c0_25] : memref<1x32xf32, #tpu.memory_space<vmem>>, vector<1x32xf32>
    %52 = vector.broadcast %51 : vector<1x32xf32> to vector<8x32xf32>
    %53 = arith.addf %50, %52 : vector<8x32xf32>
    %54 = arith.addf %1, %53 : vector<8x32xf32>
    %c0_26 = arith.constant 0 : index
    %c0_27 = arith.constant 0 : index
    %55 = vector.load %arg11[%c0_26, %c0_27] : memref<1x32xf32, #tpu.memory_space<vmem>>, vector<1x32xf32>
    %c0_28 = arith.constant 0 : index
    %c0_29 = arith.constant 0 : index
    %56 = vector.load %arg12[%c0_28, %c0_29] : memref<1x32xf32, #tpu.memory_space<vmem>>, vector<1x32xf32>
    %cst_30 = arith.constant dense<0.000000e+00> : vector<8xf32>
    %57 = vector.multi_reduction <add>, %54, %cst_30 [1] : vector<8x32xf32> to vector<8xf32>
    %58 = vector.shape_cast %57 : vector<8xf32> to vector<8x1xf32>
    %cst_31 = arith.constant 3.200000e+01 : f32
    %59 = vector.broadcast %cst_31 : f32 to vector<8x1xf32>
    %60 = arith.divf %58, %59 : vector<8x1xf32>
    %61 = vector.broadcast %60 : vector<8x1xf32> to vector<8x32xf32>
    %62 = arith.subf %54, %61 : vector<8x32xf32>
    %63 = arith.mulf %62, %62 : vector<8x32xf32>
    %cst_32 = arith.constant dense<0.000000e+00> : vector<8xf32>
    %64 = vector.multi_reduction <add>, %63, %cst_32 [1] : vector<8x32xf32> to vector<8xf32>
    %65 = vector.shape_cast %64 : vector<8xf32> to vector<8x1xf32>
    %cst_33 = arith.constant 3.200000e+01 : f32
    %66 = vector.broadcast %cst_33 : f32 to vector<8x1xf32>
    %67 = arith.divf %65, %66 : vector<8x1xf32>
    %68 = vector.broadcast %60 : vector<8x1xf32> to vector<8x32xf32>
    %69 = arith.subf %54, %68 : vector<8x32xf32>
    %cst_34 = arith.constant 9.99999974E-6 : f32
    %70 = vector.broadcast %cst_34 : f32 to vector<8x1xf32>
    %71 = arith.addf %67, %70 : vector<8x1xf32>
    %72 = math.rsqrt %71 : vector<8x1xf32>
    %73 = vector.broadcast %72 : vector<8x1xf32> to vector<8x32xf32>
    %74 = arith.mulf %69, %73 : vector<8x32xf32>
    %75 = vector.broadcast %55 : vector<1x32xf32> to vector<8x32xf32>
    %76 = arith.mulf %74, %75 : vector<8x32xf32>
    %77 = vector.broadcast %56 : vector<1x32xf32> to vector<8x32xf32>
    %78 = arith.addf %76, %77 : vector<8x32xf32>
    %c0_35 = arith.constant 0 : index
    %c0_36 = arith.constant 0 : index
    %c0_37 = arith.constant 0 : index
    %79 = vector.load %arg13[%c0_35, %c0_36, %c0_37] : memref<1x8x32xf32, #tpu.memory_space<vmem>>, vector<1x8x32xf32>
    %80 = vector.shape_cast %79 : vector<1x8x32xf32> to vector<8x32xf32>
    %81 = vector.shape_cast %78 : vector<8x32xf32> to vector<1x8x32xf32>
    tpu.vector_store %arg13[%c0_35, %c0_36, %c0_37], %81 {strides = array<i32>} : memref<1x8x32xf32, #tpu.memory_space<vmem>>, vector<1x8x32xf32>,
    return
  }
  func.func @transform_0(%arg0: i32, %arg1: i32) -> (i32, i32, i32) {
    %c0_i32 = arith.constant 0 : i32
    %c0_i32_0 = arith.constant 0 : i32
    return %arg0, %arg1, %c0_i32 : i32, i32, i32
  }
  func.func @transform_1(%arg0: i32, %arg1: i32) -> (i32, i32, i32) {
    %c0_i32 = arith.constant 0 : i32
    %c0_i32_0 = arith.constant 0 : i32
    %c0_i32_1 = arith.constant 0 : i32
    return %arg0, %c0_i32, %c0_i32_0 : i32, i32, i32
  }
  func.func @transform_2(%arg0: i32, %arg1: i32) -> (i32, i32) {
    %c0_i32 = arith.constant 0 : i32
    %c0_i32_0 = arith.constant 0 : i32
    return %arg1, %c0_i32 : i32, i32
  }
  func.func @transform_3(%arg0: i32, %arg1: i32) -> (i32, i32) {
    %c0_i32 = arith.constant 0 : i32
    %c0_i32_0 = arith.constant 0 : i32
    %c0_i32_1 = arith.constant 0 : i32
    return %c0_i32, %c0_i32_0 : i32, i32
  }
  func.func @transform_4(%arg0: i32, %arg1: i32) -> (i32, i32) {
    %c0_i32 = arith.constant 0 : i32
    %c0_i32_0 = arith.constant 0 : i32
    %c0_i32_1 = arith.constant 0 : i32
    return %c0_i32, %c0_i32_0 : i32, i32
  }
  func.func @transform_5(%arg0: i32, %arg1: i32) -> (i32, i32) {
    %c0_i32 = arith.constant 0 : i32
    %c0_i32_0 = arith.constant 0 : i32
    %c0_i32_1 = arith.constant 0 : i32
    return %c0_i32, %c0_i32_0 : i32, i32
  }
  func.func @transform_6(%arg0: i32, %arg1: i32) -> (i32, i32) {
    %c0_i32 = arith.constant 0 : i32
    %c0_i32_0 = arith.constant 0 : i32
    %c0_i32_1 = arith.constant 0 : i32
    return %c0_i32, %c0_i32_0 : i32, i32
  }
  func.func @transform_7(%arg0: i32, %arg1: i32) -> (i32, i32) {
    %c0_i32 = arith.constant 0 : i32
    %c0_i32_0 = arith.constant 0 : i32
    %c0_i32_1 = arith.constant 0 : i32
    return %c0_i32, %c0_i32_0 : i32, i32
  }
  func.func @transform_8(%arg0: i32, %arg1: i32) -> (i32, i32) {
    %c0_i32 = arith.constant 0 : i32
    %c0_i32_0 = arith.constant 0 : i32
    %c0_i32_1 = arith.constant 0 : i32
    return %c0_i32, %c0_i32_0 : i32, i32
  }
  func.func @transform_9(%arg0: i32, %arg1: i32) -> (i32, i32) {
    %c0_i32 = arith.constant 0 : i32
    %c0_i32_0 = arith.constant 0 : i32
    %c0_i32_1 = arith.constant 0 : i32
    return %c0_i32, %c0_i32_0 : i32, i32
  }
  func.func @transform_10(%arg0: i32, %arg1: i32) -> (i32, i32) {
    %c0_i32 = arith.constant 0 : i32
    %c0_i32_0 = arith.constant 0 : i32
    %c0_i32_1 = arith.constant 0 : i32
    return %c0_i32, %c0_i32_0 : i32, i32
  }
  func.func @transform_11(%arg0: i32, %arg1: i32) -> (i32, i32, i32) {
    %c0_i32 = arith.constant 0 : i32
    %c0_i32_0 = arith.constant 0 : i32
    return %arg0, %arg1, %c0_i32 : i32, i32, i32
  }
}

</mosaic_0001>

<llo_original>
// kernel: decoder.8
$region0: #{decoder.8}
  #allocation0 [shape = 'u32[]', space=smem, size = 0x4, offset = 0x4, fixed_abs, tag = 'smem constant byte address 0x4 - core index']
  #allocation1 [shape = 'u32[144,128]{1,0:T(1,128)}', space=vmem, size = 0x12000, scoped, tag = 'internal scratch']
  %s0 = inlined_call_operand.hbm [shape: f32[16,32], index: 0, kind: input, shape index: {}]
  %s1 = inlined_call_operand.hbm [shape: bf16[32,64], index: 1, kind: input, shape index: {}]
  %s2 = inlined_call_operand.hbm [shape: f32[1,64], index: 2, kind: input, shape index: {}]
  %s3 = inlined_call_operand.hbm [shape: bf16[64,32], index: 3, kind: input, shape index: {}]
  %s4 = inlined_call_operand.hbm [shape: f32[1,32], index: 4, kind: input, shape index: {}]
  %s5 = inlined_call_operand.hbm [shape: f32[1,32], index: 5, kind: input, shape index: {}]
  %s6 = inlined_call_operand.hbm [shape: f32[1,32], index: 6, kind: input, shape index: {}]
  %s7 = inlined_call_operand.hbm [shape: f32[16,32], index: 7, kind: output, shape index: {}]
  %s8 = sld [smem:[#allocation0]]
  $region66: #{decoder.8} parent=0
    _
  %s10 = ssub.s32 1, %s8
  %s11 = scalar_select 0, %s10, %s8
  $region1: #{decoder.8} parent=0
    #allocation2 [shape = 'u8[8192]{0}', space=vmem, size = 0x2000, scoped, tag = 'input window, operand 0, single buffered']
    #allocation3 [shape = 's32[1]{0}', space=sflag, size = 0x4, scoped, tag = 'scoped memory for decoder.8']
    #allocation4 [shape = 's32[1]{0}', space=sflag, size = 0x4, scoped, tag = 'scoped memory for decoder.8']
    #allocation5 [shape = 'u8[8192]{0}', space=vmem, size = 0x2000, scoped, tag = 'input window, operand 1, single buffered']
    #allocation6 [shape = 's32[1]{0}', space=sflag, size = 0x4, scoped, tag = 'scoped memory for decoder.8']
    #allocation7 [shape = 'u8[512]{0}', space=vmem, size = 0x400, scoped, tag = 'input window, operand 2, single buffered']
    #allocation8 [shape = 'u8[16384]{0}', space=vmem, size = 0x4000, scoped, tag = 'input window, operand 3, single buffered']
    #allocation9 [shape = 's32[1]{0}', space=sflag, size = 0x4, scoped, tag = 'scoped memory for decoder.8']
    #allocation10 [shape = 'u8[512]{0}', space=vmem, size = 0x400, scoped, tag = 'input window, operand 4, single buffered']
    #allocation11 [shape = 'u8[512]{0}', space=vmem, size = 0x400, scoped, tag = 'input window, operand 5, single buffered']
    #allocation12 [shape = 's32[1]{0}', space=sflag, size = 0x4, scoped, tag = 'scoped memory for decoder.8']
    #allocation13 [shape = 'u8[512]{0}', space=vmem, size = 0x400, scoped, tag = 'input window, operand 6, single buffered']
    #allocation14 [shape = 'u8[8192]{0}', space=vmem, size = 0x2000, scoped, tag = 'output window, operand 0, single buffered']
    %12 = vsyncpa [#allocation3], 0
    %13 = vsyncpa [#allocation6], 0
    %14 = vsyncpa [#allocation9], 0
    %15 = vsyncpa [#allocation12], 0
    %16 = vsyncpa [#allocation4], 0
    // Predicated region
    $region2: #{decoder.8} parent=1 // pred_check
      _
    $region3: #{decoder.8} parent=1 // pred_check_branch
      %18 = sbr.rel (0) target = $region5
    $region4: #{decoder.8} parent=1 // pred_region
      %s20 = ssub.s32 256, 256
      %21 = vsyncadd [#allocation3], %s20
      %s22 = sshll.u32 [#allocation2], 4
      %s23 = int_to_ptr.vmem [resolvable:$true] %s22
      %28 = dma.hbm_to_vmem [thread:$0]  %s0, 256, %s23, [#allocation3], 128, 128, 8
    $region5: #{decoder.8} parent=1 // pred_fallthru
      _
    // Predicated region
    $region6: #{decoder.8} parent=1 // pred_check
      _
    $region7: #{decoder.8} parent=1 // pred_check_branch
      %30 = sbr.rel (0) target = $region9
    $region8: #{decoder.8} parent=1 // pred_region
      %s32 = ssub.s32 256, 256
      %33 = vsyncadd [#allocation6], %s32
      %s34 = sshll.u32 [#allocation5], 4
      %s35 = int_to_ptr.vmem [resolvable:$true] %s34
      %40 = dma.hbm_to_vmem [thread:$0]  %s1, 256, %s35, [#allocation6], 64, 64, 4
    $region9: #{decoder.8} parent=1 // pred_fallthru
      _
    // Predicated region
    $region10: #{decoder.8} parent=1 // pred_check
      _
    $region11: #{decoder.8} parent=1 // pred_check_branch
      %42 = sbr.rel (0) target = $region13
    $region12: #{decoder.8} parent=1 // pred_region
      %s44 = ssub.s32 16, 16
      %45 = vsyncadd [#allocation6], %s44
      %s47 = sshll.u32 [#allocation7], 4
      %s48 = int_to_ptr.vmem [resolvable:$true] %s47
      %50 = dma.hbm_to_vmem [thread:$0]  %s2, 16, %s48, [#allocation6]
    $region13: #{decoder.8} parent=1 // pred_fallthru
      _
    // Predicated region
    $region14: #{decoder.8} parent=1 // pred_check
      _
    $region15: #{decoder.8} parent=1 // pred_check_branch
      %52 = sbr.rel (0) target = $region17
    $region16: #{decoder.8} parent=1 // pred_region
      %s54 = ssub.s32 512, 512
      %55 = vsyncadd [#allocation9], %s54
      %s56 = sshll.u32 [#allocation8], 4
      %s57 = int_to_ptr.vmem [resolvable:$true] %s56
      %62 = dma.hbm_to_vmem [thread:$0]  %s3, 512, %s57, [#allocation9], 64, 64, 4
    $region17: #{decoder.8} parent=1 // pred_fallthru
      _
    // Predicated region
    $region18: #{decoder.8} parent=1 // pred_check
      _
    $region19: #{decoder.8} parent=1 // pred_check_branch
      %64 = sbr.rel (0) target = $region21
    $region20: #{decoder.8} parent=1 // pred_region
      %s66 = ssub.s32 16, 16
      %67 = vsyncadd [#allocation9], %s66
      %s69 = sshll.u32 [#allocation10], 4
      %s70 = int_to_ptr.vmem [resolvable:$true] %s69
      %72 = dma.hbm_to_vmem [thread:$0]  %s4, 16, %s70, [#allocation9]
    $region21: #{decoder.8} parent=1 // pred_fallthru
      _
    // Predicated region
    $region22: #{decoder.8} parent=1 // pred_check
      _
    $region23: #{decoder.8} parent=1 // pred_check_branch
      %74 = sbr.rel (0) target = $region25
    $region24: #{decoder.8} parent=1 // pred_region
      %s76 = ssub.s32 16, 16
      %77 = vsyncadd [#allocation12], %s76
      %s79 = sshll.u32 [#allocation11], 4
      %s80 = int_to_ptr.vmem [resolvable:$true] %s79
      %82 = dma.hbm_to_vmem [thread:$0]  %s5, 16, %s80, [#allocation12]
    $region25: #{decoder.8} parent=1 // pred_fallthru
      _
    // Predicated region
    $region26: #{decoder.8} parent=1 // pred_check
      _
    $region27: #{decoder.8} parent=1 // pred_check_branch
      %84 = sbr.rel (0) target = $region29
    $region28: #{decoder.8} parent=1 // pred_region
      %s86 = ssub.s32 16, 16
      %87 = vsyncadd [#allocation12], %s86
      %s89 = sshll.u32 [#allocation13], 4
      %s90 = int_to_ptr.vmem [resolvable:$true] %s89
      %92 = dma.hbm_to_vmem [thread:$0]  %s6, 16, %s90, [#allocation12]
    $region29: #{decoder.8} parent=1 // pred_fallthru
      _
    // Predicated region
    $region30: #{decoder.8} parent=1 // pred_check
      _
    $region31: #{decoder.8} parent=1 // pred_check_branch
      %94 = sbr.rel (0) target = $region33
    $region32: #{decoder.8} parent=1 // pred_region
      %95 = dma.done [#allocation3], 256
    $region33: #{decoder.8} parent=1 // pred_fallthru
      _
    // Predicated region
    $region34: #{decoder.8} parent=1 // pred_check
      _
    $region35: #{decoder.8} parent=1 // pred_check_branch
      %97 = sbr.rel (0) target = $region37
    $region36: #{decoder.8} parent=1 // pred_region
      %98 = dma.done [#allocation6], 256
    $region37: #{decoder.8} parent=1 // pred_fallthru
      _
    // Predicated region
    $region38: #{decoder.8} parent=1 // pred_check
      _
    $region39: #{decoder.8} parent=1 // pred_check_branch
      %100 = sbr.rel (0) target = $region41
    $region40: #{decoder.8} parent=1 // pred_region
      %101 = dma.done [#allocation6], 16
    $region41: #{decoder.8} parent=1 // pred_fallthru
      _
    // Predicated region
    $region42: #{decoder.8} parent=1 // pred_check
      _
    $region43: #{decoder.8} parent=1 // pred_check_branch
      %103 = sbr.rel (0) target = $region45
    $region44: #{decoder.8} parent=1 // pred_region
      %104 = dma.done [#allocation9], 512
    $region45: #{decoder.8} parent=1 // pred_fallthru
      _
    // Predicated region
    $region46: #{decoder.8} parent=1 // pred_check
      _
    $region47: #{decoder.8} parent=1 // pred_check_branch
      %106 = sbr.rel (0) target = $region49
    $region48: #{decoder.8} parent=1 // pred_region
      %107 = dma.done [#allocation9], 16
    $region49: #{decoder.8} parent=1 // pred_fallthru
      _
    // Predicated region
    $region50: #{decoder.8} parent=1 // pred_check
      _
    $region51: #{decoder.8} parent=1 // pred_check_branch
      %109 = sbr.rel (0) target = $region53
    $region52: #{decoder.8} parent=1 // pred_region
      %110 = dma.done [#allocation12], 16
    $region53: #{decoder.8} parent=1 // pred_fallthru
      _
    // Predicated region
    $region54: #{decoder.8} parent=1 // pred_check
      _
    $region55: #{decoder.8} parent=1 // pred_check_branch
      %112 = sbr.rel (0) target = $region57
    $region56: #{decoder.8} parent=1 // pred_region
      %113 = dma.done [#allocation12], 16
    $region57: #{decoder.8} parent=1 // pred_fallthru
      _
    %v115 = vld [vmem:[#allocation2] sm:$0xff]
    %v116 = vld [vmem:[#allocation2 + $0x8] sm:$0xff]
    %v117 = vpack.c.bf16 %v116, %v115
    %v118 = vld [vmem:[#allocation5] sm:$0xf]
    %v119 = vld [vmem:[#allocation5 + $0x4] sm:$0xf]
    %v120 = vld [vmem:[#allocation5 + $0x8] sm:$0xf]
    %v121 = vld [vmem:[#allocation5 + $0xc] sm:$0xf]
    %v122 = vld [vmem:[#allocation7] sm:$0x1]
    %v124 = vlaneseq
    %v125 = vshrl.u32 %v124, 7
    %v126 = vsub.s32 0, %v125
    %v127 = vrot.slane %v122, %v126
    %v133 = vunpack.c.l.b16 %v118
    %v134 = vunpack.c.l.b16 %v119
    %v135 = vunpack.c.l.b16 %v120
    %v136 = vunpack.c.l.b16 %v121
    %v137 = vpack.c.b16 %v134, %v133
    %v138 = vpack.c.b16 %v136, %v135
    %vm141 = vcmask 261120
    %v143 = vsel %vm141, %v117, 0
    %145 = vmatprep.subr.bf16.mxu0 0
    %146 = vmatpush1.bf16.msra.mxu0 %v137
    %147 = vmatprep.subr.bf16.mxu0 0
    %148 = vmatpush1.bf16.msra.mxu0 %v138
    %149 = vmatprep.subr.bf16.mxu0 0
    %150 = vmatpush1.bf16.msra.mxu0 0
    %151 = vmatprep.subr.bf16.mxu0 0
    %152 = vmatpush1.bf16.msra.mxu0 0
    %153 = vmatprep.subr.bf16.mxu0 0
    %154 = vmatpush1.bf16.msra.mxu0 0
    %155 = vmatprep.subr.bf16.mxu0 0
    %156 = vmatpush1.bf16.msra.mxu0 0
    %157 = vmatprep.subr.bf16.mxu0 0
    %158 = vmatpush1.bf16.msra.mxu0 0
    %159 = vmatprep.subr.bf16.mxu0 0
    %160 = vmatpush1.bf16.msra.mxu0 0
    %161 = vmatprep.subr.bf16.mxu0 0
    %162 = vmatpush1.bf16.msra.mxu0 0
    %163 = vmatprep.subr.bf16.mxu0 0
    %164 = vmatpush1.bf16.msra.mxu0 0
    %165 = vmatprep.subr.bf16.mxu0 0
    %166 = vmatpush1.bf16.msra.mxu0 0
    %167 = vmatprep.subr.bf16.mxu0 0
    %168 = vmatpush1.bf16.msra.mxu0 0
    %169 = vmatprep.subr.bf16.mxu0 0
    %170 = vmatpush1.bf16.msra.mxu0 0
    %171 = vmatprep.subr.bf16.mxu0 0
    %172 = vmatpush1.bf16.msra.mxu0 0
    %173 = vmatprep.subr.bf16.mxu0 0
    %174 = vmatpush1.bf16.msra.mxu0 0
    %175 = vmatprep.subr.bf16.mxu0 0
    %176 = vmatpush1.bf16.msra.mxu0 0
    %177 = vmatprep.mubr.bf16.mxu0 0
    %178 = vmatmul.mubr.bf16.gmra.mrb[0].mxu0 %v143
    %v179 = vpop.f32.mrb[0].mxu0
    %v180 = vadd.f32 %v127, %v179
    %v181 = vpop.f32.mrb[0].mxu0
    %v182 = vpop.f32.mrb[0].mxu0
    %v183 = vadd.f32 %v127, %v182
    %v184 = vpop.f32.mrb[0].mxu0
    %185 = vdwg.mxu0
    %v186 = vmax.f32 %v180, 0.0
    %v187 = vmax.f32 %v183, 0.0
    %v188 = vpack.c.bf16 %v187, %v186
    %v189 = vld [vmem:[#allocation8] sm:$0xf]
    %v190 = vld [vmem:[#allocation8 + $0x4] sm:$0xf]
    %v191 = vld [vmem:[#allocation8 + $0x8] sm:$0xf]
    %v192 = vld [vmem:[#allocation8 + $0xc] sm:$0xf]
    %v193 = vld [vmem:[#allocation8 + $0x10] sm:$0xf]
    %v194 = vld [vmem:[#allocation8 + $0x14] sm:$0xf]
    %v195 = vld [vmem:[#allocation8 + $0x18] sm:$0xf]
    %v196 = vld [vmem:[#allocation8 + $0x1c] sm:$0xf]
    %v197 = vld [vmem:[#allocation10] sm:$0x1]
    %v199 = vlaneseq
    %v200 = vshrl.u32 %v199, 7
    %v201 = vsub.s32 0, %v200
    %v202 = vrot.slane %v197, %v201
    %v212 = vunpack.c.l.b16 %v189
    %v213 = vunpack.c.l.b16 %v190
    %v214 = vunpack.c.l.b16 %v191
    %v215 = vunpack.c.l.b16 %v192
    %v216 = vunpack.c.l.b16 %v193
    %v217 = vunpack.c.l.b16 %v194
    %v218 = vunpack.c.l.b16 %v195
    %v219 = vunpack.c.l.b16 %v196
    %v220 = vpack.c.b16 %v213, %v212
    %v221 = vpack.c.b16 %v215, %v214
    %v222 = vpack.c.b16 %v217, %v216
    %v223 = vpack.c.b16 %v219, %v218
    %vm228 = vcmask 523264
    %v230 = vsel %vm228, %v188, 0
    %232 = vmatprep.subr.bf16.mxu0 0
    %233 = vmatpush1.bf16.msra.mxu0 %v220
    %234 = vmatprep.subr.bf16.mxu0 0
    %235 = vmatpush1.bf16.msra.mxu0 %v221
    %236 = vmatprep.subr.bf16.mxu0 0
    %237 = vmatpush1.bf16.msra.mxu0 %v222
    %238 = vmatprep.subr.bf16.mxu0 0
    %239 = vmatpush1.bf16.msra.mxu0 %v223
    %240 = vmatprep.subr.bf16.mxu0 0
    %241 = vmatpush1.bf16.msra.mxu0 0
    %242 = vmatprep.subr.bf16.mxu0 0
    %243 = vmatpush1.bf16.msra.mxu0 0
    %244 = vmatprep.subr.bf16.mxu0 0
    %245 = vmatpush1.bf16.msra.mxu0 0
    %246 = vmatprep.subr.bf16.mxu0 0
    %247 = vmatpush1.bf16.msra.mxu0 0
    %248 = vmatprep.subr.bf16.mxu0 0
    %249 = vmatpush1.bf16.msra.mxu0 0
    %250 = vmatprep.subr.bf16.mxu0 0
    %251 = vmatpush1.bf16.msra.mxu0 0
    %252 = vmatprep.subr.bf16.mxu0 0
    %253 = vmatpush1.bf16.msra.mxu0 0
    %254 = vmatprep.subr.bf16.mxu0 0
    %255 = vmatpush1.bf16.msra.mxu0 0
    %256 = vmatprep.subr.bf16.mxu0 0
    %257 = vmatpush1.bf16.msra.mxu0 0
    %258 = vmatprep.subr.bf16.mxu0 0
    %259 = vmatpush1.bf16.msra.mxu0 0
    %260 = vmatprep.subr.bf16.mxu0 0
    %261 = vmatpush1.bf16.msra.mxu0 0
    %262 = vmatprep.subr.bf16.mxu0 0
    %263 = vmatpush1.bf16.msra.mxu0 0
    %264 = vmatprep.mubr.bf16.mxu0 0
    %265 = vmatmul.mubr.bf16.gmra.mrb[0].mxu0 %v230
    %v266 = vpop.f32.mrb[0].mxu0
    %v267 = vadd.f32 %v202, %v266
    %v268 = vpop.f32.mrb[0].mxu0
    %v269 = vpop.f32.mrb[0].mxu0
    %v270 = vadd.f32 %v202, %v269
    %v271 = vpop.f32.mrb[0].mxu0
    %272 = vdwg.mxu0
    %v273 = vadd.f32 %v115, %v267
    %v274 = vadd.f32 %v116, %v270
    %v275 = vld [vmem:[#allocation11] sm:$0x1]
    %v276 = vld [vmem:[#allocation13] sm:$0x1]
    %v277 = vsel %vm141, %v273, 0.0
    %278 = vadd.xlane.f32.xlu0 %v277
    %v279 = vpop.xlane.xlu0 %278
    %v280 = vsel %vm141, %v274, 0.0
    %281 = vadd.xlane.f32.xlu0 %v280
    %v282 = vpop.xlane.xlu0 %281
    %v283 = vrcp.pop 32.0
    %v284 = vmul.f32 %v279, %v283
    %v285 = vmul.f32 %v282, %v283
    %v286 = vsub.f32 %v273, %v284
    %v287 = vsub.f32 %v274, %v285
    %v288 = vmul.f32 %v286, %v286
    %v289 = vmul.f32 %v287, %v287
    %v290 = vsel %vm141, %v288, 0.0
    %291 = vadd.xlane.f32.xlu0 %v290
    %v292 = vpop.xlane.xlu0 %291
    %v293 = vsel %vm141, %v289, 0.0
    %294 = vadd.xlane.f32.xlu0 %v293
    %v295 = vpop.xlane.xlu0 %294
    %v296 = vmul.f32 %v292, %v283
    %v297 = vmul.f32 %v295, %v283
    %v298 = vadd.f32 %v296, 1e-05
    %v299 = vadd.f32 %v297, 1e-05
    %v300 = vrsqrt.pop %v298
    %v301 = vrsqrt.pop %v299
    %v302 = vmul.f32 %v286, %v300
    %v303 = vmul.f32 %v287, %v301
    %v305 = vlaneseq
    %v306 = vshrl.u32 %v305, 7
    %v307 = vsub.s32 0, %v306
    %v308 = vrot.slane %v275, %v307
    %v310 = vmul.f32 %v302, %v308
    %v311 = vmul.f32 %v303, %v308
    %v313 = vlaneseq
    %v314 = vshrl.u32 %v313, 7
    %v315 = vsub.s32 0, %v314
    %v316 = vrot.slane %v276, %v315
    %v318 = vadd.f32 %v310, %v316
    %v319 = vadd.f32 %v311, %v316
    %320 = vst.msk [vmem:[#allocation14] sm:$0xff] %vm141, %v318
    %321 = vst.msk [vmem:[#allocation14 + $0x8] sm:$0xff] %vm141, %v319
    // Predicated region
    $region58: #{decoder.8} parent=1 // pred_check
      _
    $region59: #{decoder.8} parent=1 // pred_check_branch
      %323 = sbr.rel (0) target = $region61
    $region60: #{decoder.8} parent=1 // pred_region
      %s325 = ssub.s32 256, 256
      %326 = vsyncadd [#allocation4], %s325
      %s327 = sshll.u32 [#allocation14], 4
      %s328 = int_to_ptr.vmem [resolvable:$true] %s327
      %333 = dma.vmem_to_hbm [thread:$0]  %s328, 256, %s7, [#allocation4], 128, 128, 8
    $region61: #{decoder.8} parent=1 // pred_fallthru
      _
    // Predicated region
    $region62: #{decoder.8} parent=1 // pred_check
      _
    $region63: #{decoder.8} parent=1 // pred_check_branch
      %335 = sbr.rel (0) target = $region65
    $region64: #{decoder.8} parent=1 // pred_region
      %336 = dma.done [#allocation4], 256
    $region65: #{decoder.8} parent=1 // pred_fallthru
      _
    %337 = vsyncpa [#allocation3], 1
    %338 = vsyncpa [#allocation6], 1
    %339 = vsyncpa [#allocation9], 1
    %340 = vsyncpa [#allocation12], 1
    %341 = vsyncpa [#allocation4], 1

// kernel: decoder.6
$region0: #{decoder.6}
  #allocation0 [shape = 'u32[]', space=smem, size = 0x4, offset = 0x4, fixed_abs, tag = 'smem constant byte address 0x4 - core index']
  #allocation1 [shape = 'u32[144,128]{1,0:T(1,128)}', space=vmem, size = 0x12000, scoped, tag = 'internal scratch']
  %s0 = inlined_call_operand.hbm [shape: f32[2,8,32], index: 0, kind: input, shape index: {}, may-alias: {0,1}]
  %s1 = inlined_call_operand.hbm [shape: f32[2,8,32], index: 1, kind: input, shape index: {}, may-alias: {0,1}]
  %s2 = inlined_call_operand.hbm [shape: f32[8,8], index: 2, kind: input, shape index: {}]
  %s3 = inlined_call_operand.hbm [shape: bf16[32,32], index: 3, kind: input, shape index: {}]
  %s4 = inlined_call_operand.hbm [shape: f32[1,32], index: 4, kind: input, shape index: {}]
  %s5 = inlined_call_operand.hbm [shape: bf16[32,64], index: 5, kind: input, shape index: {}]
  %s6 = inlined_call_operand.hbm [shape: f32[1,64], index: 6, kind: input, shape index: {}]
  %s7 = inlined_call_operand.hbm [shape: bf16[32,32], index: 7, kind: input, shape index: {}]
  %s8 = inlined_call_operand.hbm [shape: f32[1,32], index: 8, kind: input, shape index: {}]
  %s9 = inlined_call_operand.hbm [shape: f32[1,32], index: 9, kind: input, shape index: {}]
  %s10 = inlined_call_operand.hbm [shape: f32[1,32], index: 10, kind: input, shape index: {}]
  %s11 = inlined_call_operand.hbm [shape: f32[2,8,32], index: 11, kind: output, shape index: {}]
  %s12 = sld [smem:[#allocation0]]
  $region121: #{decoder.6} parent=0
    _
  %s14 = ssub.s32 1, %s12
  %s15 = scalar_select 0, %s14, %s12
  $region1: #{decoder.6} parent=0
    #allocation2 [shape = 'u8[8192]{0}', space=vmem, size = 0x2000, scoped, tag = 'input window, operand 0']
    #allocation3 [shape = 's32[2]{0}', space=sflag, size = 0x8, scoped, tag = 'scoped memory for decoder.6']
    #allocation4 [shape = 's32[2]{0}', space=sflag, size = 0x8, scoped, tag = 'scoped memory for decoder.6']
    #allocation5 [shape = 'u8[8192]{0}', space=vmem, size = 0x2000, scoped, tag = 'input window, operand 1']
    #allocation6 [shape = 's32[2]{0}', space=sflag, size = 0x8, scoped, tag = 'scoped memory for decoder.6']
    #allocation7 [shape = 'u8[4096]{0}', space=vmem, size = 0x1000, scoped, tag = 'input window, operand 2, single buffered']
    #allocation8 [shape = 'u8[8192]{0}', space=vmem, size = 0x2000, scoped, tag = 'input window, operand 3, single buffered']
    #allocation9 [shape = 's32[1]{0}', space=sflag, size = 0x4, scoped, tag = 'scoped memory for decoder.6']
    #allocation10 [shape = 'u8[512]{0}', space=vmem, size = 0x400, scoped, tag = 'input window, operand 4, single buffered']
    #allocation11 [shape = 'u8[8192]{0}', space=vmem, size = 0x2000, scoped, tag = 'input window, operand 5, single buffered']
    #allocation12 [shape = 's32[1]{0}', space=sflag, size = 0x4, scoped, tag = 'scoped memory for decoder.6']
    #allocation13 [shape = 'u8[512]{0}', space=vmem, size = 0x400, scoped, tag = 'input window, operand 6, single buffered']
    #allocation14 [shape = 'u8[8192]{0}', space=vmem, size = 0x2000, scoped, tag = 'input window, operand 7, single buffered']
    #allocation15 [shape = 's32[1]{0}', space=sflag, size = 0x4, scoped, tag = 'scoped memory for decoder.6']
    #allocation16 [shape = 'u8[512]{0}', space=vmem, size = 0x400, scoped, tag = 'input window, operand 8, single buffered']
    #allocation17 [shape = 'u8[512]{0}', space=vmem, size = 0x400, scoped, tag = 'input window, operand 9, single buffered']
    #allocation18 [shape = 's32[1]{0}', space=sflag, size = 0x4, scoped, tag = 'scoped memory for decoder.6']
    #allocation19 [shape = 'u8[512]{0}', space=vmem, size = 0x400, scoped, tag = 'input window, operand 10, single buffered']
    #allocation20 [shape = 'u8[8192]{0}', space=vmem, size = 0x2000, scoped, tag = 'output window, operand 0']
    %16 = vsyncpa [#allocation3], 0
    %s17 = scalar_lea.sflag [#allocation3], 1
    %18 = vsyncpa %s17, 0
    %19 = vsyncpa [#allocation6], 0
    %s20 = scalar_lea.sflag [#allocation6], 1
    %21 = vsyncpa %s20, 0
    %22 = vsyncpa [#allocation9], 0
    %23 = vsyncpa [#allocation12], 0
    %24 = vsyncpa [#allocation15], 0
    %25 = vsyncpa [#allocation18], 0
    %26 = vsyncpa [#allocation4], 0
    %s27 = scalar_lea.sflag [#allocation4], 1
    %28 = vsyncpa %s27, 0
    loop: start=0, step=1, limit=4
    $region2: #{decoder.6} parent=1 // loop_pre_header
      _
    $region3: #{decoder.6} parent=1 // loop_header
      %s30 = sphi 0, %s34
      %p31 = scmp.ge.s32.totalorder %s30, 4
      %s37 = sphi 0, %s49
      %s38 = sphi 0, %s45
      %s39 = sphi 0, %s37
      %s40 = sphi 0, %s38
      %s41 = sphi 0, %s39
      %s42 = sphi 0, %s40
      %s54 = sphi 0, %s56
      %s57 = sphi 0, %s54
      %s58 = sphi 0, %s57
      %s74 = sphi 0, %s58
      %s80 = sphi 0, %s82
      %s83 = sphi 0, %s80
      %s84 = sphi 0, %s83
      %s100 = sphi 0, %s84
      %s106 = sphi 0, %s108
      %s109 = sphi 0, %s106
      %s110 = sphi 0, %s109
      %s126 = sphi 0, %s110
      %s130 = sphi 0, %s130
      %s132 = sphi 0, %s130
      %s133 = sphi 0, %s132
      %s147 = sphi 0, %s133
      %s151 = sphi 0, %s151
      %s153 = sphi 0, %s151
      %s154 = sphi 0, %s153
      %s168 = sphi 0, %s154
      %s172 = sphi 0, %s172
      %s174 = sphi 0, %s172
      %s175 = sphi 0, %s174
      %s189 = sphi 0, %s175
      %s193 = sphi 0, %s193
      %s195 = sphi 0, %s193
      %s196 = sphi 0, %s195
      %s210 = sphi 0, %s196
      %s214 = sphi 0, %s214
      %s216 = sphi 0, %s214
      %s217 = sphi 0, %s216
      %s231 = sphi 0, %s217
      %s235 = sphi 0, %s235
      %s237 = sphi 0, %s235
      %s238 = sphi 0, %s237
      %s252 = sphi 0, %s238
      %s256 = sphi 0, %s256
      %s258 = sphi 0, %s256
      %s259 = sphi 0, %s258
      %s273 = sphi 0, %s259
      %s277 = sphi 0, %s277
      %s279 = sphi 0, %s277
      %s280 = sphi 0, %s279
      %s294 = sphi 0, %s280
      %s302 = sphi 0, %s304
      %s305 = sphi 0, %s302
      %s306 = sphi 0, %s305
      %s322 = sphi 0, %s306
    $region4: #{decoder.6} parent=1 // loop_header_branch
      %33 = sbr.rel (%p31) target = $region8
    $region5: #{decoder.6} parent=1 // loop_body
      %s35 = ssub.s32 %s30, 1
      %s36 = ssub.s32 %s30, 2
      %s43 = sadd.s32 1, %s38
      %p44 = scmp.ge.s32.totalorder %s43, 1
      %s45 = scalar_select %p44, 0, %s43
      %s46 = sadd.s32 1, %s37
      %s47 = scalar_select %p44, %s46, %s37
      %p48 = scmp.ge.s32.totalorder %s47, 2
      %s49 = scalar_select %p48, 0, %s47
      %s50 = ssub.s32 %s37, %s49
      %s51 = ssub.s32 %s38, %s45
      %s52 = sor.u32 %s50, %s51
      %p53 = scmp.eq.s32.totalorder %s52, 0
      %s55 = sadd.s32 %s54, 1
      %s56 = scalar_select %p53, %s54, %s55
      %p59 = pneg %p53
      %p60 = scmp.eq.s32.totalorder %s30, 1
      %p61 = por %p59, %p60
      %p62 = scmp.ne.s32.totalorder %s54, %s57
      %p63 = scmp.eq.s32.totalorder %s30, 0
      %p64 = por %p62, %p63
      %p65 = scmp.ne.s32.totalorder %s54, %s57
      %p66 = scmp.eq.s32.totalorder %s35, 1
      %p67 = por %p65, %p66
      %p68 = scmp.ne.s32.totalorder %s57, %s58
      %p69 = scmp.eq.s32.totalorder %s35, 0
      %p70 = por %p68, %p69
      %p71 = scmp.ne.s32.totalorder %s57, %s58
      %p72 = scmp.eq.s32.totalorder %s36, 1
      %p73 = por %p71, %p72
      %p75 = scmp.ne.s32.totalorder %s58, %s74
      %p76 = scmp.eq.s32.totalorder %s36, 0
      %p77 = por %p75, %p76
      %s78 = ssub.s32 %s37, %s49
      %p79 = scmp.eq.s32.totalorder %s78, 0
      %s81 = sadd.s32 %s80, 1
      %s82 = scalar_select %p79, %s80, %s81
      %p85 = pneg %p79
      %p86 = scmp.eq.s32.totalorder %s30, 1
      %p87 = por %p85, %p86
      %p88 = scmp.ne.s32.totalorder %s80, %s83
      %p89 = scmp.eq.s32.totalorder %s30, 0
      %p90 = por %p88, %p89
      %p91 = scmp.ne.s32.totalorder %s80, %s83
      %p92 = scmp.eq.s32.totalorder %s35, 1
      %p93 = por %p91, %p92
      %p94 = scmp.ne.s32.totalorder %s83, %s84
      %p95 = scmp.eq.s32.totalorder %s35, 0
      %p96 = por %p94, %p95
      %p97 = scmp.ne.s32.totalorder %s83, %s84
      %p98 = scmp.eq.s32.totalorder %s36, 1
      %p99 = por %p97, %p98
      %p101 = scmp.ne.s32.totalorder %s84, %s100
      %p102 = scmp.eq.s32.totalorder %s36, 0
      %p103 = por %p101, %p102
      %s104 = ssub.s32 %s38, %s45
      %p105 = scmp.eq.s32.totalorder %s104, 0
      %s107 = sadd.s32 %s106, 1
      %s108 = scalar_select %p105, %s106, %s107
      %p111 = pneg %p105
      %p112 = scmp.eq.s32.totalorder %s30, 1
      %p113 = por %p111, %p112
      %p114 = scmp.ne.s32.totalorder %s106, %s109
      %p115 = scmp.eq.s32.totalorder %s30, 0
      %p116 = por %p114, %p115
      %p117 = scmp.ne.s32.totalorder %s106, %s109
      %p118 = scmp.eq.s32.totalorder %s35, 1
      %p119 = por %p117, %p118
      %p120 = scmp.ne.s32.totalorder %s109, %s110
      %p121 = scmp.eq.s32.totalorder %s35, 0
      %p122 = por %p120, %p121
      %p123 = scmp.ne.s32.totalorder %s109, %s110
      %p124 = scmp.eq.s32.totalorder %s36, 1
      %p125 = por %p123, %p124
      %p127 = scmp.ne.s32.totalorder %s110, %s126
      %p128 = scmp.eq.s32.totalorder %s36, 0
      %p129 = por %p127, %p128
      %s131 = sadd.s32 %s130, 1
      %p134 = scmp.eq.s32.totalorder %s30, 1
      %p135 = scmp.ne.s32.totalorder %s130, %s132
      %p136 = scmp.eq.s32.totalorder %s30, 0
      %p137 = por %p135, %p136
      %p138 = scmp.ne.s32.totalorder %s130, %s132
      %p139 = scmp.eq.s32.totalorder %s35, 1
      %p140 = por %p138, %p139
      %p141 = scmp.ne.s32.totalorder %s132, %s133
      %p142 = scmp.eq.s32.totalorder %s35, 0
      %p143 = por %p141, %p142
      %p144 = scmp.ne.s32.totalorder %s132, %s133
      %p145 = scmp.eq.s32.totalorder %s36, 1
      %p146 = por %p144, %p145
      %p148 = scmp.ne.s32.totalorder %s133, %s147
      %p149 = scmp.eq.s32.totalorder %s36, 0
      %p150 = por %p148, %p149
      %s152 = sadd.s32 %s151, 1
      %p155 = scmp.eq.s32.totalorder %s30, 1
      %p156 = scmp.ne.s32.totalorder %s151, %s153
      %p157 = scmp.eq.s32.totalorder %s30, 0
      %p158 = por %p156, %p157
      %p159 = scmp.ne.s32.totalorder %s151, %s153
      %p160 = scmp.eq.s32.totalorder %s35, 1
      %p161 = por %p159, %p160
      %p162 = scmp.ne.s32.totalorder %s153, %s154
      %p163 = scmp.eq.s32.totalorder %s35, 0
      %p164 = por %p162, %p163
      %p165 = scmp.ne.s32.totalorder %s153, %s154
      %p166 = scmp.eq.s32.totalorder %s36, 1
      %p167 = por %p165, %p166
      %p169 = scmp.ne.s32.totalorder %s154, %s168
      %p170 = scmp.eq.s32.totalorder %s36, 0
      %p171 = por %p169, %p170
      %s173 = sadd.s32 %s172, 1
      %p176 = scmp.eq.s32.totalorder %s30, 1
      %p177 = scmp.ne.s32.totalorder %s172, %s174
      %p178 = scmp.eq.s32.totalorder %s30, 0
      %p179 = por %p177, %p178
      %p180 = scmp.ne.s32.totalorder %s172, %s174
      %p181 = scmp.eq.s32.totalorder %s35, 1
      %p182 = por %p180, %p181
      %p183 = scmp.ne.s32.totalorder %s174, %s175
      %p184 = scmp.eq.s32.totalorder %s35, 0
      %p185 = por %p183, %p184
      %p186 = scmp.ne.s32.totalorder %s174, %s175
      %p187 = scmp.eq.s32.totalorder %s36, 1
      %p188 = por %p186, %p187
      %p190 = scmp.ne.s32.totalorder %s175, %s189
      %p191 = scmp.eq.s32.totalorder %s36, 0
      %p192 = por %p190, %p191
      %s194 = sadd.s32 %s193, 1
      %p197 = scmp.eq.s32.totalorder %s30, 1
      %p198 = scmp.ne.s32.totalorder %s193, %s195
      %p199 = scmp.eq.s32.totalorder %s30, 0
      %p200 = por %p198, %p199
      %p201 = scmp.ne.s32.totalorder %s193, %s195
      %p202 = scmp.eq.s32.totalorder %s35, 1
      %p203 = por %p201, %p202
      %p204 = scmp.ne.s32.totalorder %s195, %s196
      %p205 = scmp.eq.s32.totalorder %s35, 0
      %p206 = por %p204, %p205
      %p207 = scmp.ne.s32.totalorder %s195, %s196
      %p208 = scmp.eq.s32.totalorder %s36, 1
      %p209 = por %p207, %p208
      %p211 = scmp.ne.s32.totalorder %s196, %s210
      %p212 = scmp.eq.s32.totalorder %s36, 0
      %p213 = por %p211, %p212
      %s215 = sadd.s32 %s214, 1
      %p218 = scmp.eq.s32.totalorder %s30, 1
      %p219 = scmp.ne.s32.totalorder %s214, %s216
      %p220 = scmp.eq.s32.totalorder %s30, 0
      %p221 = por %p219, %p220
      %p222 = scmp.ne.s32.totalorder %s214, %s216
      %p223 = scmp.eq.s32.totalorder %s35, 1
      %p224 = por %p222, %p223
      %p225 = scmp.ne.s32.totalorder %s216, %s217
      %p226 = scmp.eq.s32.totalorder %s35, 0
      %p227 = por %p225, %p226
      %p228 = scmp.ne.s32.totalorder %s216, %s217
      %p229 = scmp.eq.s32.totalorder %s36, 1
      %p230 = por %p228, %p229
      %p232 = scmp.ne.s32.totalorder %s217, %s231
      %p233 = scmp.eq.s32.totalorder %s36, 0
      %p234 = por %p232, %p233
      %s236 = sadd.s32 %s235, 1
      %p239 = scmp.eq.s32.totalorder %s30, 1
      %p240 = scmp.ne.s32.totalorder %s235, %s237
      %p241 = scmp.eq.s32.totalorder %s30, 0
      %p242 = por %p240, %p241
      %p243 = scmp.ne.s32.totalorder %s235, %s237
      %p244 = scmp.eq.s32.totalorder %s35, 1
      %p245 = por %p243, %p244
      %p246 = scmp.ne.s32.totalorder %s237, %s238
      %p247 = scmp.eq.s32.totalorder %s35, 0
      %p248 = por %p246, %p247
      %p249 = scmp.ne.s32.totalorder %s237, %s238
      %p250 = scmp.eq.s32.totalorder %s36, 1
      %p251 = por %p249, %p250
      %p253 = scmp.ne.s32.totalorder %s238, %s252
      %p254 = scmp.eq.s32.totalorder %s36, 0
      %p255 = por %p253, %p254
      %s257 = sadd.s32 %s256, 1
      %p260 = scmp.eq.s32.totalorder %s30, 1
      %p261 = scmp.ne.s32.totalorder %s256, %s258
      %p262 = scmp.eq.s32.totalorder %s30, 0
      %p263 = por %p261, %p262
      %p264 = scmp.ne.s32.totalorder %s256, %s258
      %p265 = scmp.eq.s32.totalorder %s35, 1
      %p266 = por %p264, %p265
      %p267 = scmp.ne.s32.totalorder %s258, %s259
      %p268 = scmp.eq.s32.totalorder %s35, 0
      %p269 = por %p267, %p268
      %p270 = scmp.ne.s32.totalorder %s258, %s259
      %p271 = scmp.eq.s32.totalorder %s36, 1
      %p272 = por %p270, %p271
      %p274 = scmp.ne.s32.totalorder %s259, %s273
      %p275 = scmp.eq.s32.totalorder %s36, 0
      %p276 = por %p274, %p275
      %s278 = sadd.s32 %s277, 1
      %p281 = scmp.eq.s32.totalorder %s30, 1
      %p282 = scmp.ne.s32.totalorder %s277, %s279
      %p283 = scmp.eq.s32.totalorder %s30, 0
      %p284 = por %p282, %p283
      %p285 = scmp.ne.s32.totalorder %s277, %s279
      %p286 = scmp.eq.s32.totalorder %s35, 1
      %p287 = por %p285, %p286
      %p288 = scmp.ne.s32.totalorder %s279, %s280
      %p289 = scmp.eq.s32.totalorder %s35, 0
      %p290 = por %p288, %p289
      %p291 = scmp.ne.s32.totalorder %s279, %s280
      %p292 = scmp.eq.s32.totalorder %s36, 1
      %p293 = por %p291, %p292
      %p295 = scmp.ne.s32.totalorder %s280, %s294
      %p296 = scmp.eq.s32.totalorder %s36, 0
      %p297 = por %p295, %p296
      %s298 = ssub.s32 %s37, %s49
      %s299 = ssub.s32 %s38, %s45
      %s300 = sor.u32 %s298, %s299
      %p301 = scmp.eq.s32.totalorder %s300, 0
      %s303 = sadd.s32 %s302, 1
      %s304 = scalar_select %p301, %s302, %s303
      %p307 = pneg %p301
      %p308 = scmp.eq.s32.totalorder %s30, 1
      %p309 = por %p307, %p308
      %p310 = scmp.ne.s32.totalorder %s302, %s305
      %p311 = scmp.eq.s32.totalorder %s30, 0
      %p312 = por %p310, %p311
      %p313 = scmp.ne.s32.totalorder %s302, %s305
      %p314 = scmp.eq.s32.totalorder %s35, 1
      %p315 = por %p313, %p314
      %p316 = scmp.ne.s32.totalorder %s305, %s306
      %p317 = scmp.eq.s32.totalorder %s35, 0
      %p318 = por %p316, %p317
      %p319 = scmp.ne.s32.totalorder %s305, %s306
      %p320 = scmp.eq.s32.totalorder %s36, 1
      %p321 = por %p319, %p320
      %p323 = scmp.ne.s32.totalorder %s306, %s322
      %p324 = scmp.eq.s32.totalorder %s36, 0
      %p325 = por %p323, %p324
      %p326 = scmp.le.s32.totalorder 1, %s30
      %p327 = scmp.lt.s32.totalorder %s30, 3
      %p328 = pnand %p326, %p327
      %p329 = pneg %p328
      // Predicated region
      $region9: #{decoder.6} parent=5 // pred_check
        _
      $region10: #{decoder.6} parent=5 // pred_check_branch
        %331 = sbr.rel (%p328) target = $region12
      $region11: #{decoder.6} parent=5 // pred_region
        %s332 = ssub.s32 %s30, 1
        // Predicated region
        $region13: #{decoder.6} parent=11 // pred_check
          %p333 = pneg %p122
        $region14: #{decoder.6} parent=11 // pred_check_branch
          %335 = sbr.rel (%p333) target = $region16
        $region15: #{decoder.6} parent=11 // pred_region
          %s337 = ssub.s32 128, 128
          %338 = vsyncadd [#allocation6], %s337
          %s339 = smul.addr %s40, 128
          %s340 = scalar_lea.hbm %s2, %s339
          %s342 = sshll.u32 [#allocation7], 4
          %s343 = int_to_ptr.vmem [resolvable:$true] %s342
          %345 = dma.hbm_to_vmem [thread:$0]  %s340, 128, %s343, [#allocation6]
        $region16: #{decoder.6} parent=11 // pred_fallthru
          _
        // Predicated region
        $region17: #{decoder.6} parent=11 // pred_check
          %p346 = pneg %p143
        $region18: #{decoder.6} parent=11 // pred_check_branch
          %348 = sbr.rel (%p346) target = $region20
        $region19: #{decoder.6} parent=11 // pred_region
          %s350 = ssub.s32 256, 256
          %351 = vsyncadd [#allocation9], %s350
          %s352 = sshll.u32 [#allocation8], 4
          %s353 = int_to_ptr.vmem [resolvable:$true] %s352
          %358 = dma.hbm_to_vmem [thread:$0]  %s3, 256, %s353, [#allocation9], 64, 64, 4
        $region20: #{decoder.6} parent=11 // pred_fallthru
          _
        // Predicated region
        $region21: #{decoder.6} parent=11 // pred_check
          %p359 = pneg %p164
        $region22: #{decoder.6} parent=11 // pred_check_branch
          %361 = sbr.rel (%p359) target = $region24
        $region23: #{decoder.6} parent=11 // pred_region
          %s363 = ssub.s32 16, 16
          %364 = vsyncadd [#allocation9], %s363
          %s366 = sshll.u32 [#allocation10], 4
          %s367 = int_to_ptr.vmem [resolvable:$true] %s366
          %369 = dma.hbm_to_vmem [thread:$0]  %s4, 16, %s367, [#allocation9]
        $region24: #{decoder.6} parent=11 // pred_fallthru
          _
        // Predicated region
        $region25: #{decoder.6} parent=11 // pred_check
          %p370 = pneg %p185
        $region26: #{decoder.6} parent=11 // pred_check_branch
          %372 = sbr.rel (%p370) target = $region28
        $region27: #{decoder.6} parent=11 // pred_region
          %s374 = ssub.s32 256, 256
          %375 = vsyncadd [#allocation12], %s374
          %s376 = sshll.u32 [#allocation11], 4
          %s377 = int_to_ptr.vmem [resolvable:$true] %s376
          %382 = dma.hbm_to_vmem [thread:$0]  %s5, 256, %s377, [#allocation12], 64, 64, 4
        $region28: #{decoder.6} parent=11 // pred_fallthru
          _
        // Predicated region
        $region29: #{decoder.6} parent=11 // pred_check
          %p383 = pneg %p206
        $region30: #{decoder.6} parent=11 // pred_check_branch
          %385 = sbr.rel (%p383) target = $region32
        $region31: #{decoder.6} parent=11 // pred_region
          %s387 = ssub.s32 16, 16
          %388 = vsyncadd [#allocation12], %s387
          %s390 = sshll.u32 [#allocation13], 4
          %s391 = int_to_ptr.vmem [resolvable:$true] %s390
          %393 = dma.hbm_to_vmem [thread:$0]  %s6, 16, %s391, [#allocation12]
        $region32: #{decoder.6} parent=11 // pred_fallthru
          _
        // Predicated region
        $region33: #{decoder.6} parent=11 // pred_check
          %p394 = pneg %p227
        $region34: #{decoder.6} parent=11 // pred_check_branch
          %396 = sbr.rel (%p394) target = $region36
        $region35: #{decoder.6} parent=11 // pred_region
          %s398 = ssub.s32 256, 256
          %399 = vsyncadd [#allocation15], %s398
          %s400 = sshll.u32 [#allocation14], 4
          %s401 = int_to_ptr.vmem [resolvable:$true] %s400
          %406 = dma.hbm_to_vmem [thread:$0]  %s7, 256, %s401, [#allocation15], 64, 64, 4
        $region36: #{decoder.6} parent=11 // pred_fallthru
          _
        // Predicated region
        $region37: #{decoder.6} parent=11 // pred_check
          %p407 = pneg %p248
        $region38: #{decoder.6} parent=11 // pred_check_branch
          %409 = sbr.rel (%p407) target = $region40
        $region39: #{decoder.6} parent=11 // pred_region
          %s411 = ssub.s32 16, 16
          %412 = vsyncadd [#allocation15], %s411
          %s414 = sshll.u32 [#allocation16], 4
          %s415 = int_to_ptr.vmem [resolvable:$true] %s414
          %417 = dma.hbm_to_vmem [thread:$0]  %s8, 16, %s415, [#allocation15]
        $region40: #{decoder.6} parent=11 // pred_fallthru
          _
        // Predicated region
        $region41: #{decoder.6} parent=11 // pred_check
          %p418 = pneg %p269
        $region42: #{decoder.6} parent=11 // pred_check_branch
          %420 = sbr.rel (%p418) target = $region44
        $region43: #{decoder.6} parent=11 // pred_region
          %s422 = ssub.s32 16, 16
          %423 = vsyncadd [#allocation18], %s422
          %s425 = sshll.u32 [#allocation17], 4
          %s426 = int_to_ptr.vmem [resolvable:$true] %s425
          %428 = dma.hbm_to_vmem [thread:$0]  %s9, 16, %s426, [#allocation18]
        $region44: #{decoder.6} parent=11 // pred_fallthru
          _
        // Predicated region
        $region45: #{decoder.6} parent=11 // pred_check
          %p429 = pneg %p290
        $region46: #{decoder.6} parent=11 // pred_check_branch
          %431 = sbr.rel (%p429) target = $region48
        $region47: #{decoder.6} parent=11 // pred_region
          %s433 = ssub.s32 16, 16
          %434 = vsyncadd [#allocation18], %s433
          %s436 = sshll.u32 [#allocation19], 4
          %s437 = int_to_ptr.vmem [resolvable:$true] %s436
          %439 = dma.hbm_to_vmem [thread:$0]  %s10, 16, %s437, [#allocation18]
        $region48: #{decoder.6} parent=11 // pred_fallthru
          _
      $region12: #{decoder.6} parent=5 // pred_fallthru
        _
      %p440 = scmp.lt.s32.totalorder %s30, 2
      // Predicated region
      $region49: #{decoder.6} parent=5 // pred_check
        %p441 = pneg %p440
      $region50: #{decoder.6} parent=5 // pred_check_branch
        %443 = sbr.rel (%p441) target = $region52
      $region51: #{decoder.6} parent=5 // pred_region
        // Predicated region
        $region53: #{decoder.6} parent=51 // pred_check
          %p444 = pneg %p64
        $region54: #{decoder.6} parent=51 // pred_check_branch
          %446 = sbr.rel (%p444) target = $region56
        $region55: #{decoder.6} parent=51 // pred_region
          %s447 = sand.u32 %s54, 1
          %s448 = scalar_lea.sflag [#allocation3], %s447
          %s449 = sand.u32 %s54, 1
          %s450 = smul.addr %s449, 8
          %s451 = scalar_lea.vmem [#allocation2], %s450
          %s453 = ssub.s32 128, 128
          %454 = vsyncadd %s448, %s453
          %s455 = sadd.s32 %s38, %s37
          %s456 = smul.addr %s455, 128
          %s457 = scalar_lea.hbm %s0, %s456
          %s459 = sshll.u32 %s451, 4
          %s460 = int_to_ptr.vmem [resolvable:$true] %s459
          %462 = dma.hbm_to_vmem [thread:$0]  %s457, 128, %s460, %s448
        $region56: #{decoder.6} parent=51 // pred_fallthru
          _
        // Predicated region
        $region57: #{decoder.6} parent=51 // pred_check
          %p463 = pneg %p90
        $region58: #{decoder.6} parent=51 // pred_check_branch
          %465 = sbr.rel (%p463) target = $region60
        $region59: #{decoder.6} parent=51 // pred_region
          %s466 = sand.u32 %s30, 1
          %s467 = scalar_lea.sflag [#allocation6], %s466
          %s468 = sand.u32 %s80, 1
          %s469 = smul.addr %s468, 8
          %s470 = scalar_lea.vmem [#allocation5], %s469
          %s472 = ssub.s32 128, 128
          %473 = vsyncadd %s467, %s472
          %s474 = smul.addr %s37, 128
          %s475 = scalar_lea.hbm %s1, %s474
          %s477 = sshll.u32 %s470, 4
          %s478 = int_to_ptr.vmem [resolvable:$true] %s477
          %480 = dma.hbm_to_vmem [thread:$0]  %s475, 128, %s478, %s467
        $region60: #{decoder.6} parent=51 // pred_fallthru
          _
      $region52: #{decoder.6} parent=5 // pred_fallthru
        _
      %p481 = scmp.le.s32.totalorder 1, %s30
      %p482 = scmp.lt.s32.totalorder %s30, 3
      %p483 = pnand %p481, %p482
      %p484 = pneg %p483
      // Predicated region
      $region61: #{decoder.6} parent=5 // pred_check
        _
      $region62: #{decoder.6} parent=5 // pred_check_branch
        %486 = sbr.rel (%p483) target = $region64
      $region63: #{decoder.6} parent=5 // pred_region
        %s487 = ssub.s32 %s30, 1
        %s488 = sand.u32 %s57, 1
        %s489 = scalar_lea.sflag [#allocation3], %s488
        %s490 = sand.u32 %s57, 1
        %s491 = smul.addr %s490, 8
        %s492 = scalar_lea.vmem [#allocation2], %s491
        // Predicated region
        $region65: #{decoder.6} parent=63 // pred_check
          %p493 = pneg %p70
        $region66: #{decoder.6} parent=63 // pred_check_branch
          %495 = sbr.rel (%p493) target = $region68
        $region67: #{decoder.6} parent=63 // pred_region
          %496 = dma.done %s489, 128
        $region68: #{decoder.6} parent=63 // pred_fallthru
          _
        %s497 = sand.u32 %s35, 1
        %s498 = scalar_lea.sflag [#allocation6], %s497
        %s499 = sand.u32 %s83, 1
        %s500 = smul.addr %s499, 8
        %s501 = scalar_lea.vmem [#allocation5], %s500
        // Predicated region
        $region69: #{decoder.6} parent=63 // pred_check
          %p502 = pneg %p96
        $region70: #{decoder.6} parent=63 // pred_check_branch
          %504 = sbr.rel (%p502) target = $region72
        $region71: #{decoder.6} parent=63 // pred_region
          %505 = dma.done %s498, 128
        $region72: #{decoder.6} parent=63 // pred_fallthru
          _
        // Predicated region
        $region73: #{decoder.6} parent=63 // pred_check
          %p506 = pneg %p122
        $region74: #{decoder.6} parent=63 // pred_check_branch
          %508 = sbr.rel (%p506) target = $region76
        $region75: #{decoder.6} parent=63 // pred_region
          %509 = dma.done [#allocation6], 128
        $region76: #{decoder.6} parent=63 // pred_fallthru
          _
        // Predicated region
        $region77: #{decoder.6} parent=63 // pred_check
          %p510 = pneg %p143
        $region78: #{decoder.6} parent=63 // pred_check_branch
          %512 = sbr.rel (%p510) target = $region80
        $region79: #{decoder.6} parent=63 // pred_region
          %513 = dma.done [#allocation9], 256
        $region80: #{decoder.6} parent=63 // pred_fallthru
          _
        // Predicated region
        $region81: #{decoder.6} parent=63 // pred_check
          %p514 = pneg %p164
        $region82: #{decoder.6} parent=63 // pred_check_branch
          %516 = sbr.rel (%p514) target = $region84
        $region83: #{decoder.6} parent=63 // pred_region
          %517 = dma.done [#allocation9], 16
        $region84: #{decoder.6} parent=63 // pred_fallthru
          _
        // Predicated region
        $region85: #{decoder.6} parent=63 // pred_check
          %p518 = pneg %p185
        $region86: #{decoder.6} parent=63 // pred_check_branch
          %520 = sbr.rel (%p518) target = $region88
        $region87: #{decoder.6} parent=63 // pred_region
          %521 = dma.done [#allocation12], 256
        $region88: #{decoder.6} parent=63 // pred_fallthru
          _
        // Predicated region
        $region89: #{decoder.6} parent=63 // pred_check
          %p522 = pneg %p206
        $region90: #{decoder.6} parent=63 // pred_check_branch
          %524 = sbr.rel (%p522) target = $region92
        $region91: #{decoder.6} parent=63 // pred_region
          %525 = dma.done [#allocation12], 16
        $region92: #{decoder.6} parent=63 // pred_fallthru
          _
        // Predicated region
        $region93: #{decoder.6} parent=63 // pred_check
          %p526 = pneg %p227
        $region94: #{decoder.6} parent=63 // pred_check_branch
          %528 = sbr.rel (%p526) target = $region96
        $region95: #{decoder.6} parent=63 // pred_region
          %529 = dma.done [#allocation15], 256
        $region96: #{decoder.6} parent=63 // pred_fallthru
          _
        // Predicated region
        $region97: #{decoder.6} parent=63 // pred_check
          %p530 = pneg %p248
        $region98: #{decoder.6} parent=63 // pred_check_branch
          %532 = sbr.rel (%p530) target = $region100
        $region99: #{decoder.6} parent=63 // pred_region
          %533 = dma.done [#allocation15], 16
        $region100: #{decoder.6} parent=63 // pred_fallthru
          _
        // Predicated region
        $region101: #{decoder.6} parent=63 // pred_check
          %p534 = pneg %p269
        $region102: #{decoder.6} parent=63 // pred_check_branch
          %536 = sbr.rel (%p534) target = $region104
        $region103: #{decoder.6} parent=63 // pred_region
          %537 = dma.done [#allocation18], 16
        $region104: #{decoder.6} parent=63 // pred_fallthru
          _
        // Predicated region
        $region105: #{decoder.6} parent=63 // pred_check
          %p538 = pneg %p290
        $region106: #{decoder.6} parent=63 // pred_check_branch
          %540 = sbr.rel (%p538) target = $region108
        $region107: #{decoder.6} parent=63 // pred_region
          %541 = dma.done [#allocation18], 16
        $region108: #{decoder.6} parent=63 // pred_fallthru
          _
        %s542 = sand.u32 %s57, 1
        %s543 = scalar_lea.sflag [#allocation3], %s542
        %s544 = sand.u32 %s57, 1
        %s545 = smul.addr %s544, 8
        %s546 = scalar_lea.vmem [#allocation2], %s545
        %p547 = pneg %p70
        %p548 = pneg %p67
        %s549 = sand.u32 %s35, 1
        %s550 = scalar_lea.sflag [#allocation6], %s549
        %s551 = sand.u32 %s83, 1
        %s552 = smul.addr %s551, 8
        %s553 = scalar_lea.vmem [#allocation5], %s552
        %p554 = pneg %p96
        %p555 = pneg %p93
        %p556 = pneg %p122
        %p557 = pneg %p119
        %p558 = pneg %p143
        %p559 = pneg %p140
        %p560 = pneg %p164
        %p561 = pneg %p161
        %p562 = pneg %p185
        %p563 = pneg %p182
        %p564 = pneg %p206
        %p565 = pneg %p203
        %p566 = pneg %p227
        %p567 = pneg %p224
        %p568 = pneg %p248
        %p569 = pneg %p245
        %p570 = pneg %p269
        %p571 = pneg %p266
        %p572 = pneg %p290
        %p573 = pneg %p287
        %p574 = pneg %p318
        %p575 = pneg %p315
        %s576 = sand.u32 %s305, 1
        %s577 = scalar_lea.sflag [#allocation4], %s576
        %s578 = sand.u32 %s305, 1
        %s579 = smul.addr %s578, 8
        %s580 = scalar_lea.vmem [#allocation20], %s579
        %v582 = vld [vmem:[%s492] sm:$0xff]
        %v583 = vld [vmem:[%s501] sm:$0xff]
        %v584 = vpack.c.bf16 %v582, %v582
        %v585 = vld [vmem:[#allocation8] sm:$0xf]
        %v586 = vld [vmem:[#allocation8 + $0x4] sm:$0xf]
        %v587 = vld [vmem:[#allocation8 + $0x8] sm:$0xf]
        %v588 = vld [vmem:[#allocation8 + $0xc] sm:$0xf]
        %v589 = vld [vmem:[#allocation10] sm:$0x1]
        %v591 = vlaneseq
        %v592 = vshrl.u32 %v591, 7
        %v593 = vsub.s32 0, %v592
        %v594 = vrot.slane %v589, %v593
        %v600 = vunpack.c.l.b16 %v585
        %v601 = vunpack.c.l.b16 %v586
        %v602 = vunpack.c.l.b16 %v587
        %v603 = vunpack.c.l.b16 %v588
        %v604 = vpack.c.b16 %v601, %v600
        %v605 = vpack.c.b16 %v603, %v602
        %vm608 = vcmask 261120
        %v610 = vsel %vm608, %v584, 0
        %612 = vmatprep.subr.bf16.mxu0 0
        %613 = vmatpush1.bf16.msra.mxu0 %v604
        %614 = vmatprep.subr.bf16.mxu0 0
        %615 = vmatpush1.bf16.msra.mxu0 %v605
        %616 = vmatprep.subr.bf16.mxu0 0
        %617 = vmatpush1.bf16.msra.mxu0 0
        %618 = vmatprep.subr.bf16.mxu0 0
        %619 = vmatpush1.bf16.msra.mxu0 0
        %620 = vmatprep.subr.bf16.mxu0 0
        %621 = vmatpush1.bf16.msra.mxu0 0
        %622 = vmatprep.subr.bf16.mxu0 0
        %623 = vmatpush1.bf16.msra.mxu0 0
        %624 = vmatprep.subr.bf16.mxu0 0
        %625 = vmatpush1.bf16.msra.mxu0 0
        %626 = vmatprep.subr.bf16.mxu0 0
        %627 = vmatpush1.bf16.msra.mxu0 0
        %628 = vmatprep.subr.bf16.mxu0 0
        %629 = vmatpush1.bf16.msra.mxu0 0
        %630 = vmatprep.subr.bf16.mxu0 0
        %631 = vmatpush1.bf16.msra.mxu0 0
        %632 = vmatprep.subr.bf16.mxu0 0
        %633 = vmatpush1.bf16.msra.mxu0 0
        %634 = vmatprep.subr.bf16.mxu0 0
        %635 = vmatpush1.bf16.msra.mxu0 0
        %636 = vmatprep.subr.bf16.mxu0 0
        %637 = vmatpush1.bf16.msra.mxu0 0
        %638 = vmatprep.subr.bf16.mxu0 0
        %639 = vmatpush1.bf16.msra.mxu0 0
        %640 = vmatprep.subr.bf16.mxu0 0
        %641 = vmatpush1.bf16.msra.mxu0 0
        %642 = vmatprep.subr.bf16.mxu0 0
        %643 = vmatpush1.bf16.msra.mxu0 0
        %644 = vmatprep.mubr.bf16.mxu0 0
        %645 = vmatmul.mubr.bf16.gmra.mrb[0].mxu0 %v610
        %v646 = vpop.f32.mrb[0].mxu0
        %v647 = vadd.f32 %v594, %v646
        %v648 = vpop.f32.mrb[0].mxu0
        %v649 = vpop.f32.mrb[0].mxu0
        %v650 = vpop.f32.mrb[0].mxu0
        %651 = vdwg.mxu0
        %v652 = vpack.c.bf16 %v583, %v583
        %v653 = vld [vmem:[#allocation11] sm:$0xf]
        %v654 = vld [vmem:[#allocation11 + $0x4] sm:$0xf]
        %v655 = vld [vmem:[#allocation11 + $0x8] sm:$0xf]
        %v656 = vld [vmem:[#allocation11 + $0xc] sm:$0xf]
        %v657 = vld [vmem:[#allocation13] sm:$0x1]
        %v659 = vlaneseq
        %v660 = vshrl.u32 %v659, 7
        %v661 = vsub.s32 0, %v660
        %v662 = vrot.slane %v657, %v661
        %v668 = vunpack.c.l.b16 %v653
        %v669 = vunpack.c.l.b16 %v654
        %v670 = vunpack.c.l.b16 %v655
        %v671 = vunpack.c.l.b16 %v656
        %v672 = vpack.c.b16 %v669, %v668
        %v673 = vpack.c.b16 %v671, %v670
        %v677 = vsel %vm608, %v652, 0
        %679 = vmatprep.subr.bf16.mxu0 0
        %680 = vmatpush1.bf16.msra.mxu0 %v672
        %681 = vmatprep.subr.bf16.mxu0 0
        %682 = vmatpush1.bf16.msra.mxu0 %v673
        %683 = vmatprep.subr.bf16.mxu0 0
        %684 = vmatpush1.bf16.msra.mxu0 0
        %685 = vmatprep.subr.bf16.mxu0 0
        %686 = vmatpush1.bf16.msra.mxu0 0
        %687 = vmatprep.subr.bf16.mxu0 0
        %688 = vmatpush1.bf16.msra.mxu0 0
        %689 = vmatprep.subr.bf16.mxu0 0
        %690 = vmatpush1.bf16.msra.mxu0 0
        %691 = vmatprep.subr.bf16.mxu0 0
        %692 = vmatpush1.bf16.msra.mxu0 0
        %693 = vmatprep.subr.bf16.mxu0 0
        %694 = vmatpush1.bf16.msra.mxu0 0
        %695 = vmatprep.subr.bf16.mxu0 0
        %696 = vmatpush1.bf16.msra.mxu0 0
        %697 = vmatprep.subr.bf16.mxu0 0
        %698 = vmatpush1.bf16.msra.mxu0 0
        %699 = vmatprep.subr.bf16.mxu0 0
        %700 = vmatpush1.bf16.msra.mxu0 0
        %701 = vmatprep.subr.bf16.mxu0 0
        %702 = vmatpush1.bf16.msra.mxu0 0
        %703 = vmatprep.subr.bf16.mxu0 0
        %704 = vmatpush1.bf16.msra.mxu0 0
        %705 = vmatprep.subr.bf16.mxu0 0
        %706 = vmatpush1.bf16.msra.mxu0 0
        %707 = vmatprep.subr.bf16.mxu0 0
        %708 = vmatpush1.bf16.msra.mxu0 0
        %709 = vmatprep.subr.bf16.mxu0 0
        %710 = vmatpush1.bf16.msra.mxu0 0
        %711 = vmatprep.mubr.bf16.mxu0 0
        %712 = vmatmul.mubr.bf16.gmra.mrb[0].mxu0 %v677
        %v713 = vpop.f32.mrb[0].mxu0
        %v714 = vadd.f32 %v662, %v713
        %v715 = vpop.f32.mrb[0].mxu0
        %v716 = vpop.f32.mrb[0].mxu0
        %v717 = vpop.f32.mrb[0].mxu0
        %718 = vdwg.mxu0
        %v719 = vld [vmem:[#allocation7] sm:$0xff]
        %v720 = vmul.f32 %v647, 0.35355338
        %v721 = vpack.c.bf16 %v720, %v720
        %723 = vrot.lane.b32.xlu0 %v721, 120
        %v724 = vpop.permute.xlu0 %723
        %725 = vrot.lane.b32.xlu0 %v721, 112
        %v726 = vpop.permute.xlu0 %725
        %727 = vrot.lane.b32.xlu0 %v721, 104
        %v728 = vpop.permute.xlu0 %727
        %v730 = vunpack.c.l.s4 1983009808
        %v731 = vunpack.c.0.s8 %v730
        %v732 = vlaneseq
        %v733 = vshrl.u32 %v732, 7
        %v734 = vsub.s32 %v731, %v733
        %v735 = vrot.slane %v721, %v734
        %v738 = vunpack.c.l.s4 1983009808
        %v739 = vunpack.c.0.s8 %v738
        %v740 = vlaneseq
        %v741 = vshrl.u32 %v740, 7
        %v742 = vsub.s32 %v739, %v741
        %v743 = vrot.slane %v726, %v742
        %v744 = vcombine.low %v735, %v743
        %v745 = vcombine.high %v735, %v743
        %v747 = vunpack.c.l.s4 1934713408
        %v748 = vunpack.c.0.s8 %v747
        %v749 = vlaneseq
        %v750 = vshrl.u32 %v749, 7
        %v751 = vsub.s32 %v748, %v750
        %v752 = vrot.slane %v744, %v751
        %v754 = vunpack.c.l.s4 1934713408
        %v755 = vunpack.c.0.s8 %v754
        %v756 = vlaneseq
        %v757 = vshrl.u32 %v756, 7
        %v758 = vsub.s32 %v755, %v757
        %v759 = vrot.slane %v745, %v758
        %v760 = vcombine.high %v752, 0
        %v761 = vcombine.high %v759, 0
        %v764 = vunpack.c.l.s4 1983009808
        %v765 = vunpack.c.0.s8 %v764
        %v766 = vlaneseq
        %v767 = vshrl.u32 %v766, 7
        %v768 = vsub.s32 %v765, %v767
        %v769 = vrot.slane %v724, %v768
        %v772 = vunpack.c.l.s4 1983009808
        %v773 = vunpack.c.0.s8 %v772
        %v774 = vlaneseq
        %v775 = vshrl.u32 %v774, 7
        %v776 = vsub.s32 %v773, %v775
        %v777 = vrot.slane %v728, %v776
        %v778 = vcombine.low %v769, %v777
        %v779 = vcombine.high %v769, %v777
        %v781 = vunpack.c.l.s4 1934713408
        %v782 = vunpack.c.0.s8 %v781
        %v783 = vlaneseq
        %v784 = vshrl.u32 %v783, 7
        %v785 = vsub.s32 %v782, %v784
        %v786 = vrot.slane %v778, %v785
        %v788 = vunpack.c.l.s4 1934713408
        %v789 = vunpack.c.0.s8 %v788
        %v790 = vlaneseq
        %v791 = vshrl.u32 %v790, 7
        %v792 = vsub.s32 %v789, %v791
        %v793 = vrot.slane %v779, %v792
        %v794 = vcombine.high %v786, 0
        %v795 = vcombine.high %v793, 0
        %v798 = vpack.i.b16 %v786, %v752
        %v800 = vshrl.u32 %v752, 16
        %v801 = vshrl.u32 %v786, 16
        %v802 = vpack.i.b16 %v801, %v800
        %v806 = vpack.i.b16 %v794, %v760
        %v808 = vshrl.u32 %v760, 16
        %v809 = vshrl.u32 %v794, 16
        %v810 = vpack.i.b16 %v809, %v808
        %v814 = vpack.i.b16 %v793, %v759
        %v816 = vshrl.u32 %v759, 16
        %v817 = vshrl.u32 %v793, 16
        %v818 = vpack.i.b16 %v817, %v816
        %v822 = vpack.i.b16 %v795, %v761
        %v824 = vshrl.u32 %v761, 16
        %v825 = vshrl.u32 %v795, 16
        %v826 = vpack.i.b16 %v825, %v824
        %v828 = vcombine.low %v798, %v814
        %v830 = vunpack.c.l.s4 1983009808
        %v831 = vunpack.c.0.s8 %v830
        %v832 = vlaneseq
        %v833 = vshrl.u32 %v832, 7
        %v834 = vsub.s32 %v831, %v833
        %v835 = vrot.slane %v828, %v834
        %v836 = vcombine.low %v806, %v822
        %v838 = vunpack.c.l.s4 1983009808
        %v839 = vunpack.c.0.s8 %v838
        %v840 = vlaneseq
        %v841 = vshrl.u32 %v840, 7
        %v842 = vsub.s32 %v839, %v841
        %v843 = vrot.slane %v836, %v842
        %v844 = vcombine.low %v835, %v843
        %v846 = vunpack.c.l.s4 1934713408
        %v847 = vunpack.c.0.s8 %v846
        %v848 = vlaneseq
        %v849 = vshrl.u32 %v848, 7
        %v850 = vsub.s32 %v847, %v849
        %v851 = vrot.slane %v844, %v850
        %v852 = vcombine.high %v851, 0
        %v853 = vcombine.low %v802, %v818
        %v855 = vunpack.c.l.s4 1983009808
        %v856 = vunpack.c.0.s8 %v855
        %v857 = vlaneseq
        %v858 = vshrl.u32 %v857, 7
        %v859 = vsub.s32 %v856, %v858
        %v860 = vrot.slane %v853, %v859
        %v861 = vcombine.low %v810, %v826
        %v863 = vunpack.c.l.s4 1983009808
        %v864 = vunpack.c.0.s8 %v863
        %v865 = vlaneseq
        %v866 = vshrl.u32 %v865, 7
        %v867 = vsub.s32 %v864, %v866
        %v868 = vrot.slane %v861, %v867
        %v869 = vcombine.low %v860, %v868
        %v871 = vunpack.c.l.s4 1934713408
        %v872 = vunpack.c.0.s8 %v871
        %v873 = vlaneseq
        %v874 = vshrl.u32 %v873, 7
        %v875 = vsub.s32 %v872, %v874
        %v876 = vrot.slane %v869, %v875
        %v877 = vcombine.high %v876, 0
        %v880 = vpack.i.b16 %v876, %v851
        %v881 = vshrl.u32 %v851, 16
        %v882 = vshrl.u32 %v876, 16
        %v883 = vpack.i.b16 %v882, %v881
        %v886 = vpack.i.b16 %v877, %v852
        %v887 = vshrl.u32 %v852, 16
        %v888 = vshrl.u32 %v877, 16
        %v889 = vpack.i.b16 %v888, %v887
        %v890 = vpack.c.bf16 %v714, %v714
        %892 = vrot.lane.b32.xlu0 %v890, 120
        %v893 = vpop.permute.xlu0 %892
        %894 = vrot.lane.b32.xlu0 %v890, 112
        %v895 = vpop.permute.xlu0 %894
        %896 = vrot.lane.b32.xlu0 %v890, 104
        %v897 = vpop.permute.xlu0 %896
        %v899 = vunpack.c.l.s4 1983009808
        %v900 = vunpack.c.0.s8 %v899
        %v901 = vlaneseq
        %v902 = vshrl.u32 %v901, 7
        %v903 = vsub.s32 %v900, %v902
        %v904 = vrot.slane %v890, %v903
        %v907 = vunpack.c.l.s4 1983009808
        %v908 = vunpack.c.0.s8 %v907
        %v909 = vlaneseq
        %v910 = vshrl.u32 %v909, 7
        %v911 = vsub.s32 %v908, %v910
        %v912 = vrot.slane %v895, %v911
        %v913 = vcombine.low %v904, %v912
        %v914 = vcombine.high %v904, %v912
        %v916 = vunpack.c.l.s4 1934713408
        %v917 = vunpack.c.0.s8 %v916
        %v918 = vlaneseq
        %v919 = vshrl.u32 %v918, 7
        %v920 = vsub.s32 %v917, %v919
        %v921 = vrot.slane %v913, %v920
        %v923 = vunpack.c.l.s4 1934713408
        %v924 = vunpack.c.0.s8 %v923
        %v925 = vlaneseq
        %v926 = vshrl.u32 %v925, 7
        %v927 = vsub.s32 %v924, %v926
        %v928 = vrot.slane %v914, %v927
        %v929 = vcombine.high %v921, 0
        %v930 = vcombine.high %v928, 0
        %v933 = vunpack.c.l.s4 1983009808
        %v934 = vunpack.c.0.s8 %v933
        %v935 = vlaneseq
        %v936 = vshrl.u32 %v935, 7
        %v937 = vsub.s32 %v934, %v936
        %v938 = vrot.slane %v893, %v937
        %v941 = vunpack.c.l.s4 1983009808
        %v942 = vunpack.c.0.s8 %v941
        %v943 = vlaneseq
        %v944 = vshrl.u32 %v943, 7
        %v945 = vsub.s32 %v942, %v944
        %v946 = vrot.slane %v897, %v945
        %v947 = vcombine.low %v938, %v946
        %v948 = vcombine.high %v938, %v946
        %v950 = vunpack.c.l.s4 1934713408
        %v951 = vunpack.c.0.s8 %v950
        %v952 = vlaneseq
        %v953 = vshrl.u32 %v952, 7
        %v954 = vsub.s32 %v951, %v953
        %v955 = vrot.slane %v947, %v954
        %v957 = vunpack.c.l.s4 1934713408
        %v958 = vunpack.c.0.s8 %v957
        %v959 = vlaneseq
        %v960 = vshrl.u32 %v959, 7
        %v961 = vsub.s32 %v958, %v960
        %v962 = vrot.slane %v948, %v961
        %v963 = vcombine.high %v955, 0
        %v964 = vcombine.high %v962, 0
        %v967 = vpack.i.b16 %v955, %v921
        %v969 = vshrl.u32 %v921, 16
        %v970 = vshrl.u32 %v955, 16
        %v971 = vpack.i.b16 %v970, %v969
        %v975 = vpack.i.b16 %v963, %v929
        %v977 = vshrl.u32 %v929, 16
        %v978 = vshrl.u32 %v963, 16
        %v979 = vpack.i.b16 %v978, %v977
        %v983 = vpack.i.b16 %v962, %v928
        %v985 = vshrl.u32 %v928, 16
        %v986 = vshrl.u32 %v962, 16
        %v987 = vpack.i.b16 %v986, %v985
        %v991 = vpack.i.b16 %v964, %v930
        %v993 = vshrl.u32 %v930, 16
        %v994 = vshrl.u32 %v964, 16
        %v995 = vpack.i.b16 %v994, %v993
        %v997 = vcombine.low %v967, %v983
        %v999 = vunpack.c.l.s4 1983009808
        %v1000 = vunpack.c.0.s8 %v999
        %v1001 = vlaneseq
        %v1002 = vshrl.u32 %v1001, 7
        %v1003 = vsub.s32 %v1000, %v1002
        %v1004 = vrot.slane %v997, %v1003
        %v1005 = vcombine.low %v975, %v991
        %v1007 = vunpack.c.l.s4 1983009808
        %v1008 = vunpack.c.0.s8 %v1007
        %v1009 = vlaneseq
        %v1010 = vshrl.u32 %v1009, 7
        %v1011 = vsub.s32 %v1008, %v1010
        %v1012 = vrot.slane %v1005, %v1011
        %v1013 = vcombine.low %v1004, %v1012
        %v1015 = vunpack.c.l.s4 1934713408
        %v1016 = vunpack.c.0.s8 %v1015
        %v1017 = vlaneseq
        %v1018 = vshrl.u32 %v1017, 7
        %v1019 = vsub.s32 %v1016, %v1018
        %v1020 = vrot.slane %v1013, %v1019
        %v1021 = vcombine.high %v1020, 0
        %v1022 = vcombine.low %v971, %v987
        %v1024 = vunpack.c.l.s4 1983009808
        %v1025 = vunpack.c.0.s8 %v1024
        %v1026 = vlaneseq
        %v1027 = vshrl.u32 %v1026, 7
        %v1028 = vsub.s32 %v1025, %v1027
        %v1029 = vrot.slane %v1022, %v1028
        %v1030 = vcombine.low %v979, %v995
        %v1032 = vunpack.c.l.s4 1983009808
        %v1033 = vunpack.c.0.s8 %v1032
        %v1034 = vlaneseq
        %v1035 = vshrl.u32 %v1034, 7
        %v1036 = vsub.s32 %v1033, %v1035
        %v1037 = vrot.slane %v1030, %v1036
        %v1038 = vcombine.low %v1029, %v1037
        %v1040 = vunpack.c.l.s4 1934713408
        %v1041 = vunpack.c.0.s8 %v1040
        %v1042 = vlaneseq
        %v1043 = vshrl.u32 %v1042, 7
        %v1044 = vsub.s32 %v1041, %v1043
        %v1045 = vrot.slane %v1038, %v1044
        %v1046 = vcombine.high %v1045, 0
        %v1049 = vpack.i.b16 %v1045, %v1020
        %v1050 = vshrl.u32 %v1020, 16
        %v1051 = vshrl.u32 %v1045, 16
        %v1052 = vpack.i.b16 %v1051, %v1050
        %v1055 = vpack.i.b16 %v1046, %v1021
        %v1056 = vshrl.u32 %v1021, 16
        %v1057 = vshrl.u32 %v1046, 16
        %v1058 = vpack.i.b16 %v1057, %v1056
        %1059 = vrot.lane.b32.xlu0 %v890, 96
        %v1060 = vpop.permute.xlu0 %1059
        %1061 = vrot.lane.b32.xlu0 %v893, 96
        %v1062 = vpop.permute.xlu0 %1061
        %1063 = vrot.lane.b32.xlu0 %v895, 96
        %v1064 = vpop.permute.xlu0 %1063
        %1065 = vrot.lane.b32.xlu0 %v897, 96
        %v1066 = vpop.permute.xlu0 %1065
        %v1069 = vunpack.c.l.s4 1983009808
        %v1070 = vunpack.c.0.s8 %v1069
        %v1071 = vlaneseq
        %v1072 = vshrl.u32 %v1071, 7
        %v1073 = vsub.s32 %v1070, %v1072
        %v1074 = vrot.slane %v1060, %v1073
        %v1077 = vunpack.c.l.s4 1983009808
        %v1078 = vunpack.c.0.s8 %v1077
        %v1079 = vlaneseq
        %v1080 = vshrl.u32 %v1079, 7
        %v1081 = vsub.s32 %v1078, %v1080
        %v1082 = vrot.slane %v1064, %v1081
        %v1083 = vcombine.low %v1074, %v1082
        %v1084 = vcombine.high %v1074, %v1082
        %v1086 = vunpack.c.l.s4 1934713408
        %v1087 = vunpack.c.0.s8 %v1086
        %v1088 = vlaneseq
        %v1089 = vshrl.u32 %v1088, 7
        %v1090 = vsub.s32 %v1087, %v1089
        %v1091 = vrot.slane %v1083, %v1090
        %v1093 = vunpack.c.l.s4 1934713408
        %v1094 = vunpack.c.0.s8 %v1093
        %v1095 = vlaneseq
        %v1096 = vshrl.u32 %v1095, 7
        %v1097 = vsub.s32 %v1094, %v1096
        %v1098 = vrot.slane %v1084, %v1097
        %v1099 = vcombine.high %v1091, 0
        %v1100 = vcombine.high %v1098, 0
        %v1103 = vunpack.c.l.s4 1983009808
        %v1104 = vunpack.c.0.s8 %v1103
        %v1105 = vlaneseq
        %v1106 = vshrl.u32 %v1105, 7
        %v1107 = vsub.s32 %v1104, %v1106
        %v1108 = vrot.slane %v1062, %v1107
        %v1111 = vunpack.c.l.s4 1983009808
        %v1112 = vunpack.c.0.s8 %v1111
        %v1113 = vlaneseq
        %v1114 = vshrl.u32 %v1113, 7
        %v1115 = vsub.s32 %v1112, %v1114
        %v1116 = vrot.slane %v1066, %v1115
        %v1117 = vcombine.low %v1108, %v1116
        %v1118 = vcombine.high %v1108, %v1116
        %v1120 = vunpack.c.l.s4 1934713408
        %v1121 = vunpack.c.0.s8 %v1120
        %v1122 = vlaneseq
        %v1123 = vshrl.u32 %v1122, 7
        %v1124 = vsub.s32 %v1121, %v1123
        %v1125 = vrot.slane %v1117, %v1124
        %v1127 = vunpack.c.l.s4 1934713408
        %v1128 = vunpack.c.0.s8 %v1127
        %v1129 = vlaneseq
        %v1130 = vshrl.u32 %v1129, 7
        %v1131 = vsub.s32 %v1128, %v1130
        %v1132 = vrot.slane %v1118, %v1131
        %v1133 = vcombine.high %v1125, 0
        %v1134 = vcombine.high %v1132, 0
        %v1137 = vpack.i.b16 %v1125, %v1091
        %v1139 = vshrl.u32 %v1091, 16
        %v1140 = vshrl.u32 %v1125, 16
        %v1141 = vpack.i.b16 %v1140, %v1139
        %v1145 = vpack.i.b16 %v1133, %v1099
        %v1147 = vshrl.u32 %v1099, 16
        %v1148 = vshrl.u32 %v1133, 16
        %v1149 = vpack.i.b16 %v1148, %v1147
        %v1153 = vpack.i.b16 %v1132, %v1098
        %v1155 = vshrl.u32 %v1098, 16
        %v1156 = vshrl.u32 %v1132, 16
        %v1157 = vpack.i.b16 %v1156, %v1155
        %v1161 = vpack.i.b16 %v1134, %v1100
        %v1163 = vshrl.u32 %v1100, 16
        %v1164 = vshrl.u32 %v1134, 16
        %v1165 = vpack.i.b16 %v1164, %v1163
        %v1167 = vcombine.low %v1137, %v1153
        %v1169 = vunpack.c.l.s4 1983009808
        %v1170 = vunpack.c.0.s8 %v1169
        %v1171 = vlaneseq
        %v1172 = vshrl.u32 %v1171, 7
        %v1173 = vsub.s32 %v1170, %v1172
        %v1174 = vrot.slane %v1167, %v1173
        %v1175 = vcombine.low %v1145, %v1161
        %v1177 = vunpack.c.l.s4 1983009808
        %v1178 = vunpack.c.0.s8 %v1177
        %v1179 = vlaneseq
        %v1180 = vshrl.u32 %v1179, 7
        %v1181 = vsub.s32 %v1178, %v1180
        %v1182 = vrot.slane %v1175, %v1181
        %v1183 = vcombine.low %v1174, %v1182
        %v1185 = vunpack.c.l.s4 1934713408
        %v1186 = vunpack.c.0.s8 %v1185
        %v1187 = vlaneseq
        %v1188 = vshrl.u32 %v1187, 7
        %v1189 = vsub.s32 %v1186, %v1188
        %v1190 = vrot.slane %v1183, %v1189
        %v1191 = vcombine.high %v1190, 0
        %v1192 = vcombine.low %v1141, %v1157
        %v1194 = vunpack.c.l.s4 1983009808
        %v1195 = vunpack.c.0.s8 %v1194
        %v1196 = vlaneseq
        %v1197 = vshrl.u32 %v1196, 7
        %v1198 = vsub.s32 %v1195, %v1197
        %v1199 = vrot.slane %v1192, %v1198
        %v1200 = vcombine.low %v1149, %v1165
        %v1202 = vunpack.c.l.s4 1983009808
        %v1203 = vunpack.c.0.s8 %v1202
        %v1204 = vlaneseq
        %v1205 = vshrl.u32 %v1204, 7
        %v1206 = vsub.s32 %v1203, %v1205
        %v1207 = vrot.slane %v1200, %v1206
        %v1208 = vcombine.low %v1199, %v1207
        %v1210 = vunpack.c.l.s4 1934713408
        %v1211 = vunpack.c.0.s8 %v1210
        %v1212 = vlaneseq
        %v1213 = vshrl.u32 %v1212, 7
        %v1214 = vsub.s32 %v1211, %v1213
        %v1215 = vrot.slane %v1208, %v1214
        %v1216 = vcombine.high %v1215, 0
        %v1219 = vpack.i.b16 %v1215, %v1190
        %v1220 = vshrl.u32 %v1190, 16
        %v1221 = vshrl.u32 %v1215, 16
        %v1222 = vpack.i.b16 %v1221, %v1220
        %v1225 = vpack.i.b16 %v1216, %v1191
        %v1226 = vshrl.u32 %v1191, 16
        %v1227 = vshrl.u32 %v1216, 16
        %v1228 = vpack.i.b16 %v1227, %v1226
        %vm1229 = vcmask 64512
        %v1231 = vsel %vm1229, %v880, 0
        %v1234 = vsel %vm1229, %v1049, 0
        %1236 = vmatprep.subr.bf16.mxu0 0
        %1237 = vmatpush1.bf16.xpose.msra.mxu0 %v1234
        %1238 = vmatprep.subr.bf16.mxu0 0
        %1239 = vmatpush1.bf16.xpose.msra.mxu0 0
        %1240 = vmatprep.subr.bf16.mxu0 0
        %1241 = vmatpush1.bf16.xpose.msra.mxu0 0
        %1242 = vmatprep.subr.bf16.mxu0 0
        %1243 = vmatpush1.bf16.xpose.msra.mxu0 0
        %1244 = vmatprep.subr.bf16.mxu0 0
        %1245 = vmatpush1.bf16.xpose.msra.mxu0 0
        %1246 = vmatprep.subr.bf16.mxu0 0
        %1247 = vmatpush1.bf16.xpose.msra.mxu0 0
        %1248 = vmatprep.subr.bf16.mxu0 0
        %1249 = vmatpush1.bf16.xpose.msra.mxu0 0
        %1250 = vmatprep.subr.bf16.mxu0 0
        %1251 = vmatpush1.bf16.xpose.msra.mxu0 0
        %1252 = vmatprep.subr.bf16.mxu0 0
        %1253 = vmatpush1.bf16.xpose.msra.mxu0 0
        %1254 = vmatprep.subr.bf16.mxu0 0
        %1255 = vmatpush1.bf16.xpose.msra.mxu0 0
        %1256 = vmatprep.subr.bf16.mxu0 0
        %1257 = vmatpush1.bf16.xpose.msra.mxu0 0
        %1258 = vmatprep.subr.bf16.mxu0 0
        %1259 = vmatpush1.bf16.xpose.msra.mxu0 0
        %1260 = vmatprep.subr.bf16.mxu0 0
        %1261 = vmatpush1.bf16.xpose.msra.mxu0 0
        %1262 = vmatprep.subr.bf16.mxu0 0
        %1263 = vmatpush1.bf16.xpose.msra.mxu0 0
        %1264 = vmatprep.subr.bf16.mxu0 0
        %1265 = vmatpush1.bf16.xpose.msra.mxu0 0
        %1266 = vmatprep.subr.bf16.mxu0 0
        %1267 = vmatpush1.bf16.xpose.msra.mxu0 0
        %1268 = vmatprep.mubr.bf16.mxu0 0
        %1269 = vmatmul.mubr.bf16.gmra.mrb[0].mxu0 %v1231
        %v1270 = vpop.f32.mrb[0].mxu0
        %v1271 = vadd.f32 %v719, %v1270
        %v1272 = vpop.f32.mrb[0].mxu0
        %v1273 = vpop.f32.mrb[0].mxu0
        %v1274 = vpop.f32.mrb[0].mxu0
        %1275 = vdwg.mxu0
        %v1277 = vsel %vm1229, %v883, 0
        %v1280 = vsel %vm1229, %v1052, 0
        %1282 = vmatprep.subr.bf16.mxu0 0
        %1283 = vmatpush1.bf16.xpose.msra.mxu0 %v1280
        %1284 = vmatprep.subr.bf16.mxu0 0
        %1285 = vmatpush1.bf16.xpose.msra.mxu0 0
        %1286 = vmatprep.subr.bf16.mxu0 0
        %1287 = vmatpush1.bf16.xpose.msra.mxu0 0
        %1288 = vmatprep.subr.bf16.mxu0 0
        %1289 = vmatpush1.bf16.xpose.msra.mxu0 0
        %1290 = vmatprep.subr.bf16.mxu0 0
        %1291 = vmatpush1.bf16.xpose.msra.mxu0 0
        %1292 = vmatprep.subr.bf16.mxu0 0
        %1293 = vmatpush1.bf16.xpose.msra.mxu0 0
        %1294 = vmatprep.subr.bf16.mxu0 0
        %1295 = vmatpush1.bf16.xpose.msra.mxu0 0
        %1296 = vmatprep.subr.bf16.mxu0 0
        %1297 = vmatpush1.bf16.xpose.msra.mxu0 0
        %1298 = vmatprep.subr.bf16.mxu0 0
        %1299 = vmatpush1.bf16.xpose.msra.mxu0 0
        %1300 = vmatprep.subr.bf16.mxu0 0
        %1301 = vmatpush1.bf16.xpose.msra.mxu0 0
        %1302 = vmatprep.subr.bf16.mxu0 0
        %1303 = vmatpush1.bf16.xpose.msra.mxu0 0
        %1304 = vmatprep.subr.bf16.mxu0 0
        %1305 = vmatpush1.bf16.xpose.msra.mxu0 0
        %1306 = vmatprep.subr.bf16.mxu0 0
        %1307 = vmatpush1.bf16.xpose.msra.mxu0 0
        %1308 = vmatprep.subr.bf16.mxu0 0
        %1309 = vmatpush1.bf16.xpose.msra.mxu0 0
        %1310 = vmatprep.subr.bf16.mxu0 0
        %1311 = vmatpush1.bf16.xpose.msra.mxu0 0
        %1312 = vmatprep.subr.bf16.mxu0 0
        %1313 = vmatpush1.bf16.xpose.msra.mxu0 0
        %1314 = vmatprep.mubr.bf16.mxu0 0
        %1315 = vmatmul.mubr.bf16.gmra.mrb[0].mxu0 %v1277
        %v1316 = vpop.f32.mrb[0].mxu0
        %v1317 = vadd.f32 %v719, %v1316
        %v1318 = vpop.f32.mrb[0].mxu0
        %v1319 = vpop.f32.mrb[0].mxu0
        %v1320 = vpop.f32.mrb[0].mxu0
        %1321 = vdwg.mxu0
        %v1323 = vsel %vm1229, %v886, 0
        %v1326 = vsel %vm1229, %v1055, 0
        %1328 = vmatprep.subr.bf16.mxu0 0
        %1329 = vmatpush1.bf16.xpose.msra.mxu0 %v1326
        %1330 = vmatprep.subr.bf16.mxu0 0
        %1331 = vmatpush1.bf16.xpose.msra.mxu0 0
        %1332 = vmatprep.subr.bf16.mxu0 0
        %1333 = vmatpush1.bf16.xpose.msra.mxu0 0
        %1334 = vmatprep.subr.bf16.mxu0 0
        %1335 = vmatpush1.bf16.xpose.msra.mxu0 0
        %1336 = vmatprep.subr.bf16.mxu0 0
        %1337 = vmatpush1.bf16.xpose.msra.mxu0 0
        %1338 = vmatprep.subr.bf16.mxu0 0
        %1339 = vmatpush1.bf16.xpose.msra.mxu0 0
        %1340 = vmatprep.subr.bf16.mxu0 0
        %1341 = vmatpush1.bf16.xpose.msra.mxu0 0
        %1342 = vmatprep.subr.bf16.mxu0 0
        %1343 = vmatpush1.bf16.xpose.msra.mxu0 0
        %1344 = vmatprep.subr.bf16.mxu0 0
        %1345 = vmatpush1.bf16.xpose.msra.mxu0 0
        %1346 = vmatprep.subr.bf16.mxu0 0
        %1347 = vmatpush1.bf16.xpose.msra.mxu0 0
        %1348 = vmatprep.subr.bf16.mxu0 0
        %1349 = vmatpush1.bf16.xpose.msra.mxu0 0
        %1350 = vmatprep.subr.bf16.mxu0 0
        %1351 = vmatpush1.bf16.xpose.msra.mxu0 0
        %1352 = vmatprep.subr.bf16.mxu0 0
        %1353 = vmatpush1.bf16.xpose.msra.mxu0 0
        %1354 = vmatprep.subr.bf16.mxu0 0
        %1355 = vmatpush1.bf16.xpose.msra.mxu0 0
        %1356 = vmatprep.subr.bf16.mxu0 0
        %1357 = vmatpush1.bf16.xpose.msra.mxu0 0
        %1358 = vmatprep.subr.bf16.mxu0 0
        %1359 = vmatpush1.bf16.xpose.msra.mxu0 0
        %1360 = vmatprep.mubr.bf16.mxu0 0
        %1361 = vmatmul.mubr.bf16.gmra.mrb[0].mxu0 %v1323
        %v1362 = vpop.f32.mrb[0].mxu0
        %v1363 = vadd.f32 %v719, %v1362
        %v1364 = vpop.f32.mrb[0].mxu0
        %v1365 = vpop.f32.mrb[0].mxu0
        %v1366 = vpop.f32.mrb[0].mxu0
        %1367 = vdwg.mxu0
        %v1369 = vsel %vm1229, %v889, 0
        %v1372 = vsel %vm1229, %v1058, 0
        %1374 = vmatprep.subr.bf16.mxu0 0
        %1375 = vmatpush1.bf16.xpose.msra.mxu0 %v1372
        %1376 = vmatprep.subr.bf16.mxu0 0
        %1377 = vmatpush1.bf16.xpose.msra.mxu0 0
        %1378 = vmatprep.subr.bf16.mxu0 0
        %1379 = vmatpush1.bf16.xpose.msra.mxu0 0
        %1380 = vmatprep.subr.bf16.mxu0 0
        %1381 = vmatpush1.bf16.xpose.msra.mxu0 0
        %1382 = vmatprep.subr.bf16.mxu0 0
        %1383 = vmatpush1.bf16.xpose.msra.mxu0 0
        %1384 = vmatprep.subr.bf16.mxu0 0
        %1385 = vmatpush1.bf16.xpose.msra.mxu0 0
        %1386 = vmatprep.subr.bf16.mxu0 0
        %1387 = vmatpush1.bf16.xpose.msra.mxu0 0
        %1388 = vmatprep.subr.bf16.mxu0 0
        %1389 = vmatpush1.bf16.xpose.msra.mxu0 0
        %1390 = vmatprep.subr.bf16.mxu0 0
        %1391 = vmatpush1.bf16.xpose.msra.mxu0 0
        %1392 = vmatprep.subr.bf16.mxu0 0
        %1393 = vmatpush1.bf16.xpose.msra.mxu0 0
        %1394 = vmatprep.subr.bf16.mxu0 0
        %1395 = vmatpush1.bf16.xpose.msra.mxu0 0
        %1396 = vmatprep.subr.bf16.mxu0 0
        %1397 = vmatpush1.bf16.xpose.msra.mxu0 0
        %1398 = vmatprep.subr.bf16.mxu0 0
        %1399 = vmatpush1.bf16.xpose.msra.mxu0 0
        %1400 = vmatprep.subr.bf16.mxu0 0
        %1401 = vmatpush1.bf16.xpose.msra.mxu0 0
        %1402 = vmatprep.subr.bf16.mxu0 0
        %1403 = vmatpush1.bf16.xpose.msra.mxu0 0
        %1404 = vmatprep.subr.bf16.mxu0 0
        %1405 = vmatpush1.bf16.xpose.msra.mxu0 0
        %1406 = vmatprep.mubr.bf16.mxu0 0
        %1407 = vmatmul.mubr.bf16.gmra.mrb[0].mxu0 %v1369
        %v1408 = vpop.f32.mrb[0].mxu0
        %v1409 = vadd.f32 %v719, %v1408
        %v1410 = vpop.f32.mrb[0].mxu0
        %v1411 = vpop.f32.mrb[0].mxu0
        %v1412 = vpop.f32.mrb[0].mxu0
        %1413 = vdwg.mxu0
        %v1414 = vsel %vm1229, %v1271, -inf
        %1415 = vmax.xlane.f32.xlu0 %v1414
        %v1416 = vpop.xlane.xlu0 %1415
        %v1417 = vsel %vm1229, %v1317, -inf
        %1418 = vmax.xlane.f32.xlu0 %v1417
        %v1419 = vpop.xlane.xlu0 %1418
        %v1420 = vsel %vm1229, %v1363, -inf
        %1421 = vmax.xlane.f32.xlu0 %v1420
        %v1422 = vpop.xlane.xlu0 %1421
        %v1423 = vsel %vm1229, %v1409, -inf
        %1424 = vmax.xlane.f32.xlu0 %v1423
        %v1425 = vpop.xlane.xlu0 %1424
        %v1426 = vsub.f32 %v1271, %v1416
        %v1427 = vsub.f32 %v1317, %v1419
        %v1428 = vsub.f32 %v1363, %v1422
        %v1429 = vsub.f32 %v1409, %v1425
        %v1430 = vmul.f32 %v1426, 1.442695
        %v1431 = vpow.pop %v1430
        %v1432 = vmul.f32 %v1427, 1.442695
        %v1433 = vpow.pop %v1432
        %v1434 = vmul.f32 %v1428, 1.442695
        %v1435 = vpow.pop %v1434
        %v1436 = vmul.f32 %v1429, 1.442695
        %v1437 = vpow.pop %v1436
        %v1438 = vsel %vm1229, %v1431, 0.0
        %1439 = vadd.xlane.f32.xlu0 %v1438
        %v1440 = vpop.xlane.xlu0 %1439
        %v1441 = vsel %vm1229, %v1433, 0.0
        %1442 = vadd.xlane.f32.xlu0 %v1441
        %v1443 = vpop.xlane.xlu0 %1442
        %v1444 = vsel %vm1229, %v1435, 0.0
        %1445 = vadd.xlane.f32.xlu0 %v1444
        %v1446 = vpop.xlane.xlu0 %1445
        %v1447 = vsel %vm1229, %v1437, 0.0
        %1448 = vadd.xlane.f32.xlu0 %v1447
        %v1449 = vpop.xlane.xlu0 %1448
        %v1450 = vrcp.pop %v1440
        %v1451 = vrcp.pop %v1443
        %v1452 = vrcp.pop %v1446
        %v1453 = vrcp.pop %v1449
        %v1454 = vmul.f32 %v1431, %v1450
        %v1455 = vmul.f32 %v1433, %v1451
        %v1456 = vmul.f32 %v1435, %v1452
        %v1457 = vmul.f32 %v1437, %v1453
        %v1458 = vpack.c.bf16 %v1454, %v1454
        %v1459 = vpack.c.bf16 %v1455, %v1455
        %v1460 = vpack.c.bf16 %v1456, %v1456
        %v1461 = vpack.c.bf16 %v1457, %v1457
        %v1463 = vsel %vm1229, %v1458, 0
        %vm1465 = vcmask 1043456
        %v1467 = vsel %vm1465, %v1219, 0
        %1469 = vmatprep.subr.bf16.mxu0 0
        %1470 = vmatpush1.bf16.msra.mxu0 %v1467
        %1471 = vmatprep.subr.bf16.mxu0 0
        %1472 = vmatpush1.bf16.msra.mxu0 0
        %1473 = vmatprep.subr.bf16.mxu0 0
        %1474 = vmatpush1.bf16.msra.mxu0 0
        %1475 = vmatprep.subr.bf16.mxu0 0
        %1476 = vmatpush1.bf16.msra.mxu0 0
        %1477 = vmatprep.subr.bf16.mxu0 0
        %1478 = vmatpush1.bf16.msra.mxu0 0
        %1479 = vmatprep.subr.bf16.mxu0 0
        %1480 = vmatpush1.bf16.msra.mxu0 0
        %1481 = vmatprep.subr.bf16.mxu0 0
        %1482 = vmatpush1.bf16.msra.mxu0 0
        %1483 = vmatprep.subr.bf16.mxu0 0
        %1484 = vmatpush1.bf16.msra.mxu0 0
        %1485 = vmatprep.subr.bf16.mxu0 0
        %1486 = vmatpush1.bf16.msra.mxu0 0
        %1487 = vmatprep.subr.bf16.mxu0 0
        %1488 = vmatpush1.bf16.msra.mxu0 0
        %1489 = vmatprep.subr.bf16.mxu0 0
        %1490 = vmatpush1.bf16.msra.mxu0 0
        %1491 = vmatprep.subr.bf16.mxu0 0
        %1492 = vmatpush1.bf16.msra.mxu0 0
        %1493 = vmatprep.subr.bf16.mxu0 0
        %1494 = vmatpush1.bf16.msra.mxu0 0
        %1495 = vmatprep.subr.bf16.mxu0 0
        %1496 = vmatpush1.bf16.msra.mxu0 0
        %1497 = vmatprep.subr.bf16.mxu0 0
        %1498 = vmatpush1.bf16.msra.mxu0 0
        %1499 = vmatprep.subr.bf16.mxu0 0
        %1500 = vmatpush1.bf16.msra.mxu0 0
        %1501 = vmatprep.mubr.bf16.mxu0 0
        %1502 = vmatmul.mubr.bf16.gmra.mrb[0].mxu0 %v1463
        %v1503 = vpop.f32.mrb[0].mxu0
        %v1504 = vadd.f32 0.0, %v1503
        %v1505 = vpop.f32.mrb[0].mxu0
        %v1506 = vpop.f32.mrb[0].mxu0
        %v1507 = vpop.f32.mrb[0].mxu0
        %1508 = vdwg.mxu0
        %v1510 = vsel %vm1229, %v1459, 0
        %v1513 = vsel %vm1465, %v1222, 0
        %1515 = vmatprep.subr.bf16.mxu0 0
        %1516 = vmatpush1.bf16.msra.mxu0 %v1513
        %1517 = vmatprep.subr.bf16.mxu0 0
        %1518 = vmatpush1.bf16.msra.mxu0 0
        %1519 = vmatprep.subr.bf16.mxu0 0
        %1520 = vmatpush1.bf16.msra.mxu0 0
        %1521 = vmatprep.subr.bf16.mxu0 0
        %1522 = vmatpush1.bf16.msra.mxu0 0
        %1523 = vmatprep.subr.bf16.mxu0 0
        %1524 = vmatpush1.bf16.msra.mxu0 0
        %1525 = vmatprep.subr.bf16.mxu0 0
        %1526 = vmatpush1.bf16.msra.mxu0 0
        %1527 = vmatprep.subr.bf16.mxu0 0
        %1528 = vmatpush1.bf16.msra.mxu0 0
        %1529 = vmatprep.subr.bf16.mxu0 0
        %1530 = vmatpush1.bf16.msra.mxu0 0
        %1531 = vmatprep.subr.bf16.mxu0 0
        %1532 = vmatpush1.bf16.msra.mxu0 0
        %1533 = vmatprep.subr.bf16.mxu0 0
        %1534 = vmatpush1.bf16.msra.mxu0 0
        %1535 = vmatprep.subr.bf16.mxu0 0
        %1536 = vmatpush1.bf16.msra.mxu0 0
        %1537 = vmatprep.subr.bf16.mxu0 0
        %1538 = vmatpush1.bf16.msra.mxu0 0
        %1539 = vmatprep.subr.bf16.mxu0 0
        %1540 = vmatpush1.bf16.msra.mxu0 0
        %1541 = vmatprep.subr.bf16.mxu0 0
        %1542 = vmatpush1.bf16.msra.mxu0 0
        %1543 = vmatprep.subr.bf16.mxu0 0
        %1544 = vmatpush1.bf16.msra.mxu0 0
        %1545 = vmatprep.subr.bf16.mxu0 0
        %1546 = vmatpush1.bf16.msra.mxu0 0
        %1547 = vmatprep.mubr.bf16.mxu0 0
        %1548 = vmatmul.mubr.bf16.gmra.mrb[0].mxu0 %v1510
        %v1549 = vpop.f32.mrb[0].mxu0
        %v1550 = vadd.f32 0.0, %v1549
        %v1551 = vpop.f32.mrb[0].mxu0
        %v1552 = vpop.f32.mrb[0].mxu0
        %v1553 = vpop.f32.mrb[0].mxu0
        %1554 = vdwg.mxu0
        %v1556 = vsel %vm1229, %v1460, 0
        %v1559 = vsel %vm1465, %v1225, 0
        %1561 = vmatprep.subr.bf16.mxu0 0
        %1562 = vmatpush1.bf16.msra.mxu0 %v1559
        %1563 = vmatprep.subr.bf16.mxu0 0
        %1564 = vmatpush1.bf16.msra.mxu0 0
        %1565 = vmatprep.subr.bf16.mxu0 0
        %1566 = vmatpush1.bf16.msra.mxu0 0
        %1567 = vmatprep.subr.bf16.mxu0 0
        %1568 = vmatpush1.bf16.msra.mxu0 0
        %1569 = vmatprep.subr.bf16.mxu0 0
        %1570 = vmatpush1.bf16.msra.mxu0 0
        %1571 = vmatprep.subr.bf16.mxu0 0
        %1572 = vmatpush1.bf16.msra.mxu0 0
        %1573 = vmatprep.subr.bf16.mxu0 0
        %1574 = vmatpush1.bf16.msra.mxu0 0
        %1575 = vmatprep.subr.bf16.mxu0 0
        %1576 = vmatpush1.bf16.msra.mxu0 0
        %1577 = vmatprep.subr.bf16.mxu0 0
        %1578 = vmatpush1.bf16.msra.mxu0 0
        %1579 = vmatprep.subr.bf16.mxu0 0
        %1580 = vmatpush1.bf16.msra.mxu0 0
        %1581 = vmatprep.subr.bf16.mxu0 0
        %1582 = vmatpush1.bf16.msra.mxu0 0
        %1583 = vmatprep.subr.bf16.mxu0 0
        %1584 = vmatpush1.bf16.msra.mxu0 0
        %1585 = vmatprep.subr.bf16.mxu0 0
        %1586 = vmatpush1.bf16.msra.mxu0 0
        %1587 = vmatprep.subr.bf16.mxu0 0
        %1588 = vmatpush1.bf16.msra.mxu0 0
        %1589 = vmatprep.subr.bf16.mxu0 0
        %1590 = vmatpush1.bf16.msra.mxu0 0
        %1591 = vmatprep.subr.bf16.mxu0 0
        %1592 = vmatpush1.bf16.msra.mxu0 0
        %1593 = vmatprep.mubr.bf16.mxu0 0
        %1594 = vmatmul.mubr.bf16.gmra.mrb[0].mxu0 %v1556
        %v1595 = vpop.f32.mrb[0].mxu0
        %v1596 = vadd.f32 0.0, %v1595
        %v1597 = vpop.f32.mrb[0].mxu0
        %v1598 = vpop.f32.mrb[0].mxu0
        %v1599 = vpop.f32.mrb[0].mxu0
        %1600 = vdwg.mxu0
        %v1602 = vsel %vm1229, %v1461, 0
        %v1605 = vsel %vm1465, %v1228, 0
        %1607 = vmatprep.subr.bf16.mxu0 0
        %1608 = vmatpush1.bf16.msra.mxu0 %v1605
        %1609 = vmatprep.subr.bf16.mxu0 0
        %1610 = vmatpush1.bf16.msra.mxu0 0
        %1611 = vmatprep.subr.bf16.mxu0 0
        %1612 = vmatpush1.bf16.msra.mxu0 0
        %1613 = vmatprep.subr.bf16.mxu0 0
        %1614 = vmatpush1.bf16.msra.mxu0 0
        %1615 = vmatprep.subr.bf16.mxu0 0
        %1616 = vmatpush1.bf16.msra.mxu0 0
        %1617 = vmatprep.subr.bf16.mxu0 0
        %1618 = vmatpush1.bf16.msra.mxu0 0
        %1619 = vmatprep.subr.bf16.mxu0 0
        %1620 = vmatpush1.bf16.msra.mxu0 0
        %1621 = vmatprep.subr.bf16.mxu0 0
        %1622 = vmatpush1.bf16.msra.mxu0 0
        %1623 = vmatprep.subr.bf16.mxu0 0
        %1624 = vmatpush1.bf16.msra.mxu0 0
        %1625 = vmatprep.subr.bf16.mxu0 0
        %1626 = vmatpush1.bf16.msra.mxu0 0
        %1627 = vmatprep.subr.bf16.mxu0 0
        %1628 = vmatpush1.bf16.msra.mxu0 0
        %1629 = vmatprep.subr.bf16.mxu0 0
        %1630 = vmatpush1.bf16.msra.mxu0 0
        %1631 = vmatprep.subr.bf16.mxu0 0
        %1632 = vmatpush1.bf16.msra.mxu0 0
        %1633 = vmatprep.subr.bf16.mxu0 0
        %1634 = vmatpush1.bf16.msra.mxu0 0
        %1635 = vmatprep.subr.bf16.mxu0 0
        %1636 = vmatpush1.bf16.msra.mxu0 0
        %1637 = vmatprep.subr.bf16.mxu0 0
        %1638 = vmatpush1.bf16.msra.mxu0 0
        %1639 = vmatprep.mubr.bf16.mxu0 0
        %1640 = vmatmul.mubr.bf16.gmra.mrb[0].mxu0 %v1602
        %v1641 = vpop.f32.mrb[0].mxu0
        %v1642 = vadd.f32 0.0, %v1641
        %v1643 = vpop.f32.mrb[0].mxu0
        %v1644 = vpop.f32.mrb[0].mxu0
        %v1645 = vpop.f32.mrb[0].mxu0
        %1646 = vdwg.mxu0
        %v1647 = vcombine.low %v1504, %v1596
        %v1648 = vcombine.high %v1504, %v1596
        %v1650 = vunpack.c.l.s4 1983009808
        %v1651 = vunpack.c.0.s8 %v1650
        %v1652 = vlaneseq
        %v1653 = vshrl.u32 %v1652, 7
        %v1654 = vsub.s32 %v1651, %v1653
        %v1655 = vrot.slane %v1647, %v1654
        %v1657 = vunpack.c.l.s4 1983009808
        %v1658 = vunpack.c.0.s8 %v1657
        %v1659 = vlaneseq
        %v1660 = vshrl.u32 %v1659, 7
        %v1661 = vsub.s32 %v1658, %v1660
        %v1662 = vrot.slane %v1648, %v1661
        %v1663 = vcombine.low %v1550, %v1642
        %v1664 = vcombine.high %v1550, %v1642
        %v1666 = vunpack.c.l.s4 1983009808
        %v1667 = vunpack.c.0.s8 %v1666
        %v1668 = vlaneseq
        %v1669 = vshrl.u32 %v1668, 7
        %v1670 = vsub.s32 %v1667, %v1669
        %v1671 = vrot.slane %v1663, %v1670
        %v1673 = vunpack.c.l.s4 1983009808
        %v1674 = vunpack.c.0.s8 %v1673
        %v1675 = vlaneseq
        %v1676 = vshrl.u32 %v1675, 7
        %v1677 = vsub.s32 %v1674, %v1676
        %v1678 = vrot.slane %v1664, %v1677
        %v1679 = vcombine.low %v1655, %v1671
        %v1680 = vcombine.high %v1655, %v1671
        %v1682 = vunpack.c.l.s4 1934713408
        %v1683 = vunpack.c.0.s8 %v1682
        %v1684 = vlaneseq
        %v1685 = vshrl.u32 %v1684, 7
        %v1686 = vsub.s32 %v1683, %v1685
        %v1687 = vrot.slane %v1679, %v1686
        %v1689 = vunpack.c.l.s4 1934713408
        %v1690 = vunpack.c.0.s8 %v1689
        %v1691 = vlaneseq
        %v1692 = vshrl.u32 %v1691, 7
        %v1693 = vsub.s32 %v1690, %v1692
        %v1694 = vrot.slane %v1680, %v1693
        %v1695 = vcombine.low %v1662, %v1678
        %v1696 = vcombine.high %v1662, %v1678
        %v1698 = vunpack.c.l.s4 1934713408
        %v1699 = vunpack.c.0.s8 %v1698
        %v1700 = vlaneseq
        %v1701 = vshrl.u32 %v1700, 7
        %v1702 = vsub.s32 %v1699, %v1701
        %v1703 = vrot.slane %v1695, %v1702
        %v1705 = vunpack.c.l.s4 1934713408
        %v1706 = vunpack.c.0.s8 %v1705
        %v1707 = vlaneseq
        %v1708 = vshrl.u32 %v1707, 7
        %v1709 = vsub.s32 %v1706, %v1708
        %v1710 = vrot.slane %v1696, %v1709
        %v1711 = vcombine.high %v1687, 0.0
        %v1712 = vcombine.high %v1694, 0.0
        %v1713 = vcombine.high %v1703, 0.0
        %v1714 = vcombine.high %v1710, 0.0
        %v1715 = vcombine.low %v1687, %v1694
        %v1717 = vunpack.c.l.s4 1983009808
        %v1718 = vunpack.c.0.s8 %v1717
        %v1719 = vlaneseq
        %v1720 = vshrl.u32 %v1719, 7
        %v1721 = vsub.s32 %v1718, %v1720
        %v1722 = vrot.slane %v1715, %v1721
        %v1723 = vcombine.low %v1711, %v1712
        %v1725 = vunpack.c.l.s4 1983009808
        %v1726 = vunpack.c.0.s8 %v1725
        %v1727 = vlaneseq
        %v1728 = vshrl.u32 %v1727, 7
        %v1729 = vsub.s32 %v1726, %v1728
        %v1730 = vrot.slane %v1723, %v1729
        %v1731 = vcombine.low %v1703, %v1710
        %v1733 = vunpack.c.l.s4 1983009808
        %v1734 = vunpack.c.0.s8 %v1733
        %v1735 = vlaneseq
        %v1736 = vshrl.u32 %v1735, 7
        %v1737 = vsub.s32 %v1734, %v1736
        %v1738 = vrot.slane %v1731, %v1737
        %v1739 = vcombine.low %v1713, %v1714
        %v1741 = vunpack.c.l.s4 1983009808
        %v1742 = vunpack.c.0.s8 %v1741
        %v1743 = vlaneseq
        %v1744 = vshrl.u32 %v1743, 7
        %v1745 = vsub.s32 %v1742, %v1744
        %v1746 = vrot.slane %v1739, %v1745
        %v1747 = vcombine.low %v1722, %v1730
        %v1748 = vcombine.high %v1722, %v1730
        %v1750 = vunpack.c.l.s4 1934713408
        %v1751 = vunpack.c.0.s8 %v1750
        %v1752 = vlaneseq
        %v1753 = vshrl.u32 %v1752, 7
        %v1754 = vsub.s32 %v1751, %v1753
        %v1755 = vrot.slane %v1747, %v1754
        %v1757 = vunpack.c.l.s4 1934713408
        %v1758 = vunpack.c.0.s8 %v1757
        %v1759 = vlaneseq
        %v1760 = vshrl.u32 %v1759, 7
        %v1761 = vsub.s32 %v1758, %v1760
        %v1762 = vrot.slane %v1748, %v1761
        %v1763 = vcombine.low %v1738, %v1746
        %v1764 = vcombine.high %v1738, %v1746
        %v1766 = vunpack.c.l.s4 1934713408
        %v1767 = vunpack.c.0.s8 %v1766
        %v1768 = vlaneseq
        %v1769 = vshrl.u32 %v1768, 7
        %v1770 = vsub.s32 %v1767, %v1769
        %v1771 = vrot.slane %v1763, %v1770
        %v1773 = vunpack.c.l.s4 1934713408
        %v1774 = vunpack.c.0.s8 %v1773
        %v1775 = vlaneseq
        %v1776 = vshrl.u32 %v1775, 7
        %v1777 = vsub.s32 %v1774, %v1776
        %v1778 = vrot.slane %v1764, %v1777
        %v1779 = vcombine.low %v1755, %v1771
        %v1780 = vcombine.high %v1755, %v1771
        %v1781 = vcombine.low %v1762, %v1778
        %v1782 = vcombine.high %v1762, %v1778
        %1784 = vrot.lane.b32.xlu0 %v1780, 8
        %v1785 = vpop.permute.xlu0 %1784
        %1788 = vrot.lane.b32.xlu0 %v1781, 16
        %v1789 = vpop.permute.xlu0 %1788
        %1792 = vrot.lane.b32.xlu0 %v1782, 24
        %v1793 = vpop.permute.xlu0 %1792
        %v1795 = vsel %vm1229, %v1779, %v1785
        %vm1796 = vcmask 130048
        %v1797 = vsel %vm1796, %v1795, %v1789
        %vm1798 = vcmask 195584
        %v1799 = vsel %vm1798, %v1797, %v1793
        %v1800 = vpack.c.bf16 %v1799, %v1799
        %v1801 = vld [vmem:[#allocation14] sm:$0xf]
        %v1802 = vld [vmem:[#allocation14 + $0x4] sm:$0xf]
        %v1803 = vld [vmem:[#allocation14 + $0x8] sm:$0xf]
        %v1804 = vld [vmem:[#allocation14 + $0xc] sm:$0xf]
        %v1805 = vld [vmem:[#allocation16] sm:$0x1]
        %v1807 = vlaneseq
        %v1808 = vshrl.u32 %v1807, 7
        %v1809 = vsub.s32 0, %v1808
        %v1810 = vrot.slane %v1805, %v1809
        %v1816 = vunpack.c.l.b16 %v1801
        %v1817 = vunpack.c.l.b16 %v1802
        %v1818 = vunpack.c.l.b16 %v1803
        %v1819 = vunpack.c.l.b16 %v1804
        %v1820 = vpack.c.b16 %v1817, %v1816
        %v1821 = vpack.c.b16 %v1819, %v1818
        %v1825 = vsel %vm608, %v1800, 0
        %1827 = vmatprep.subr.bf16.mxu0 0
        %1828 = vmatpush1.bf16.msra.mxu0 %v1820
        %1829 = vmatprep.subr.bf16.mxu0 0
        %1830 = vmatpush1.bf16.msra.mxu0 %v1821
        %1831 = vmatprep.subr.bf16.mxu0 0
        %1832 = vmatpush1.bf16.msra.mxu0 0
        %1833 = vmatprep.subr.bf16.mxu0 0
        %1834 = vmatpush1.bf16.msra.mxu0 0
        %1835 = vmatprep.subr.bf16.mxu0 0
        %1836 = vmatpush1.bf16.msra.mxu0 0
        %1837 = vmatprep.subr.bf16.mxu0 0
        %1838 = vmatpush1.bf16.msra.mxu0 0
        %1839 = vmatprep.subr.bf16.mxu0 0
        %1840 = vmatpush1.bf16.msra.mxu0 0
        %1841 = vmatprep.subr.bf16.mxu0 0
        %1842 = vmatpush1.bf16.msra.mxu0 0
        %1843 = vmatprep.subr.bf16.mxu0 0
        %1844 = vmatpush1.bf16.msra.mxu0 0
        %1845 = vmatprep.subr.bf16.mxu0 0
        %1846 = vmatpush1.bf16.msra.mxu0 0
        %1847 = vmatprep.subr.bf16.mxu0 0
        %1848 = vmatpush1.bf16.msra.mxu0 0
        %1849 = vmatprep.subr.bf16.mxu0 0
        %1850 = vmatpush1.bf16.msra.mxu0 0
        %1851 = vmatprep.subr.bf16.mxu0 0
        %1852 = vmatpush1.bf16.msra.mxu0 0
        %1853 = vmatprep.subr.bf16.mxu0 0
        %1854 = vmatpush1.bf16.msra.mxu0 0
        %1855 = vmatprep.subr.bf16.mxu0 0
        %1856 = vmatpush1.bf16.msra.mxu0 0
        %1857 = vmatprep.subr.bf16.mxu0 0
        %1858 = vmatpush1.bf16.msra.mxu0 0
        %1859 = vmatprep.mubr.bf16.mxu0 0
        %1860 = vmatmul.mubr.bf16.gmra.mrb[0].mxu0 %v1825
        %v1861 = vpop.f32.mrb[0].mxu0
        %v1862 = vadd.f32 %v1810, %v1861
        %v1863 = vpop.f32.mrb[0].mxu0
        %v1864 = vpop.f32.mrb[0].mxu0
        %v1865 = vpop.f32.mrb[0].mxu0
        %1866 = vdwg.mxu0
        %v1867 = vadd.f32 %v582, %v1862
        %v1868 = vld [vmem:[#allocation17] sm:$0x1]
        %v1869 = vld [vmem:[#allocation19] sm:$0x1]
        %v1870 = vsel %vm608, %v1867, 0.0
        %1871 = vadd.xlane.f32.xlu0 %v1870
        %v1872 = vpop.xlane.xlu0 %1871
        %v1873 = vrcp.pop 32.0
        %v1874 = vmul.f32 %v1872, %v1873
        %v1875 = vsub.f32 %v1867, %v1874
        %v1876 = vmul.f32 %v1875, %v1875
        %v1877 = vsel %vm608, %v1876, 0.0
        %1878 = vadd.xlane.f32.xlu0 %v1877
        %v1879 = vpop.xlane.xlu0 %1878
        %v1880 = vmul.f32 %v1879, %v1873
        %v1881 = vadd.f32 %v1880, 1e-05
        %v1882 = vrsqrt.pop %v1881
        %v1883 = vmul.f32 %v1875, %v1882
        %v1885 = vlaneseq
        %v1886 = vshrl.u32 %v1885, 7
        %v1887 = vsub.s32 0, %v1886
        %v1888 = vrot.slane %v1868, %v1887
        %v1890 = vmul.f32 %v1883, %v1888
        %v1892 = vlaneseq
        %v1893 = vshrl.u32 %v1892, 7
        %v1894 = vsub.s32 0, %v1893
        %v1895 = vrot.slane %v1869, %v1894
        %v1897 = vadd.f32 %v1890, %v1895
        %1898 = vst.msk [vmem:[%s580] sm:$0xff] %vm608, %v1897
        %s1899 = sand.u32 %s305, 1
        %s1900 = scalar_lea.sflag [#allocation4], %s1899
        %s1901 = sand.u32 %s305, 1
        %s1902 = smul.addr %s1901, 8
        %s1903 = scalar_lea.vmem [#allocation20], %s1902
        // Predicated region
        $region109: #{decoder.6} parent=63 // pred_check
          %p1904 = pneg %p315
        $region110: #{decoder.6} parent=63 // pred_check_branch
          %1906 = sbr.rel (%p1904) target = $region112
        $region111: #{decoder.6} parent=63 // pred_region
          %s1908 = ssub.s32 128, 128
          %1909 = vsyncadd %s1900, %s1908
          %s1910 = sadd.s32 %s40, %s39
          %s1911 = smul.addr %s1910, 128
          %s1912 = scalar_lea.hbm %s11, %s1911
          %s1914 = sshll.u32 %s1903, 4
          %s1915 = int_to_ptr.vmem [resolvable:$true] %s1914
          %1917 = dma.vmem_to_hbm [thread:$0]  %s1915, 128, %s1912, %s1900
        $region112: #{decoder.6} parent=63 // pred_fallthru
          _
      $region64: #{decoder.6} parent=5 // pred_fallthru
        _
      %p1918 = scmp.le.s32.totalorder 2, %s30
      // Predicated region
      $region113: #{decoder.6} parent=5 // pred_check
        %p1919 = pneg %p1918
      $region114: #{decoder.6} parent=5 // pred_check_branch
        %1921 = sbr.rel (%p1919) target = $region116
      $region115: #{decoder.6} parent=5 // pred_region
        %s1922 = ssub.s32 %s30, 2
        // Predicated region
        $region117: #{decoder.6} parent=115 // pred_check
          %p1923 = pneg %p321
        $region118: #{decoder.6} parent=115 // pred_check_branch
          %1925 = sbr.rel (%p1923) target = $region120
        $region119: #{decoder.6} parent=115 // pred_region
          %s1926 = sand.u32 %s306, 1
          %s1927 = scalar_lea.sflag [#allocation4], %s1926
          %s1928 = sand.u32 %s306, 1
          %s1929 = smul.addr %s1928, 8
          %s1930 = scalar_lea.vmem [#allocation20], %s1929
          %1931 = dma.done %s1927, 128
        $region120: #{decoder.6} parent=115 // pred_fallthru
          _
      $region116: #{decoder.6} parent=5 // pred_fallthru
        _
    $region6: #{decoder.6} parent=1 // loop_footer
      %s34 = sadd.s32 1, %s30
    $region7: #{decoder.6} parent=1 // loop_footer_branch
      %29 = sbr.rel target = $region3
    $region8: #{decoder.6} parent=1 // loop_exit
      _
    %1932 = vsyncpa [#allocation3], 1
    %s1933 = scalar_lea.sflag [#allocation3], 1
    %1934 = vsyncpa %s1933, 1
    %1935 = vsyncpa [#allocation6], 1
    %s1936 = scalar_lea.sflag [#allocation6], 1
    %1937 = vsyncpa %s1936, 1
    %1938 = vsyncpa [#allocation9], 1
    %1939 = vsyncpa [#allocation12], 1
    %1940 = vsyncpa [#allocation15], 1
    %1941 = vsyncpa [#allocation18], 1
    %1942 = vsyncpa [#allocation4], 1
    %s1943 = scalar_lea.sflag [#allocation4], 1
    %1944 = vsyncpa %s1943, 1

// kernel: decoder.7
$region0: #{decoder.7}
  #allocation0 [shape = 'u32[]', space=smem, size = 0x4, offset = 0x4, fixed_abs, tag = 'smem constant byte address 0x4 - core index']
  #allocation1 [shape = 'u32[144,128]{1,0:T(1,128)}', space=vmem, size = 0x12000, scoped, tag = 'internal scratch']
  %s0 = inlined_call_operand.hbm [shape: f32[2,8,32], index: 0, kind: input, shape index: {}]
  %s1 = inlined_call_operand.hbm [shape: f32[2,8,32], index: 1, kind: input, shape index: {}]
  %s2 = inlined_call_operand.hbm [shape: bf16[32,32], index: 2, kind: input, shape index: {}]
  %s3 = inlined_call_operand.hbm [shape: f32[1,32], index: 3, kind: input, shape index: {}]
  %s4 = inlined_call_operand.hbm [shape: bf16[32,64], index: 4, kind: input, shape index: {}]
  %s5 = inlined_call_operand.hbm [shape: f32[1,64], index: 5, kind: input, shape index: {}]
  %s6 = inlined_call_operand.hbm [shape: bf16[32,32], index: 6, kind: input, shape index: {}]
  %s7 = inlined_call_operand.hbm [shape: f32[1,32], index: 7, kind: input, shape index: {}]
  %s8 = inlined_call_operand.hbm [shape: f32[1,32], index: 8, kind: input, shape index: {}]
  %s9 = inlined_call_operand.hbm [shape: f32[1,32], index: 9, kind: input, shape index: {}]
  %s10 = inlined_call_operand.hbm [shape: f32[2,8,32], index: 10, kind: output, shape index: {}]
  %s11 = sld [smem:[#allocation0]]
  $region113: #{decoder.7} parent=0
    _
  %s13 = ssub.s32 1, %s11
  %s14 = scalar_select 0, %s13, %s11
  $region1: #{decoder.7} parent=0
    #allocation2 [shape = 'u8[8192]{0}', space=vmem, size = 0x2000, scoped, tag = 'input window, operand 0']
    #allocation3 [shape = 's32[2]{0}', space=sflag, size = 0x8, scoped, tag = 'scoped memory for decoder.7']
    #allocation4 [shape = 's32[2]{0}', space=sflag, size = 0x8, scoped, tag = 'scoped memory for decoder.7']
    #allocation5 [shape = 'u8[8192]{0}', space=vmem, size = 0x2000, scoped, tag = 'input window, operand 1']
    #allocation6 [shape = 's32[2]{0}', space=sflag, size = 0x8, scoped, tag = 'scoped memory for decoder.7']
    #allocation7 [shape = 'u8[8192]{0}', space=vmem, size = 0x2000, scoped, tag = 'input window, operand 2, single buffered']
    #allocation8 [shape = 'u8[512]{0}', space=vmem, size = 0x400, scoped, tag = 'input window, operand 3, single buffered']
    #allocation9 [shape = 's32[1]{0}', space=sflag, size = 0x4, scoped, tag = 'scoped memory for decoder.7']
    #allocation10 [shape = 'u8[8192]{0}', space=vmem, size = 0x2000, scoped, tag = 'input window, operand 4, single buffered']
    #allocation11 [shape = 'u8[512]{0}', space=vmem, size = 0x400, scoped, tag = 'input window, operand 5, single buffered']
    #allocation12 [shape = 's32[1]{0}', space=sflag, size = 0x4, scoped, tag = 'scoped memory for decoder.7']
    #allocation13 [shape = 'u8[8192]{0}', space=vmem, size = 0x2000, scoped, tag = 'input window, operand 6, single buffered']
    #allocation14 [shape = 'u8[512]{0}', space=vmem, size = 0x400, scoped, tag = 'input window, operand 7, single buffered']
    #allocation15 [shape = 's32[1]{0}', space=sflag, size = 0x4, scoped, tag = 'scoped memory for decoder.7']
    #allocation16 [shape = 'u8[512]{0}', space=vmem, size = 0x400, scoped, tag = 'input window, operand 8, single buffered']
    #allocation17 [shape = 'u8[512]{0}', space=vmem, size = 0x400, scoped, tag = 'input window, operand 9, single buffered']
    #allocation18 [shape = 's32[1]{0}', space=sflag, size = 0x4, scoped, tag = 'scoped memory for decoder.7']
    #allocation19 [shape = 'u8[8192]{0}', space=vmem, size = 0x2000, scoped, tag = 'output window, operand 0']
    %15 = vsyncpa [#allocation3], 0
    %s16 = scalar_lea.sflag [#allocation3], 1
    %17 = vsyncpa %s16, 0
    %18 = vsyncpa [#allocation6], 0
    %s19 = scalar_lea.sflag [#allocation6], 1
    %20 = vsyncpa %s19, 0
    %21 = vsyncpa [#allocation9], 0
    %22 = vsyncpa [#allocation12], 0
    %23 = vsyncpa [#allocation15], 0
    %24 = vsyncpa [#allocation18], 0
    %25 = vsyncpa [#allocation4], 0
    %s26 = scalar_lea.sflag [#allocation4], 1
    %27 = vsyncpa %s26, 0
    loop: start=0, step=1, limit=4
    $region2: #{decoder.7} parent=1 // loop_pre_header
      _
    $region3: #{decoder.7} parent=1 // loop_header
      %s29 = sphi 0, %s33
      %p30 = scmp.ge.s32.totalorder %s29, 4
      %s36 = sphi 0, %s48
      %s37 = sphi 0, %s44
      %s38 = sphi 0, %s36
      %s39 = sphi 0, %s37
      %s40 = sphi 0, %s38
      %s41 = sphi 0, %s39
      %s53 = sphi 0, %s55
      %s56 = sphi 0, %s53
      %s57 = sphi 0, %s56
      %s73 = sphi 0, %s57
      %s79 = sphi 0, %s81
      %s82 = sphi 0, %s79
      %s83 = sphi 0, %s82
      %s99 = sphi 0, %s83
      %s103 = sphi 0, %s103
      %s105 = sphi 0, %s103
      %s106 = sphi 0, %s105
      %s120 = sphi 0, %s106
      %s124 = sphi 0, %s124
      %s126 = sphi 0, %s124
      %s127 = sphi 0, %s126
      %s141 = sphi 0, %s127
      %s145 = sphi 0, %s145
      %s147 = sphi 0, %s145
      %s148 = sphi 0, %s147
      %s162 = sphi 0, %s148
      %s166 = sphi 0, %s166
      %s168 = sphi 0, %s166
      %s169 = sphi 0, %s168
      %s183 = sphi 0, %s169
      %s187 = sphi 0, %s187
      %s189 = sphi 0, %s187
      %s190 = sphi 0, %s189
      %s204 = sphi 0, %s190
      %s208 = sphi 0, %s208
      %s210 = sphi 0, %s208
      %s211 = sphi 0, %s210
      %s225 = sphi 0, %s211
      %s229 = sphi 0, %s229
      %s231 = sphi 0, %s229
      %s232 = sphi 0, %s231
      %s246 = sphi 0, %s232
      %s250 = sphi 0, %s250
      %s252 = sphi 0, %s250
      %s253 = sphi 0, %s252
      %s267 = sphi 0, %s253
      %s275 = sphi 0, %s277
      %s278 = sphi 0, %s275
      %s279 = sphi 0, %s278
      %s295 = sphi 0, %s279
    $region4: #{decoder.7} parent=1 // loop_header_branch
      %32 = sbr.rel (%p30) target = $region8
    $region5: #{decoder.7} parent=1 // loop_body
      %s34 = ssub.s32 %s29, 1
      %s35 = ssub.s32 %s29, 2
      %s42 = sadd.s32 1, %s37
      %p43 = scmp.ge.s32.totalorder %s42, 1
      %s44 = scalar_select %p43, 0, %s42
      %s45 = sadd.s32 1, %s36
      %s46 = scalar_select %p43, %s45, %s36
      %p47 = scmp.ge.s32.totalorder %s46, 2
      %s48 = scalar_select %p47, 0, %s46
      %s49 = ssub.s32 %s36, %s48
      %s50 = ssub.s32 %s37, %s44
      %s51 = sor.u32 %s49, %s50
      %p52 = scmp.eq.s32.totalorder %s51, 0
      %s54 = sadd.s32 %s53, 1
      %s55 = scalar_select %p52, %s53, %s54
      %p58 = pneg %p52
      %p59 = scmp.eq.s32.totalorder %s29, 1
      %p60 = por %p58, %p59
      %p61 = scmp.ne.s32.totalorder %s53, %s56
      %p62 = scmp.eq.s32.totalorder %s29, 0
      %p63 = por %p61, %p62
      %p64 = scmp.ne.s32.totalorder %s53, %s56
      %p65 = scmp.eq.s32.totalorder %s34, 1
      %p66 = por %p64, %p65
      %p67 = scmp.ne.s32.totalorder %s56, %s57
      %p68 = scmp.eq.s32.totalorder %s34, 0
      %p69 = por %p67, %p68
      %p70 = scmp.ne.s32.totalorder %s56, %s57
      %p71 = scmp.eq.s32.totalorder %s35, 1
      %p72 = por %p70, %p71
      %p74 = scmp.ne.s32.totalorder %s57, %s73
      %p75 = scmp.eq.s32.totalorder %s35, 0
      %p76 = por %p74, %p75
      %s77 = ssub.s32 %s36, %s48
      %p78 = scmp.eq.s32.totalorder %s77, 0
      %s80 = sadd.s32 %s79, 1
      %s81 = scalar_select %p78, %s79, %s80
      %p84 = pneg %p78
      %p85 = scmp.eq.s32.totalorder %s29, 1
      %p86 = por %p84, %p85
      %p87 = scmp.ne.s32.totalorder %s79, %s82
      %p88 = scmp.eq.s32.totalorder %s29, 0
      %p89 = por %p87, %p88
      %p90 = scmp.ne.s32.totalorder %s79, %s82
      %p91 = scmp.eq.s32.totalorder %s34, 1
      %p92 = por %p90, %p91
      %p93 = scmp.ne.s32.totalorder %s82, %s83
      %p94 = scmp.eq.s32.totalorder %s34, 0
      %p95 = por %p93, %p94
      %p96 = scmp.ne.s32.totalorder %s82, %s83
      %p97 = scmp.eq.s32.totalorder %s35, 1
      %p98 = por %p96, %p97
      %p100 = scmp.ne.s32.totalorder %s83, %s99
      %p101 = scmp.eq.s32.totalorder %s35, 0
      %p102 = por %p100, %p101
      %s104 = sadd.s32 %s103, 1
      %p107 = scmp.eq.s32.totalorder %s29, 1
      %p108 = scmp.ne.s32.totalorder %s103, %s105
      %p109 = scmp.eq.s32.totalorder %s29, 0
      %p110 = por %p108, %p109
      %p111 = scmp.ne.s32.totalorder %s103, %s105
      %p112 = scmp.eq.s32.totalorder %s34, 1
      %p113 = por %p111, %p112
      %p114 = scmp.ne.s32.totalorder %s105, %s106
      %p115 = scmp.eq.s32.totalorder %s34, 0
      %p116 = por %p114, %p115
      %p117 = scmp.ne.s32.totalorder %s105, %s106
      %p118 = scmp.eq.s32.totalorder %s35, 1
      %p119 = por %p117, %p118
      %p121 = scmp.ne.s32.totalorder %s106, %s120
      %p122 = scmp.eq.s32.totalorder %s35, 0
      %p123 = por %p121, %p122
      %s125 = sadd.s32 %s124, 1
      %p128 = scmp.eq.s32.totalorder %s29, 1
      %p129 = scmp.ne.s32.totalorder %s124, %s126
      %p130 = scmp.eq.s32.totalorder %s29, 0
      %p131 = por %p129, %p130
      %p132 = scmp.ne.s32.totalorder %s124, %s126
      %p133 = scmp.eq.s32.totalorder %s34, 1
      %p134 = por %p132, %p133
      %p135 = scmp.ne.s32.totalorder %s126, %s127
      %p136 = scmp.eq.s32.totalorder %s34, 0
      %p137 = por %p135, %p136
      %p138 = scmp.ne.s32.totalorder %s126, %s127
      %p139 = scmp.eq.s32.totalorder %s35, 1
      %p140 = por %p138, %p139
      %p142 = scmp.ne.s32.totalorder %s127, %s141
      %p143 = scmp.eq.s32.totalorder %s35, 0
      %p144 = por %p142, %p143
      %s146 = sadd.s32 %s145, 1
      %p149 = scmp.eq.s32.totalorder %s29, 1
      %p150 = scmp.ne.s32.totalorder %s145, %s147
      %p151 = scmp.eq.s32.totalorder %s29, 0
      %p152 = por %p150, %p151
      %p153 = scmp.ne.s32.totalorder %s145, %s147
      %p154 = scmp.eq.s32.totalorder %s34, 1
      %p155 = por %p153, %p154
      %p156 = scmp.ne.s32.totalorder %s147, %s148
      %p157 = scmp.eq.s32.totalorder %s34, 0
      %p158 = por %p156, %p157
      %p159 = scmp.ne.s32.totalorder %s147, %s148
      %p160 = scmp.eq.s32.totalorder %s35, 1
      %p161 = por %p159, %p160
      %p163 = scmp.ne.s32.totalorder %s148, %s162
      %p164 = scmp.eq.s32.totalorder %s35, 0
      %p165 = por %p163, %p164
      %s167 = sadd.s32 %s166, 1
      %p170 = scmp.eq.s32.totalorder %s29, 1
      %p171 = scmp.ne.s32.totalorder %s166, %s168
      %p172 = scmp.eq.s32.totalorder %s29, 0
      %p173 = por %p171, %p172
      %p174 = scmp.ne.s32.totalorder %s166, %s168
      %p175 = scmp.eq.s32.totalorder %s34, 1
      %p176 = por %p174, %p175
      %p177 = scmp.ne.s32.totalorder %s168, %s169
      %p178 = scmp.eq.s32.totalorder %s34, 0
      %p179 = por %p177, %p178
      %p180 = scmp.ne.s32.totalorder %s168, %s169
      %p181 = scmp.eq.s32.totalorder %s35, 1
      %p182 = por %p180, %p181
      %p184 = scmp.ne.s32.totalorder %s169, %s183
      %p185 = scmp.eq.s32.totalorder %s35, 0
      %p186 = por %p184, %p185
      %s188 = sadd.s32 %s187, 1
      %p191 = scmp.eq.s32.totalorder %s29, 1
      %p192 = scmp.ne.s32.totalorder %s187, %s189
      %p193 = scmp.eq.s32.totalorder %s29, 0
      %p194 = por %p192, %p193
      %p195 = scmp.ne.s32.totalorder %s187, %s189
      %p196 = scmp.eq.s32.totalorder %s34, 1
      %p197 = por %p195, %p196
      %p198 = scmp.ne.s32.totalorder %s189, %s190
      %p199 = scmp.eq.s32.totalorder %s34, 0
      %p200 = por %p198, %p199
      %p201 = scmp.ne.s32.totalorder %s189, %s190
      %p202 = scmp.eq.s32.totalorder %s35, 1
      %p203 = por %p201, %p202
      %p205 = scmp.ne.s32.totalorder %s190, %s204
      %p206 = scmp.eq.s32.totalorder %s35, 0
      %p207 = por %p205, %p206
      %s209 = sadd.s32 %s208, 1
      %p212 = scmp.eq.s32.totalorder %s29, 1
      %p213 = scmp.ne.s32.totalorder %s208, %s210
      %p214 = scmp.eq.s32.totalorder %s29, 0
      %p215 = por %p213, %p214
      %p216 = scmp.ne.s32.totalorder %s208, %s210
      %p217 = scmp.eq.s32.totalorder %s34, 1
      %p218 = por %p216, %p217
      %p219 = scmp.ne.s32.totalorder %s210, %s211
      %p220 = scmp.eq.s32.totalorder %s34, 0
      %p221 = por %p219, %p220
      %p222 = scmp.ne.s32.totalorder %s210, %s211
      %p223 = scmp.eq.s32.totalorder %s35, 1
      %p224 = por %p222, %p223
      %p226 = scmp.ne.s32.totalorder %s211, %s225
      %p227 = scmp.eq.s32.totalorder %s35, 0
      %p228 = por %p226, %p227
      %s230 = sadd.s32 %s229, 1
      %p233 = scmp.eq.s32.totalorder %s29, 1
      %p234 = scmp.ne.s32.totalorder %s229, %s231
      %p235 = scmp.eq.s32.totalorder %s29, 0
      %p236 = por %p234, %p235
      %p237 = scmp.ne.s32.totalorder %s229, %s231
      %p238 = scmp.eq.s32.totalorder %s34, 1
      %p239 = por %p237, %p238
      %p240 = scmp.ne.s32.totalorder %s231, %s232
      %p241 = scmp.eq.s32.totalorder %s34, 0
      %p242 = por %p240, %p241
      %p243 = scmp.ne.s32.totalorder %s231, %s232
      %p244 = scmp.eq.s32.totalorder %s35, 1
      %p245 = por %p243, %p244
      %p247 = scmp.ne.s32.totalorder %s232, %s246
      %p248 = scmp.eq.s32.totalorder %s35, 0
      %p249 = por %p247, %p248
      %s251 = sadd.s32 %s250, 1
      %p254 = scmp.eq.s32.totalorder %s29, 1
      %p255 = scmp.ne.s32.totalorder %s250, %s252
      %p256 = scmp.eq.s32.totalorder %s29, 0
      %p257 = por %p255, %p256
      %p258 = scmp.ne.s32.totalorder %s250, %s252
      %p259 = scmp.eq.s32.totalorder %s34, 1
      %p260 = por %p258, %p259
      %p261 = scmp.ne.s32.totalorder %s252, %s253
      %p262 = scmp.eq.s32.totalorder %s34, 0
      %p263 = por %p261, %p262
      %p264 = scmp.ne.s32.totalorder %s252, %s253
      %p265 = scmp.eq.s32.totalorder %s35, 1
      %p266 = por %p264, %p265
      %p268 = scmp.ne.s32.totalorder %s253, %s267
      %p269 = scmp.eq.s32.totalorder %s35, 0
      %p270 = por %p268, %p269
      %s271 = ssub.s32 %s36, %s48
      %s272 = ssub.s32 %s37, %s44
      %s273 = sor.u32 %s271, %s272
      %p274 = scmp.eq.s32.totalorder %s273, 0
      %s276 = sadd.s32 %s275, 1
      %s277 = scalar_select %p274, %s275, %s276
      %p280 = pneg %p274
      %p281 = scmp.eq.s32.totalorder %s29, 1
      %p282 = por %p280, %p281
      %p283 = scmp.ne.s32.totalorder %s275, %s278
      %p284 = scmp.eq.s32.totalorder %s29, 0
      %p285 = por %p283, %p284
      %p286 = scmp.ne.s32.totalorder %s275, %s278
      %p287 = scmp.eq.s32.totalorder %s34, 1
      %p288 = por %p286, %p287
      %p289 = scmp.ne.s32.totalorder %s278, %s279
      %p290 = scmp.eq.s32.totalorder %s34, 0
      %p291 = por %p289, %p290
      %p292 = scmp.ne.s32.totalorder %s278, %s279
      %p293 = scmp.eq.s32.totalorder %s35, 1
      %p294 = por %p292, %p293
      %p296 = scmp.ne.s32.totalorder %s279, %s295
      %p297 = scmp.eq.s32.totalorder %s35, 0
      %p298 = por %p296, %p297
      %p299 = scmp.le.s32.totalorder 1, %s29
      %p300 = scmp.lt.s32.totalorder %s29, 3
      %p301 = pnand %p299, %p300
      %p302 = pneg %p301
      // Predicated region
      $region9: #{decoder.7} parent=5 // pred_check
        _
      $region10: #{decoder.7} parent=5 // pred_check_branch
        %304 = sbr.rel (%p301) target = $region12
      $region11: #{decoder.7} parent=5 // pred_region
        %s305 = ssub.s32 %s29, 1
        // Predicated region
        $region13: #{decoder.7} parent=11 // pred_check
          %p306 = pneg %p116
        $region14: #{decoder.7} parent=11 // pred_check_branch
          %308 = sbr.rel (%p306) target = $region16
        $region15: #{decoder.7} parent=11 // pred_region
          %s310 = ssub.s32 256, 256
          %311 = vsyncadd [#allocation6], %s310
          %s312 = sshll.u32 [#allocation7], 4
          %s313 = int_to_ptr.vmem [resolvable:$true] %s312
          %318 = dma.hbm_to_vmem [thread:$0]  %s2, 256, %s313, [#allocation6], 64, 64, 4
        $region16: #{decoder.7} parent=11 // pred_fallthru
          _
        // Predicated region
        $region17: #{decoder.7} parent=11 // pred_check
          %p319 = pneg %p137
        $region18: #{decoder.7} parent=11 // pred_check_branch
          %321 = sbr.rel (%p319) target = $region20
        $region19: #{decoder.7} parent=11 // pred_region
          %s323 = ssub.s32 16, 16
          %324 = vsyncadd [#allocation9], %s323
          %s326 = sshll.u32 [#allocation8], 4
          %s327 = int_to_ptr.vmem [resolvable:$true] %s326
          %329 = dma.hbm_to_vmem [thread:$0]  %s3, 16, %s327, [#allocation9]
        $region20: #{decoder.7} parent=11 // pred_fallthru
          _
        // Predicated region
        $region21: #{decoder.7} parent=11 // pred_check
          %p330 = pneg %p158
        $region22: #{decoder.7} parent=11 // pred_check_branch
          %332 = sbr.rel (%p330) target = $region24
        $region23: #{decoder.7} parent=11 // pred_region
          %s334 = ssub.s32 256, 256
          %335 = vsyncadd [#allocation9], %s334
          %s336 = sshll.u32 [#allocation10], 4
          %s337 = int_to_ptr.vmem [resolvable:$true] %s336
          %342 = dma.hbm_to_vmem [thread:$0]  %s4, 256, %s337, [#allocation9], 64, 64, 4
        $region24: #{decoder.7} parent=11 // pred_fallthru
          _
        // Predicated region
        $region25: #{decoder.7} parent=11 // pred_check
          %p343 = pneg %p179
        $region26: #{decoder.7} parent=11 // pred_check_branch
          %345 = sbr.rel (%p343) target = $region28
        $region27: #{decoder.7} parent=11 // pred_region
          %s347 = ssub.s32 16, 16
          %348 = vsyncadd [#allocation12], %s347
          %s350 = sshll.u32 [#allocation11], 4
          %s351 = int_to_ptr.vmem [resolvable:$true] %s350
          %353 = dma.hbm_to_vmem [thread:$0]  %s5, 16, %s351, [#allocation12]
        $region28: #{decoder.7} parent=11 // pred_fallthru
          _
        // Predicated region
        $region29: #{decoder.7} parent=11 // pred_check
          %p354 = pneg %p200
        $region30: #{decoder.7} parent=11 // pred_check_branch
          %356 = sbr.rel (%p354) target = $region32
        $region31: #{decoder.7} parent=11 // pred_region
          %s358 = ssub.s32 256, 256
          %359 = vsyncadd [#allocation12], %s358
          %s360 = sshll.u32 [#allocation13], 4
          %s361 = int_to_ptr.vmem [resolvable:$true] %s360
          %366 = dma.hbm_to_vmem [thread:$0]  %s6, 256, %s361, [#allocation12], 64, 64, 4
        $region32: #{decoder.7} parent=11 // pred_fallthru
          _
        // Predicated region
        $region33: #{decoder.7} parent=11 // pred_check
          %p367 = pneg %p221
        $region34: #{decoder.7} parent=11 // pred_check_branch
          %369 = sbr.rel (%p367) target = $region36
        $region35: #{decoder.7} parent=11 // pred_region
          %s371 = ssub.s32 16, 16
          %372 = vsyncadd [#allocation15], %s371
          %s374 = sshll.u32 [#allocation14], 4
          %s375 = int_to_ptr.vmem [resolvable:$true] %s374
          %377 = dma.hbm_to_vmem [thread:$0]  %s7, 16, %s375, [#allocation15]
        $region36: #{decoder.7} parent=11 // pred_fallthru
          _
        // Predicated region
        $region37: #{decoder.7} parent=11 // pred_check
          %p378 = pneg %p242
        $region38: #{decoder.7} parent=11 // pred_check_branch
          %380 = sbr.rel (%p378) target = $region40
        $region39: #{decoder.7} parent=11 // pred_region
          %s382 = ssub.s32 16, 16
          %383 = vsyncadd [#allocation15], %s382
          %s385 = sshll.u32 [#allocation16], 4
          %s386 = int_to_ptr.vmem [resolvable:$true] %s385
          %388 = dma.hbm_to_vmem [thread:$0]  %s8, 16, %s386, [#allocation15]
        $region40: #{decoder.7} parent=11 // pred_fallthru
          _
        // Predicated region
        $region41: #{decoder.7} parent=11 // pred_check
          %p389 = pneg %p263
        $region42: #{decoder.7} parent=11 // pred_check_branch
          %391 = sbr.rel (%p389) target = $region44
        $region43: #{decoder.7} parent=11 // pred_region
          %s393 = ssub.s32 16, 16
          %394 = vsyncadd [#allocation18], %s393
          %s396 = sshll.u32 [#allocation17], 4
          %s397 = int_to_ptr.vmem [resolvable:$true] %s396
          %399 = dma.hbm_to_vmem [thread:$0]  %s9, 16, %s397, [#allocation18]
        $region44: #{decoder.7} parent=11 // pred_fallthru
          _
      $region12: #{decoder.7} parent=5 // pred_fallthru
        _
      %p400 = scmp.lt.s32.totalorder %s29, 2
      // Predicated region
      $region45: #{decoder.7} parent=5 // pred_check
        %p401 = pneg %p400
      $region46: #{decoder.7} parent=5 // pred_check_branch
        %403 = sbr.rel (%p401) target = $region48
      $region47: #{decoder.7} parent=5 // pred_region
        // Predicated region
        $region49: #{decoder.7} parent=47 // pred_check
          %p404 = pneg %p63
        $region50: #{decoder.7} parent=47 // pred_check_branch
          %406 = sbr.rel (%p404) target = $region52
        $region51: #{decoder.7} parent=47 // pred_region
          %s407 = sand.u32 %s53, 1
          %s408 = scalar_lea.sflag [#allocation3], %s407
          %s409 = sand.u32 %s53, 1
          %s410 = smul.addr %s409, 8
          %s411 = scalar_lea.vmem [#allocation2], %s410
          %s413 = ssub.s32 128, 128
          %414 = vsyncadd %s408, %s413
          %s415 = sadd.s32 %s37, %s36
          %s416 = smul.addr %s415, 128
          %s417 = scalar_lea.hbm %s0, %s416
          %s419 = sshll.u32 %s411, 4
          %s420 = int_to_ptr.vmem [resolvable:$true] %s419
          %422 = dma.hbm_to_vmem [thread:$0]  %s417, 128, %s420, %s408
        $region52: #{decoder.7} parent=47 // pred_fallthru
          _
        // Predicated region
        $region53: #{decoder.7} parent=47 // pred_check
          %p423 = pneg %p89
        $region54: #{decoder.7} parent=47 // pred_check_branch
          %425 = sbr.rel (%p423) target = $region56
        $region55: #{decoder.7} parent=47 // pred_region
          %s426 = sand.u32 %s29, 1
          %s427 = scalar_lea.sflag [#allocation6], %s426
          %s428 = sand.u32 %s79, 1
          %s429 = smul.addr %s428, 8
          %s430 = scalar_lea.vmem [#allocation5], %s429
          %s432 = ssub.s32 128, 128
          %433 = vsyncadd %s427, %s432
          %s434 = smul.addr %s36, 128
          %s435 = scalar_lea.hbm %s1, %s434
          %s437 = sshll.u32 %s430, 4
          %s438 = int_to_ptr.vmem [resolvable:$true] %s437
          %440 = dma.hbm_to_vmem [thread:$0]  %s435, 128, %s438, %s427
        $region56: #{decoder.7} parent=47 // pred_fallthru
          _
      $region48: #{decoder.7} parent=5 // pred_fallthru
        _
      %p441 = scmp.le.s32.totalorder 1, %s29
      %p442 = scmp.lt.s32.totalorder %s29, 3
      %p443 = pnand %p441, %p442
      %p444 = pneg %p443
      // Predicated region
      $region57: #{decoder.7} parent=5 // pred_check
        _
      $region58: #{decoder.7} parent=5 // pred_check_branch
        %446 = sbr.rel (%p443) target = $region60
      $region59: #{decoder.7} parent=5 // pred_region
        %s447 = ssub.s32 %s29, 1
        %s448 = sand.u32 %s56, 1
        %s449 = scalar_lea.sflag [#allocation3], %s448
        %s450 = sand.u32 %s56, 1
        %s451 = smul.addr %s450, 8
        %s452 = scalar_lea.vmem [#allocation2], %s451
        // Predicated region
        $region61: #{decoder.7} parent=59 // pred_check
          %p453 = pneg %p69
        $region62: #{decoder.7} parent=59 // pred_check_branch
          %455 = sbr.rel (%p453) target = $region64
        $region63: #{decoder.7} parent=59 // pred_region
          %456 = dma.done %s449, 128
        $region64: #{decoder.7} parent=59 // pred_fallthru
          _
        %s457 = sand.u32 %s34, 1
        %s458 = scalar_lea.sflag [#allocation6], %s457
        %s459 = sand.u32 %s82, 1
        %s460 = smul.addr %s459, 8
        %s461 = scalar_lea.vmem [#allocation5], %s460
        // Predicated region
        $region65: #{decoder.7} parent=59 // pred_check
          %p462 = pneg %p95
        $region66: #{decoder.7} parent=59 // pred_check_branch
          %464 = sbr.rel (%p462) target = $region68
        $region67: #{decoder.7} parent=59 // pred_region
          %465 = dma.done %s458, 128
        $region68: #{decoder.7} parent=59 // pred_fallthru
          _
        // Predicated region
        $region69: #{decoder.7} parent=59 // pred_check
          %p466 = pneg %p116
        $region70: #{decoder.7} parent=59 // pred_check_branch
          %468 = sbr.rel (%p466) target = $region72
        $region71: #{decoder.7} parent=59 // pred_region
          %469 = dma.done [#allocation6], 256
        $region72: #{decoder.7} parent=59 // pred_fallthru
          _
        // Predicated region
        $region73: #{decoder.7} parent=59 // pred_check
          %p470 = pneg %p137
        $region74: #{decoder.7} parent=59 // pred_check_branch
          %472 = sbr.rel (%p470) target = $region76
        $region75: #{decoder.7} parent=59 // pred_region
          %473 = dma.done [#allocation9], 16
        $region76: #{decoder.7} parent=59 // pred_fallthru
          _
        // Predicated region
        $region77: #{decoder.7} parent=59 // pred_check
          %p474 = pneg %p158
        $region78: #{decoder.7} parent=59 // pred_check_branch
          %476 = sbr.rel (%p474) target = $region80
        $region79: #{decoder.7} parent=59 // pred_region
          %477 = dma.done [#allocation9], 256
        $region80: #{decoder.7} parent=59 // pred_fallthru
          _
        // Predicated region
        $region81: #{decoder.7} parent=59 // pred_check
          %p478 = pneg %p179
        $region82: #{decoder.7} parent=59 // pred_check_branch
          %480 = sbr.rel (%p478) target = $region84
        $region83: #{decoder.7} parent=59 // pred_region
          %481 = dma.done [#allocation12], 16
        $region84: #{decoder.7} parent=59 // pred_fallthru
          _
        // Predicated region
        $region85: #{decoder.7} parent=59 // pred_check
          %p482 = pneg %p200
        $region86: #{decoder.7} parent=59 // pred_check_branch
          %484 = sbr.rel (%p482) target = $region88
        $region87: #{decoder.7} parent=59 // pred_region
          %485 = dma.done [#allocation12], 256
        $region88: #{decoder.7} parent=59 // pred_fallthru
          _
        // Predicated region
        $region89: #{decoder.7} parent=59 // pred_check
          %p486 = pneg %p221
        $region90: #{decoder.7} parent=59 // pred_check_branch
          %488 = sbr.rel (%p486) target = $region92
        $region91: #{decoder.7} parent=59 // pred_region
          %489 = dma.done [#allocation15], 16
        $region92: #{decoder.7} parent=59 // pred_fallthru
          _
        // Predicated region
        $region93: #{decoder.7} parent=59 // pred_check
          %p490 = pneg %p242
        $region94: #{decoder.7} parent=59 // pred_check_branch
          %492 = sbr.rel (%p490) target = $region96
        $region95: #{decoder.7} parent=59 // pred_region
          %493 = dma.done [#allocation15], 16
        $region96: #{decoder.7} parent=59 // pred_fallthru
          _
        // Predicated region
        $region97: #{decoder.7} parent=59 // pred_check
          %p494 = pneg %p263
        $region98: #{decoder.7} parent=59 // pred_check_branch
          %496 = sbr.rel (%p494) target = $region100
        $region99: #{decoder.7} parent=59 // pred_region
          %497 = dma.done [#allocation18], 16
        $region100: #{decoder.7} parent=59 // pred_fallthru
          _
        %s498 = sand.u32 %s56, 1
        %s499 = scalar_lea.sflag [#allocation3], %s498
        %s500 = sand.u32 %s56, 1
        %s501 = smul.addr %s500, 8
        %s502 = scalar_lea.vmem [#allocation2], %s501
        %p503 = pneg %p69
        %p504 = pneg %p66
        %s505 = sand.u32 %s34, 1
        %s506 = scalar_lea.sflag [#allocation6], %s505
        %s507 = sand.u32 %s82, 1
        %s508 = smul.addr %s507, 8
        %s509 = scalar_lea.vmem [#allocation5], %s508
        %p510 = pneg %p95
        %p511 = pneg %p92
        %p512 = pneg %p116
        %p513 = pneg %p113
        %p514 = pneg %p137
        %p515 = pneg %p134
        %p516 = pneg %p158
        %p517 = pneg %p155
        %p518 = pneg %p179
        %p519 = pneg %p176
        %p520 = pneg %p200
        %p521 = pneg %p197
        %p522 = pneg %p221
        %p523 = pneg %p218
        %p524 = pneg %p242
        %p525 = pneg %p239
        %p526 = pneg %p263
        %p527 = pneg %p260
        %p528 = pneg %p291
        %p529 = pneg %p288
        %s530 = sand.u32 %s278, 1
        %s531 = scalar_lea.sflag [#allocation4], %s530
        %s532 = sand.u32 %s278, 1
        %s533 = smul.addr %s532, 8
        %s534 = scalar_lea.vmem [#allocation19], %s533
        %v536 = vld [vmem:[%s452] sm:$0xff]
        %v537 = vld [vmem:[%s461] sm:$0xff]
        %v538 = vpack.c.bf16 %v536, %v536
        %v539 = vld [vmem:[#allocation7] sm:$0xf]
        %v540 = vld [vmem:[#allocation7 + $0x4] sm:$0xf]
        %v541 = vld [vmem:[#allocation7 + $0x8] sm:$0xf]
        %v542 = vld [vmem:[#allocation7 + $0xc] sm:$0xf]
        %v543 = vld [vmem:[#allocation8] sm:$0x1]
        %v545 = vlaneseq
        %v546 = vshrl.u32 %v545, 7
        %v547 = vsub.s32 0, %v546
        %v548 = vrot.slane %v543, %v547
        %v554 = vunpack.c.l.b16 %v539
        %v555 = vunpack.c.l.b16 %v540
        %v556 = vunpack.c.l.b16 %v541
        %v557 = vunpack.c.l.b16 %v542
        %v558 = vpack.c.b16 %v555, %v554
        %v559 = vpack.c.b16 %v557, %v556
        %vm562 = vcmask 261120
        %v564 = vsel %vm562, %v538, 0
        %566 = vmatprep.subr.bf16.mxu0 0
        %567 = vmatpush1.bf16.msra.mxu0 %v558
        %568 = vmatprep.subr.bf16.mxu0 0
        %569 = vmatpush1.bf16.msra.mxu0 %v559
        %570 = vmatprep.subr.bf16.mxu0 0
        %571 = vmatpush1.bf16.msra.mxu0 0
        %572 = vmatprep.subr.bf16.mxu0 0
        %573 = vmatpush1.bf16.msra.mxu0 0
        %574 = vmatprep.subr.bf16.mxu0 0
        %575 = vmatpush1.bf16.msra.mxu0 0
        %576 = vmatprep.subr.bf16.mxu0 0
        %577 = vmatpush1.bf16.msra.mxu0 0
        %578 = vmatprep.subr.bf16.mxu0 0
        %579 = vmatpush1.bf16.msra.mxu0 0
        %580 = vmatprep.subr.bf16.mxu0 0
        %581 = vmatpush1.bf16.msra.mxu0 0
        %582 = vmatprep.subr.bf16.mxu0 0
        %583 = vmatpush1.bf16.msra.mxu0 0
        %584 = vmatprep.subr.bf16.mxu0 0
        %585 = vmatpush1.bf16.msra.mxu0 0
        %586 = vmatprep.subr.bf16.mxu0 0
        %587 = vmatpush1.bf16.msra.mxu0 0
        %588 = vmatprep.subr.bf16.mxu0 0
        %589 = vmatpush1.bf16.msra.mxu0 0
        %590 = vmatprep.subr.bf16.mxu0 0
        %591 = vmatpush1.bf16.msra.mxu0 0
        %592 = vmatprep.subr.bf16.mxu0 0
        %593 = vmatpush1.bf16.msra.mxu0 0
        %594 = vmatprep.subr.bf16.mxu0 0
        %595 = vmatpush1.bf16.msra.mxu0 0
        %596 = vmatprep.subr.bf16.mxu0 0
        %597 = vmatpush1.bf16.msra.mxu0 0
        %598 = vmatprep.mubr.bf16.mxu0 0
        %599 = vmatmul.mubr.bf16.gmra.mrb[0].mxu0 %v564
        %v600 = vpop.f32.mrb[0].mxu0
        %v601 = vadd.f32 %v548, %v600
        %v602 = vpop.f32.mrb[0].mxu0
        %v603 = vpop.f32.mrb[0].mxu0
        %v604 = vpop.f32.mrb[0].mxu0
        %605 = vdwg.mxu0
        %v606 = vpack.c.bf16 %v537, %v537
        %v607 = vld [vmem:[#allocation10] sm:$0xf]
        %v608 = vld [vmem:[#allocation10 + $0x4] sm:$0xf]
        %v609 = vld [vmem:[#allocation10 + $0x8] sm:$0xf]
        %v610 = vld [vmem:[#allocation10 + $0xc] sm:$0xf]
        %v611 = vld [vmem:[#allocation11] sm:$0x1]
        %v613 = vlaneseq
        %v614 = vshrl.u32 %v613, 7
        %v615 = vsub.s32 0, %v614
        %v616 = vrot.slane %v611, %v615
        %v622 = vunpack.c.l.b16 %v607
        %v623 = vunpack.c.l.b16 %v608
        %v624 = vunpack.c.l.b16 %v609
        %v625 = vunpack.c.l.b16 %v610
        %v626 = vpack.c.b16 %v623, %v622
        %v627 = vpack.c.b16 %v625, %v624
        %v631 = vsel %vm562, %v606, 0
        %633 = vmatprep.subr.bf16.mxu0 0
        %634 = vmatpush1.bf16.msra.mxu0 %v626
        %635 = vmatprep.subr.bf16.mxu0 0
        %636 = vmatpush1.bf16.msra.mxu0 %v627
        %637 = vmatprep.subr.bf16.mxu0 0
        %638 = vmatpush1.bf16.msra.mxu0 0
        %639 = vmatprep.subr.bf16.mxu0 0
        %640 = vmatpush1.bf16.msra.mxu0 0
        %641 = vmatprep.subr.bf16.mxu0 0
        %642 = vmatpush1.bf16.msra.mxu0 0
        %643 = vmatprep.subr.bf16.mxu0 0
        %644 = vmatpush1.bf16.msra.mxu0 0
        %645 = vmatprep.subr.bf16.mxu0 0
        %646 = vmatpush1.bf16.msra.mxu0 0
        %647 = vmatprep.subr.bf16.mxu0 0
        %648 = vmatpush1.bf16.msra.mxu0 0
        %649 = vmatprep.subr.bf16.mxu0 0
        %650 = vmatpush1.bf16.msra.mxu0 0
        %651 = vmatprep.subr.bf16.mxu0 0
        %652 = vmatpush1.bf16.msra.mxu0 0
        %653 = vmatprep.subr.bf16.mxu0 0
        %654 = vmatpush1.bf16.msra.mxu0 0
        %655 = vmatprep.subr.bf16.mxu0 0
        %656 = vmatpush1.bf16.msra.mxu0 0
        %657 = vmatprep.subr.bf16.mxu0 0
        %658 = vmatpush1.bf16.msra.mxu0 0
        %659 = vmatprep.subr.bf16.mxu0 0
        %660 = vmatpush1.bf16.msra.mxu0 0
        %661 = vmatprep.subr.bf16.mxu0 0
        %662 = vmatpush1.bf16.msra.mxu0 0
        %663 = vmatprep.subr.bf16.mxu0 0
        %664 = vmatpush1.bf16.msra.mxu0 0
        %665 = vmatprep.mubr.bf16.mxu0 0
        %666 = vmatmul.mubr.bf16.gmra.mrb[0].mxu0 %v631
        %v667 = vpop.f32.mrb[0].mxu0
        %v668 = vadd.f32 %v616, %v667
        %v669 = vpop.f32.mrb[0].mxu0
        %v670 = vpop.f32.mrb[0].mxu0
        %v671 = vpop.f32.mrb[0].mxu0
        %672 = vdwg.mxu0
        %v673 = vmul.f32 %v601, 0.35355338
        %v674 = vpack.c.bf16 %v673, %v673
        %676 = vrot.lane.b32.xlu0 %v674, 120
        %v677 = vpop.permute.xlu0 %676
        %678 = vrot.lane.b32.xlu0 %v674, 112
        %v679 = vpop.permute.xlu0 %678
        %680 = vrot.lane.b32.xlu0 %v674, 104
        %v681 = vpop.permute.xlu0 %680
        %v683 = vunpack.c.l.s4 1983009808
        %v684 = vunpack.c.0.s8 %v683
        %v685 = vlaneseq
        %v686 = vshrl.u32 %v685, 7
        %v687 = vsub.s32 %v684, %v686
        %v688 = vrot.slane %v674, %v687
        %v691 = vunpack.c.l.s4 1983009808
        %v692 = vunpack.c.0.s8 %v691
        %v693 = vlaneseq
        %v694 = vshrl.u32 %v693, 7
        %v695 = vsub.s32 %v692, %v694
        %v696 = vrot.slane %v679, %v695
        %v697 = vcombine.low %v688, %v696
        %v698 = vcombine.high %v688, %v696
        %v700 = vunpack.c.l.s4 1934713408
        %v701 = vunpack.c.0.s8 %v700
        %v702 = vlaneseq
        %v703 = vshrl.u32 %v702, 7
        %v704 = vsub.s32 %v701, %v703
        %v705 = vrot.slane %v697, %v704
        %v707 = vunpack.c.l.s4 1934713408
        %v708 = vunpack.c.0.s8 %v707
        %v709 = vlaneseq
        %v710 = vshrl.u32 %v709, 7
        %v711 = vsub.s32 %v708, %v710
        %v712 = vrot.slane %v698, %v711
        %v713 = vcombine.high %v705, 0
        %v714 = vcombine.high %v712, 0
        %v717 = vunpack.c.l.s4 1983009808
        %v718 = vunpack.c.0.s8 %v717
        %v719 = vlaneseq
        %v720 = vshrl.u32 %v719, 7
        %v721 = vsub.s32 %v718, %v720
        %v722 = vrot.slane %v677, %v721
        %v725 = vunpack.c.l.s4 1983009808
        %v726 = vunpack.c.0.s8 %v725
        %v727 = vlaneseq
        %v728 = vshrl.u32 %v727, 7
        %v729 = vsub.s32 %v726, %v728
        %v730 = vrot.slane %v681, %v729
        %v731 = vcombine.low %v722, %v730
        %v732 = vcombine.high %v722, %v730
        %v734 = vunpack.c.l.s4 1934713408
        %v735 = vunpack.c.0.s8 %v734
        %v736 = vlaneseq
        %v737 = vshrl.u32 %v736, 7
        %v738 = vsub.s32 %v735, %v737
        %v739 = vrot.slane %v731, %v738
        %v741 = vunpack.c.l.s4 1934713408
        %v742 = vunpack.c.0.s8 %v741
        %v743 = vlaneseq
        %v744 = vshrl.u32 %v743, 7
        %v745 = vsub.s32 %v742, %v744
        %v746 = vrot.slane %v732, %v745
        %v747 = vcombine.high %v739, 0
        %v748 = vcombine.high %v746, 0
        %v751 = vpack.i.b16 %v739, %v705
        %v753 = vshrl.u32 %v705, 16
        %v754 = vshrl.u32 %v739, 16
        %v755 = vpack.i.b16 %v754, %v753
        %v759 = vpack.i.b16 %v747, %v713
        %v761 = vshrl.u32 %v713, 16
        %v762 = vshrl.u32 %v747, 16
        %v763 = vpack.i.b16 %v762, %v761
        %v767 = vpack.i.b16 %v746, %v712
        %v769 = vshrl.u32 %v712, 16
        %v770 = vshrl.u32 %v746, 16
        %v771 = vpack.i.b16 %v770, %v769
        %v775 = vpack.i.b16 %v748, %v714
        %v777 = vshrl.u32 %v714, 16
        %v778 = vshrl.u32 %v748, 16
        %v779 = vpack.i.b16 %v778, %v777
        %v781 = vcombine.low %v751, %v767
        %v783 = vunpack.c.l.s4 1983009808
        %v784 = vunpack.c.0.s8 %v783
        %v785 = vlaneseq
        %v786 = vshrl.u32 %v785, 7
        %v787 = vsub.s32 %v784, %v786
        %v788 = vrot.slane %v781, %v787
        %v789 = vcombine.low %v759, %v775
        %v791 = vunpack.c.l.s4 1983009808
        %v792 = vunpack.c.0.s8 %v791
        %v793 = vlaneseq
        %v794 = vshrl.u32 %v793, 7
        %v795 = vsub.s32 %v792, %v794
        %v796 = vrot.slane %v789, %v795
        %v797 = vcombine.low %v788, %v796
        %v799 = vunpack.c.l.s4 1934713408
        %v800 = vunpack.c.0.s8 %v799
        %v801 = vlaneseq
        %v802 = vshrl.u32 %v801, 7
        %v803 = vsub.s32 %v800, %v802
        %v804 = vrot.slane %v797, %v803
        %v805 = vcombine.high %v804, 0
        %v806 = vcombine.low %v755, %v771
        %v808 = vunpack.c.l.s4 1983009808
        %v809 = vunpack.c.0.s8 %v808
        %v810 = vlaneseq
        %v811 = vshrl.u32 %v810, 7
        %v812 = vsub.s32 %v809, %v811
        %v813 = vrot.slane %v806, %v812
        %v814 = vcombine.low %v763, %v779
        %v816 = vunpack.c.l.s4 1983009808
        %v817 = vunpack.c.0.s8 %v816
        %v818 = vlaneseq
        %v819 = vshrl.u32 %v818, 7
        %v820 = vsub.s32 %v817, %v819
        %v821 = vrot.slane %v814, %v820
        %v822 = vcombine.low %v813, %v821
        %v824 = vunpack.c.l.s4 1934713408
        %v825 = vunpack.c.0.s8 %v824
        %v826 = vlaneseq
        %v827 = vshrl.u32 %v826, 7
        %v828 = vsub.s32 %v825, %v827
        %v829 = vrot.slane %v822, %v828
        %v830 = vcombine.high %v829, 0
        %v833 = vpack.i.b16 %v829, %v804
        %v834 = vshrl.u32 %v804, 16
        %v835 = vshrl.u32 %v829, 16
        %v836 = vpack.i.b16 %v835, %v834
        %v839 = vpack.i.b16 %v830, %v805
        %v840 = vshrl.u32 %v805, 16
        %v841 = vshrl.u32 %v830, 16
        %v842 = vpack.i.b16 %v841, %v840
        %v843 = vpack.c.bf16 %v668, %v668
        %845 = vrot.lane.b32.xlu0 %v843, 120
        %v846 = vpop.permute.xlu0 %845
        %847 = vrot.lane.b32.xlu0 %v843, 112
        %v848 = vpop.permute.xlu0 %847
        %849 = vrot.lane.b32.xlu0 %v843, 104
        %v850 = vpop.permute.xlu0 %849
        %v852 = vunpack.c.l.s4 1983009808
        %v853 = vunpack.c.0.s8 %v852
        %v854 = vlaneseq
        %v855 = vshrl.u32 %v854, 7
        %v856 = vsub.s32 %v853, %v855
        %v857 = vrot.slane %v843, %v856
        %v860 = vunpack.c.l.s4 1983009808
        %v861 = vunpack.c.0.s8 %v860
        %v862 = vlaneseq
        %v863 = vshrl.u32 %v862, 7
        %v864 = vsub.s32 %v861, %v863
        %v865 = vrot.slane %v848, %v864
        %v866 = vcombine.low %v857, %v865
        %v867 = vcombine.high %v857, %v865
        %v869 = vunpack.c.l.s4 1934713408
        %v870 = vunpack.c.0.s8 %v869
        %v871 = vlaneseq
        %v872 = vshrl.u32 %v871, 7
        %v873 = vsub.s32 %v870, %v872
        %v874 = vrot.slane %v866, %v873
        %v876 = vunpack.c.l.s4 1934713408
        %v877 = vunpack.c.0.s8 %v876
        %v878 = vlaneseq
        %v879 = vshrl.u32 %v878, 7
        %v880 = vsub.s32 %v877, %v879
        %v881 = vrot.slane %v867, %v880
        %v882 = vcombine.high %v874, 0
        %v883 = vcombine.high %v881, 0
        %v886 = vunpack.c.l.s4 1983009808
        %v887 = vunpack.c.0.s8 %v886
        %v888 = vlaneseq
        %v889 = vshrl.u32 %v888, 7
        %v890 = vsub.s32 %v887, %v889
        %v891 = vrot.slane %v846, %v890
        %v894 = vunpack.c.l.s4 1983009808
        %v895 = vunpack.c.0.s8 %v894
        %v896 = vlaneseq
        %v897 = vshrl.u32 %v896, 7
        %v898 = vsub.s32 %v895, %v897
        %v899 = vrot.slane %v850, %v898
        %v900 = vcombine.low %v891, %v899
        %v901 = vcombine.high %v891, %v899
        %v903 = vunpack.c.l.s4 1934713408
        %v904 = vunpack.c.0.s8 %v903
        %v905 = vlaneseq
        %v906 = vshrl.u32 %v905, 7
        %v907 = vsub.s32 %v904, %v906
        %v908 = vrot.slane %v900, %v907
        %v910 = vunpack.c.l.s4 1934713408
        %v911 = vunpack.c.0.s8 %v910
        %v912 = vlaneseq
        %v913 = vshrl.u32 %v912, 7
        %v914 = vsub.s32 %v911, %v913
        %v915 = vrot.slane %v901, %v914
        %v916 = vcombine.high %v908, 0
        %v917 = vcombine.high %v915, 0
        %v920 = vpack.i.b16 %v908, %v874
        %v922 = vshrl.u32 %v874, 16
        %v923 = vshrl.u32 %v908, 16
        %v924 = vpack.i.b16 %v923, %v922
        %v928 = vpack.i.b16 %v916, %v882
        %v930 = vshrl.u32 %v882, 16
        %v931 = vshrl.u32 %v916, 16
        %v932 = vpack.i.b16 %v931, %v930
        %v936 = vpack.i.b16 %v915, %v881
        %v938 = vshrl.u32 %v881, 16
        %v939 = vshrl.u32 %v915, 16
        %v940 = vpack.i.b16 %v939, %v938
        %v944 = vpack.i.b16 %v917, %v883
        %v946 = vshrl.u32 %v883, 16
        %v947 = vshrl.u32 %v917, 16
        %v948 = vpack.i.b16 %v947, %v946
        %v950 = vcombine.low %v920, %v936
        %v952 = vunpack.c.l.s4 1983009808
        %v953 = vunpack.c.0.s8 %v952
        %v954 = vlaneseq
        %v955 = vshrl.u32 %v954, 7
        %v956 = vsub.s32 %v953, %v955
        %v957 = vrot.slane %v950, %v956
        %v958 = vcombine.low %v928, %v944
        %v960 = vunpack.c.l.s4 1983009808
        %v961 = vunpack.c.0.s8 %v960
        %v962 = vlaneseq
        %v963 = vshrl.u32 %v962, 7
        %v964 = vsub.s32 %v961, %v963
        %v965 = vrot.slane %v958, %v964
        %v966 = vcombine.low %v957, %v965
        %v968 = vunpack.c.l.s4 1934713408
        %v969 = vunpack.c.0.s8 %v968
        %v970 = vlaneseq
        %v971 = vshrl.u32 %v970, 7
        %v972 = vsub.s32 %v969, %v971
        %v973 = vrot.slane %v966, %v972
        %v974 = vcombine.high %v973, 0
        %v975 = vcombine.low %v924, %v940
        %v977 = vunpack.c.l.s4 1983009808
        %v978 = vunpack.c.0.s8 %v977
        %v979 = vlaneseq
        %v980 = vshrl.u32 %v979, 7
        %v981 = vsub.s32 %v978, %v980
        %v982 = vrot.slane %v975, %v981
        %v983 = vcombine.low %v932, %v948
        %v985 = vunpack.c.l.s4 1983009808
        %v986 = vunpack.c.0.s8 %v985
        %v987 = vlaneseq
        %v988 = vshrl.u32 %v987, 7
        %v989 = vsub.s32 %v986, %v988
        %v990 = vrot.slane %v983, %v989
        %v991 = vcombine.low %v982, %v990
        %v993 = vunpack.c.l.s4 1934713408
        %v994 = vunpack.c.0.s8 %v993
        %v995 = vlaneseq
        %v996 = vshrl.u32 %v995, 7
        %v997 = vsub.s32 %v994, %v996
        %v998 = vrot.slane %v991, %v997
        %v999 = vcombine.high %v998, 0
        %v1002 = vpack.i.b16 %v998, %v973
        %v1003 = vshrl.u32 %v973, 16
        %v1004 = vshrl.u32 %v998, 16
        %v1005 = vpack.i.b16 %v1004, %v1003
        %v1008 = vpack.i.b16 %v999, %v974
        %v1009 = vshrl.u32 %v974, 16
        %v1010 = vshrl.u32 %v999, 16
        %v1011 = vpack.i.b16 %v1010, %v1009
        %1012 = vrot.lane.b32.xlu0 %v843, 96
        %v1013 = vpop.permute.xlu0 %1012
        %1014 = vrot.lane.b32.xlu0 %v846, 96
        %v1015 = vpop.permute.xlu0 %1014
        %1016 = vrot.lane.b32.xlu0 %v848, 96
        %v1017 = vpop.permute.xlu0 %1016
        %1018 = vrot.lane.b32.xlu0 %v850, 96
        %v1019 = vpop.permute.xlu0 %1018
        %v1022 = vunpack.c.l.s4 1983009808
        %v1023 = vunpack.c.0.s8 %v1022
        %v1024 = vlaneseq
        %v1025 = vshrl.u32 %v1024, 7
        %v1026 = vsub.s32 %v1023, %v1025
        %v1027 = vrot.slane %v1013, %v1026
        %v1030 = vunpack.c.l.s4 1983009808
        %v1031 = vunpack.c.0.s8 %v1030
        %v1032 = vlaneseq
        %v1033 = vshrl.u32 %v1032, 7
        %v1034 = vsub.s32 %v1031, %v1033
        %v1035 = vrot.slane %v1017, %v1034
        %v1036 = vcombine.low %v1027, %v1035
        %v1037 = vcombine.high %v1027, %v1035
        %v1039 = vunpack.c.l.s4 1934713408
        %v1040 = vunpack.c.0.s8 %v1039
        %v1041 = vlaneseq
        %v1042 = vshrl.u32 %v1041, 7
        %v1043 = vsub.s32 %v1040, %v1042
        %v1044 = vrot.slane %v1036, %v1043
        %v1046 = vunpack.c.l.s4 1934713408
        %v1047 = vunpack.c.0.s8 %v1046
        %v1048 = vlaneseq
        %v1049 = vshrl.u32 %v1048, 7
        %v1050 = vsub.s32 %v1047, %v1049
        %v1051 = vrot.slane %v1037, %v1050
        %v1052 = vcombine.high %v1044, 0
        %v1053 = vcombine.high %v1051, 0
        %v1056 = vunpack.c.l.s4 1983009808
        %v1057 = vunpack.c.0.s8 %v1056
        %v1058 = vlaneseq
        %v1059 = vshrl.u32 %v1058, 7
        %v1060 = vsub.s32 %v1057, %v1059
        %v1061 = vrot.slane %v1015, %v1060
        %v1064 = vunpack.c.l.s4 1983009808
        %v1065 = vunpack.c.0.s8 %v1064
        %v1066 = vlaneseq
        %v1067 = vshrl.u32 %v1066, 7
        %v1068 = vsub.s32 %v1065, %v1067
        %v1069 = vrot.slane %v1019, %v1068
        %v1070 = vcombine.low %v1061, %v1069
        %v1071 = vcombine.high %v1061, %v1069
        %v1073 = vunpack.c.l.s4 1934713408
        %v1074 = vunpack.c.0.s8 %v1073
        %v1075 = vlaneseq
        %v1076 = vshrl.u32 %v1075, 7
        %v1077 = vsub.s32 %v1074, %v1076
        %v1078 = vrot.slane %v1070, %v1077
        %v1080 = vunpack.c.l.s4 1934713408
        %v1081 = vunpack.c.0.s8 %v1080
        %v1082 = vlaneseq
        %v1083 = vshrl.u32 %v1082, 7
        %v1084 = vsub.s32 %v1081, %v1083
        %v1085 = vrot.slane %v1071, %v1084
        %v1086 = vcombine.high %v1078, 0
        %v1087 = vcombine.high %v1085, 0
        %v1090 = vpack.i.b16 %v1078, %v1044
        %v1092 = vshrl.u32 %v1044, 16
        %v1093 = vshrl.u32 %v1078, 16
        %v1094 = vpack.i.b16 %v1093, %v1092
        %v1098 = vpack.i.b16 %v1086, %v1052
        %v1100 = vshrl.u32 %v1052, 16
        %v1101 = vshrl.u32 %v1086, 16
        %v1102 = vpack.i.b16 %v1101, %v1100
        %v1106 = vpack.i.b16 %v1085, %v1051
        %v1108 = vshrl.u32 %v1051, 16
        %v1109 = vshrl.u32 %v1085, 16
        %v1110 = vpack.i.b16 %v1109, %v1108
        %v1114 = vpack.i.b16 %v1087, %v1053
        %v1116 = vshrl.u32 %v1053, 16
        %v1117 = vshrl.u32 %v1087, 16
        %v1118 = vpack.i.b16 %v1117, %v1116
        %v1120 = vcombine.low %v1090, %v1106
        %v1122 = vunpack.c.l.s4 1983009808
        %v1123 = vunpack.c.0.s8 %v1122
        %v1124 = vlaneseq
        %v1125 = vshrl.u32 %v1124, 7
        %v1126 = vsub.s32 %v1123, %v1125
        %v1127 = vrot.slane %v1120, %v1126
        %v1128 = vcombine.low %v1098, %v1114
        %v1130 = vunpack.c.l.s4 1983009808
        %v1131 = vunpack.c.0.s8 %v1130
        %v1132 = vlaneseq
        %v1133 = vshrl.u32 %v1132, 7
        %v1134 = vsub.s32 %v1131, %v1133
        %v1135 = vrot.slane %v1128, %v1134
        %v1136 = vcombine.low %v1127, %v1135
        %v1138 = vunpack.c.l.s4 1934713408
        %v1139 = vunpack.c.0.s8 %v1138
        %v1140 = vlaneseq
        %v1141 = vshrl.u32 %v1140, 7
        %v1142 = vsub.s32 %v1139, %v1141
        %v1143 = vrot.slane %v1136, %v1142
        %v1144 = vcombine.high %v1143, 0
        %v1145 = vcombine.low %v1094, %v1110
        %v1147 = vunpack.c.l.s4 1983009808
        %v1148 = vunpack.c.0.s8 %v1147
        %v1149 = vlaneseq
        %v1150 = vshrl.u32 %v1149, 7
        %v1151 = vsub.s32 %v1148, %v1150
        %v1152 = vrot.slane %v1145, %v1151
        %v1153 = vcombine.low %v1102, %v1118
        %v1155 = vunpack.c.l.s4 1983009808
        %v1156 = vunpack.c.0.s8 %v1155
        %v1157 = vlaneseq
        %v1158 = vshrl.u32 %v1157, 7
        %v1159 = vsub.s32 %v1156, %v1158
        %v1160 = vrot.slane %v1153, %v1159
        %v1161 = vcombine.low %v1152, %v1160
        %v1163 = vunpack.c.l.s4 1934713408
        %v1164 = vunpack.c.0.s8 %v1163
        %v1165 = vlaneseq
        %v1166 = vshrl.u32 %v1165, 7
        %v1167 = vsub.s32 %v1164, %v1166
        %v1168 = vrot.slane %v1161, %v1167
        %v1169 = vcombine.high %v1168, 0
        %v1172 = vpack.i.b16 %v1168, %v1143
        %v1173 = vshrl.u32 %v1143, 16
        %v1174 = vshrl.u32 %v1168, 16
        %v1175 = vpack.i.b16 %v1174, %v1173
        %v1178 = vpack.i.b16 %v1169, %v1144
        %v1179 = vshrl.u32 %v1144, 16
        %v1180 = vshrl.u32 %v1169, 16
        %v1181 = vpack.i.b16 %v1180, %v1179
        %vm1182 = vcmask 64512
        %v1184 = vsel %vm1182, %v833, 0
        %v1187 = vsel %vm1182, %v1002, 0
        %1189 = vmatprep.subr.bf16.mxu0 0
        %1190 = vmatpush1.bf16.xpose.msra.mxu0 %v1187
        %1191 = vmatprep.subr.bf16.mxu0 0
        %1192 = vmatpush1.bf16.xpose.msra.mxu0 0
        %1193 = vmatprep.subr.bf16.mxu0 0
        %1194 = vmatpush1.bf16.xpose.msra.mxu0 0
        %1195 = vmatprep.subr.bf16.mxu0 0
        %1196 = vmatpush1.bf16.xpose.msra.mxu0 0
        %1197 = vmatprep.subr.bf16.mxu0 0
        %1198 = vmatpush1.bf16.xpose.msra.mxu0 0
        %1199 = vmatprep.subr.bf16.mxu0 0
        %1200 = vmatpush1.bf16.xpose.msra.mxu0 0
        %1201 = vmatprep.subr.bf16.mxu0 0
        %1202 = vmatpush1.bf16.xpose.msra.mxu0 0
        %1203 = vmatprep.subr.bf16.mxu0 0
        %1204 = vmatpush1.bf16.xpose.msra.mxu0 0
        %1205 = vmatprep.subr.bf16.mxu0 0
        %1206 = vmatpush1.bf16.xpose.msra.mxu0 0
        %1207 = vmatprep.subr.bf16.mxu0 0
        %1208 = vmatpush1.bf16.xpose.msra.mxu0 0
        %1209 = vmatprep.subr.bf16.mxu0 0
        %1210 = vmatpush1.bf16.xpose.msra.mxu0 0
        %1211 = vmatprep.subr.bf16.mxu0 0
        %1212 = vmatpush1.bf16.xpose.msra.mxu0 0
        %1213 = vmatprep.subr.bf16.mxu0 0
        %1214 = vmatpush1.bf16.xpose.msra.mxu0 0
        %1215 = vmatprep.subr.bf16.mxu0 0
        %1216 = vmatpush1.bf16.xpose.msra.mxu0 0
        %1217 = vmatprep.subr.bf16.mxu0 0
        %1218 = vmatpush1.bf16.xpose.msra.mxu0 0
        %1219 = vmatprep.subr.bf16.mxu0 0
        %1220 = vmatpush1.bf16.xpose.msra.mxu0 0
        %1221 = vmatprep.mubr.bf16.mxu0 0
        %1222 = vmatmul.mubr.bf16.gmra.mrb[0].mxu0 %v1184
        %v1223 = vpop.f32.mrb[0].mxu0
        %v1224 = vadd.f32 0.0, %v1223
        %v1225 = vpop.f32.mrb[0].mxu0
        %v1226 = vpop.f32.mrb[0].mxu0
        %v1227 = vpop.f32.mrb[0].mxu0
        %1228 = vdwg.mxu0
        %v1230 = vsel %vm1182, %v836, 0
        %v1233 = vsel %vm1182, %v1005, 0
        %1235 = vmatprep.subr.bf16.mxu0 0
        %1236 = vmatpush1.bf16.xpose.msra.mxu0 %v1233
        %1237 = vmatprep.subr.bf16.mxu0 0
        %1238 = vmatpush1.bf16.xpose.msra.mxu0 0
        %1239 = vmatprep.subr.bf16.mxu0 0
        %1240 = vmatpush1.bf16.xpose.msra.mxu0 0
        %1241 = vmatprep.subr.bf16.mxu0 0
        %1242 = vmatpush1.bf16.xpose.msra.mxu0 0
        %1243 = vmatprep.subr.bf16.mxu0 0
        %1244 = vmatpush1.bf16.xpose.msra.mxu0 0
        %1245 = vmatprep.subr.bf16.mxu0 0
        %1246 = vmatpush1.bf16.xpose.msra.mxu0 0
        %1247 = vmatprep.subr.bf16.mxu0 0
        %1248 = vmatpush1.bf16.xpose.msra.mxu0 0
        %1249 = vmatprep.subr.bf16.mxu0 0
        %1250 = vmatpush1.bf16.xpose.msra.mxu0 0
        %1251 = vmatprep.subr.bf16.mxu0 0
        %1252 = vmatpush1.bf16.xpose.msra.mxu0 0
        %1253 = vmatprep.subr.bf16.mxu0 0
        %1254 = vmatpush1.bf16.xpose.msra.mxu0 0
        %1255 = vmatprep.subr.bf16.mxu0 0
        %1256 = vmatpush1.bf16.xpose.msra.mxu0 0
        %1257 = vmatprep.subr.bf16.mxu0 0
        %1258 = vmatpush1.bf16.xpose.msra.mxu0 0
        %1259 = vmatprep.subr.bf16.mxu0 0
        %1260 = vmatpush1.bf16.xpose.msra.mxu0 0
        %1261 = vmatprep.subr.bf16.mxu0 0
        %1262 = vmatpush1.bf16.xpose.msra.mxu0 0
        %1263 = vmatprep.subr.bf16.mxu0 0
        %1264 = vmatpush1.bf16.xpose.msra.mxu0 0
        %1265 = vmatprep.subr.bf16.mxu0 0
        %1266 = vmatpush1.bf16.xpose.msra.mxu0 0
        %1267 = vmatprep.mubr.bf16.mxu0 0
        %1268 = vmatmul.mubr.bf16.gmra.mrb[0].mxu0 %v1230
        %v1269 = vpop.f32.mrb[0].mxu0
        %v1270 = vadd.f32 0.0, %v1269
        %v1271 = vpop.f32.mrb[0].mxu0
        %v1272 = vpop.f32.mrb[0].mxu0
        %v1273 = vpop.f32.mrb[0].mxu0
        %1274 = vdwg.mxu0
        %v1276 = vsel %vm1182, %v839, 0
        %v1279 = vsel %vm1182, %v1008, 0
        %1281 = vmatprep.subr.bf16.mxu0 0
        %1282 = vmatpush1.bf16.xpose.msra.mxu0 %v1279
        %1283 = vmatprep.subr.bf16.mxu0 0
        %1284 = vmatpush1.bf16.xpose.msra.mxu0 0
        %1285 = vmatprep.subr.bf16.mxu0 0
        %1286 = vmatpush1.bf16.xpose.msra.mxu0 0
        %1287 = vmatprep.subr.bf16.mxu0 0
        %1288 = vmatpush1.bf16.xpose.msra.mxu0 0
        %1289 = vmatprep.subr.bf16.mxu0 0
        %1290 = vmatpush1.bf16.xpose.msra.mxu0 0
        %1291 = vmatprep.subr.bf16.mxu0 0
        %1292 = vmatpush1.bf16.xpose.msra.mxu0 0
        %1293 = vmatprep.subr.bf16.mxu0 0
        %1294 = vmatpush1.bf16.xpose.msra.mxu0 0
        %1295 = vmatprep.subr.bf16.mxu0 0
        %1296 = vmatpush1.bf16.xpose.msra.mxu0 0
        %1297 = vmatprep.subr.bf16.mxu0 0
        %1298 = vmatpush1.bf16.xpose.msra.mxu0 0
        %1299 = vmatprep.subr.bf16.mxu0 0
        %1300 = vmatpush1.bf16.xpose.msra.mxu0 0
        %1301 = vmatprep.subr.bf16.mxu0 0
        %1302 = vmatpush1.bf16.xpose.msra.mxu0 0
        %1303 = vmatprep.subr.bf16.mxu0 0
        %1304 = vmatpush1.bf16.xpose.msra.mxu0 0
        %1305 = vmatprep.subr.bf16.mxu0 0
        %1306 = vmatpush1.bf16.xpose.msra.mxu0 0
        %1307 = vmatprep.subr.bf16.mxu0 0
        %1308 = vmatpush1.bf16.xpose.msra.mxu0 0
        %1309 = vmatprep.subr.bf16.mxu0 0
        %1310 = vmatpush1.bf16.xpose.msra.mxu0 0
        %1311 = vmatprep.subr.bf16.mxu0 0
        %1312 = vmatpush1.bf16.xpose.msra.mxu0 0
        %1313 = vmatprep.mubr.bf16.mxu0 0
        %1314 = vmatmul.mubr.bf16.gmra.mrb[0].mxu0 %v1276
        %v1315 = vpop.f32.mrb[0].mxu0
        %v1316 = vadd.f32 0.0, %v1315
        %v1317 = vpop.f32.mrb[0].mxu0
        %v1318 = vpop.f32.mrb[0].mxu0
        %v1319 = vpop.f32.mrb[0].mxu0
        %1320 = vdwg.mxu0
        %v1322 = vsel %vm1182, %v842, 0
        %v1325 = vsel %vm1182, %v1011, 0
        %1327 = vmatprep.subr.bf16.mxu0 0
        %1328 = vmatpush1.bf16.xpose.msra.mxu0 %v1325
        %1329 = vmatprep.subr.bf16.mxu0 0
        %1330 = vmatpush1.bf16.xpose.msra.mxu0 0
        %1331 = vmatprep.subr.bf16.mxu0 0
        %1332 = vmatpush1.bf16.xpose.msra.mxu0 0
        %1333 = vmatprep.subr.bf16.mxu0 0
        %1334 = vmatpush1.bf16.xpose.msra.mxu0 0
        %1335 = vmatprep.subr.bf16.mxu0 0
        %1336 = vmatpush1.bf16.xpose.msra.mxu0 0
        %1337 = vmatprep.subr.bf16.mxu0 0
        %1338 = vmatpush1.bf16.xpose.msra.mxu0 0
        %1339 = vmatprep.subr.bf16.mxu0 0
        %1340 = vmatpush1.bf16.xpose.msra.mxu0 0
        %1341 = vmatprep.subr.bf16.mxu0 0
        %1342 = vmatpush1.bf16.xpose.msra.mxu0 0
        %1343 = vmatprep.subr.bf16.mxu0 0
        %1344 = vmatpush1.bf16.xpose.msra.mxu0 0
        %1345 = vmatprep.subr.bf16.mxu0 0
        %1346 = vmatpush1.bf16.xpose.msra.mxu0 0
        %1347 = vmatprep.subr.bf16.mxu0 0
        %1348 = vmatpush1.bf16.xpose.msra.mxu0 0
        %1349 = vmatprep.subr.bf16.mxu0 0
        %1350 = vmatpush1.bf16.xpose.msra.mxu0 0
        %1351 = vmatprep.subr.bf16.mxu0 0
        %1352 = vmatpush1.bf16.xpose.msra.mxu0 0
        %1353 = vmatprep.subr.bf16.mxu0 0
        %1354 = vmatpush1.bf16.xpose.msra.mxu0 0
        %1355 = vmatprep.subr.bf16.mxu0 0
        %1356 = vmatpush1.bf16.xpose.msra.mxu0 0
        %1357 = vmatprep.subr.bf16.mxu0 0
        %1358 = vmatpush1.bf16.xpose.msra.mxu0 0
        %1359 = vmatprep.mubr.bf16.mxu0 0
        %1360 = vmatmul.mubr.bf16.gmra.mrb[0].mxu0 %v1322
        %v1361 = vpop.f32.mrb[0].mxu0
        %v1362 = vadd.f32 0.0, %v1361
        %v1363 = vpop.f32.mrb[0].mxu0
        %v1364 = vpop.f32.mrb[0].mxu0
        %v1365 = vpop.f32.mrb[0].mxu0
        %1366 = vdwg.mxu0
        %v1367 = vsel %vm1182, %v1224, -inf
        %1368 = vmax.xlane.f32.xlu0 %v1367
        %v1369 = vpop.xlane.xlu0 %1368
        %v1370 = vsel %vm1182, %v1270, -inf
        %1371 = vmax.xlane.f32.xlu0 %v1370
        %v1372 = vpop.xlane.xlu0 %1371
        %v1373 = vsel %vm1182, %v1316, -inf
        %1374 = vmax.xlane.f32.xlu0 %v1373
        %v1375 = vpop.xlane.xlu0 %1374
        %v1376 = vsel %vm1182, %v1362, -inf
        %1377 = vmax.xlane.f32.xlu0 %v1376
        %v1378 = vpop.xlane.xlu0 %1377
        %v1379 = vsub.f32 %v1224, %v1369
        %v1380 = vsub.f32 %v1270, %v1372
        %v1381 = vsub.f32 %v1316, %v1375
        %v1382 = vsub.f32 %v1362, %v1378
        %v1383 = vmul.f32 %v1379, 1.442695
        %v1384 = vpow.pop %v1383
        %v1385 = vmul.f32 %v1380, 1.442695
        %v1386 = vpow.pop %v1385
        %v1387 = vmul.f32 %v1381, 1.442695
        %v1388 = vpow.pop %v1387
        %v1389 = vmul.f32 %v1382, 1.442695
        %v1390 = vpow.pop %v1389
        %v1391 = vsel %vm1182, %v1384, 0.0
        %1392 = vadd.xlane.f32.xlu0 %v1391
        %v1393 = vpop.xlane.xlu0 %1392
        %v1394 = vsel %vm1182, %v1386, 0.0
        %1395 = vadd.xlane.f32.xlu0 %v1394
        %v1396 = vpop.xlane.xlu0 %1395
        %v1397 = vsel %vm1182, %v1388, 0.0
        %1398 = vadd.xlane.f32.xlu0 %v1397
        %v1399 = vpop.xlane.xlu0 %1398
        %v1400 = vsel %vm1182, %v1390, 0.0
        %1401 = vadd.xlane.f32.xlu0 %v1400
        %v1402 = vpop.xlane.xlu0 %1401
        %v1403 = vrcp.pop %v1393
        %v1404 = vrcp.pop %v1396
        %v1405 = vrcp.pop %v1399
        %v1406 = vrcp.pop %v1402
        %v1407 = vmul.f32 %v1384, %v1403
        %v1408 = vmul.f32 %v1386, %v1404
        %v1409 = vmul.f32 %v1388, %v1405
        %v1410 = vmul.f32 %v1390, %v1406
        %v1411 = vpack.c.bf16 %v1407, %v1407
        %v1412 = vpack.c.bf16 %v1408, %v1408
        %v1413 = vpack.c.bf16 %v1409, %v1409
        %v1414 = vpack.c.bf16 %v1410, %v1410
        %v1416 = vsel %vm1182, %v1411, 0
        %vm1418 = vcmask 1043456
        %v1420 = vsel %vm1418, %v1172, 0
        %1422 = vmatprep.subr.bf16.mxu0 0
        %1423 = vmatpush1.bf16.msra.mxu0 %v1420
        %1424 = vmatprep.subr.bf16.mxu0 0
        %1425 = vmatpush1.bf16.msra.mxu0 0
        %1426 = vmatprep.subr.bf16.mxu0 0
        %1427 = vmatpush1.bf16.msra.mxu0 0
        %1428 = vmatprep.subr.bf16.mxu0 0
        %1429 = vmatpush1.bf16.msra.mxu0 0
        %1430 = vmatprep.subr.bf16.mxu0 0
        %1431 = vmatpush1.bf16.msra.mxu0 0
        %1432 = vmatprep.subr.bf16.mxu0 0
        %1433 = vmatpush1.bf16.msra.mxu0 0
        %1434 = vmatprep.subr.bf16.mxu0 0
        %1435 = vmatpush1.bf16.msra.mxu0 0
        %1436 = vmatprep.subr.bf16.mxu0 0
        %1437 = vmatpush1.bf16.msra.mxu0 0
        %1438 = vmatprep.subr.bf16.mxu0 0
        %1439 = vmatpush1.bf16.msra.mxu0 0
        %1440 = vmatprep.subr.bf16.mxu0 0
        %1441 = vmatpush1.bf16.msra.mxu0 0
        %1442 = vmatprep.subr.bf16.mxu0 0
        %1443 = vmatpush1.bf16.msra.mxu0 0
        %1444 = vmatprep.subr.bf16.mxu0 0
        %1445 = vmatpush1.bf16.msra.mxu0 0
        %1446 = vmatprep.subr.bf16.mxu0 0
        %1447 = vmatpush1.bf16.msra.mxu0 0
        %1448 = vmatprep.subr.bf16.mxu0 0
        %1449 = vmatpush1.bf16.msra.mxu0 0
        %1450 = vmatprep.subr.bf16.mxu0 0
        %1451 = vmatpush1.bf16.msra.mxu0 0
        %1452 = vmatprep.subr.bf16.mxu0 0
        %1453 = vmatpush1.bf16.msra.mxu0 0
        %1454 = vmatprep.mubr.bf16.mxu0 0
        %1455 = vmatmul.mubr.bf16.gmra.mrb[0].mxu0 %v1416
        %v1456 = vpop.f32.mrb[0].mxu0
        %v1457 = vadd.f32 0.0, %v1456
        %v1458 = vpop.f32.mrb[0].mxu0
        %v1459 = vpop.f32.mrb[0].mxu0
        %v1460 = vpop.f32.mrb[0].mxu0
        %1461 = vdwg.mxu0
        %v1463 = vsel %vm1182, %v1412, 0
        %v1466 = vsel %vm1418, %v1175, 0
        %1468 = vmatprep.subr.bf16.mxu0 0
        %1469 = vmatpush1.bf16.msra.mxu0 %v1466
        %1470 = vmatprep.subr.bf16.mxu0 0
        %1471 = vmatpush1.bf16.msra.mxu0 0
        %1472 = vmatprep.subr.bf16.mxu0 0
        %1473 = vmatpush1.bf16.msra.mxu0 0
        %1474 = vmatprep.subr.bf16.mxu0 0
        %1475 = vmatpush1.bf16.msra.mxu0 0
        %1476 = vmatprep.subr.bf16.mxu0 0
        %1477 = vmatpush1.bf16.msra.mxu0 0
        %1478 = vmatprep.subr.bf16.mxu0 0
        %1479 = vmatpush1.bf16.msra.mxu0 0
        %1480 = vmatprep.subr.bf16.mxu0 0
        %1481 = vmatpush1.bf16.msra.mxu0 0
        %1482 = vmatprep.subr.bf16.mxu0 0
        %1483 = vmatpush1.bf16.msra.mxu0 0
        %1484 = vmatprep.subr.bf16.mxu0 0
        %1485 = vmatpush1.bf16.msra.mxu0 0
        %1486 = vmatprep.subr.bf16.mxu0 0
        %1487 = vmatpush1.bf16.msra.mxu0 0
        %1488 = vmatprep.subr.bf16.mxu0 0
        %1489 = vmatpush1.bf16.msra.mxu0 0
        %1490 = vmatprep.subr.bf16.mxu0 0
        %1491 = vmatpush1.bf16.msra.mxu0 0
        %1492 = vmatprep.subr.bf16.mxu0 0
        %1493 = vmatpush1.bf16.msra.mxu0 0
        %1494 = vmatprep.subr.bf16.mxu0 0
        %1495 = vmatpush1.bf16.msra.mxu0 0
        %1496 = vmatprep.subr.bf16.mxu0 0
        %1497 = vmatpush1.bf16.msra.mxu0 0
        %1498 = vmatprep.subr.bf16.mxu0 0
        %1499 = vmatpush1.bf16.msra.mxu0 0
        %1500 = vmatprep.mubr.bf16.mxu0 0
        %1501 = vmatmul.mubr.bf16.gmra.mrb[0].mxu0 %v1463
        %v1502 = vpop.f32.mrb[0].mxu0
        %v1503 = vadd.f32 0.0, %v1502
        %v1504 = vpop.f32.mrb[0].mxu0
        %v1505 = vpop.f32.mrb[0].mxu0
        %v1506 = vpop.f32.mrb[0].mxu0
        %1507 = vdwg.mxu0
        %v1509 = vsel %vm1182, %v1413, 0
        %v1512 = vsel %vm1418, %v1178, 0
        %1514 = vmatprep.subr.bf16.mxu0 0
        %1515 = vmatpush1.bf16.msra.mxu0 %v1512
        %1516 = vmatprep.subr.bf16.mxu0 0
        %1517 = vmatpush1.bf16.msra.mxu0 0
        %1518 = vmatprep.subr.bf16.mxu0 0
        %1519 = vmatpush1.bf16.msra.mxu0 0
        %1520 = vmatprep.subr.bf16.mxu0 0
        %1521 = vmatpush1.bf16.msra.mxu0 0
        %1522 = vmatprep.subr.bf16.mxu0 0
        %1523 = vmatpush1.bf16.msra.mxu0 0
        %1524 = vmatprep.subr.bf16.mxu0 0
        %1525 = vmatpush1.bf16.msra.mxu0 0
        %1526 = vmatprep.subr.bf16.mxu0 0
        %1527 = vmatpush1.bf16.msra.mxu0 0
        %1528 = vmatprep.subr.bf16.mxu0 0
        %1529 = vmatpush1.bf16.msra.mxu0 0
        %1530 = vmatprep.subr.bf16.mxu0 0
        %1531 = vmatpush1.bf16.msra.mxu0 0
        %1532 = vmatprep.subr.bf16.mxu0 0
        %1533 = vmatpush1.bf16.msra.mxu0 0
        %1534 = vmatprep.subr.bf16.mxu0 0
        %1535 = vmatpush1.bf16.msra.mxu0 0
        %1536 = vmatprep.subr.bf16.mxu0 0
        %1537 = vmatpush1.bf16.msra.mxu0 0
        %1538 = vmatprep.subr.bf16.mxu0 0
        %1539 = vmatpush1.bf16.msra.mxu0 0
        %1540 = vmatprep.subr.bf16.mxu0 0
        %1541 = vmatpush1.bf16.msra.mxu0 0
        %1542 = vmatprep.subr.bf16.mxu0 0
        %1543 = vmatpush1.bf16.msra.mxu0 0
        %1544 = vmatprep.subr.bf16.mxu0 0
        %1545 = vmatpush1.bf16.msra.mxu0 0
        %1546 = vmatprep.mubr.bf16.mxu0 0
        %1547 = vmatmul.mubr.bf16.gmra.mrb[0].mxu0 %v1509
        %v1548 = vpop.f32.mrb[0].mxu0
        %v1549 = vadd.f32 0.0, %v1548
        %v1550 = vpop.f32.mrb[0].mxu0
        %v1551 = vpop.f32.mrb[0].mxu0
        %v1552 = vpop.f32.mrb[0].mxu0
        %1553 = vdwg.mxu0
        %v1555 = vsel %vm1182, %v1414, 0
        %v1558 = vsel %vm1418, %v1181, 0
        %1560 = vmatprep.subr.bf16.mxu0 0
        %1561 = vmatpush1.bf16.msra.mxu0 %v1558
        %1562 = vmatprep.subr.bf16.mxu0 0
        %1563 = vmatpush1.bf16.msra.mxu0 0
        %1564 = vmatprep.subr.bf16.mxu0 0
        %1565 = vmatpush1.bf16.msra.mxu0 0
        %1566 = vmatprep.subr.bf16.mxu0 0
        %1567 = vmatpush1.bf16.msra.mxu0 0
        %1568 = vmatprep.subr.bf16.mxu0 0
        %1569 = vmatpush1.bf16.msra.mxu0 0
        %1570 = vmatprep.subr.bf16.mxu0 0
        %1571 = vmatpush1.bf16.msra.mxu0 0
        %1572 = vmatprep.subr.bf16.mxu0 0
        %1573 = vmatpush1.bf16.msra.mxu0 0
        %1574 = vmatprep.subr.bf16.mxu0 0
        %1575 = vmatpush1.bf16.msra.mxu0 0
        %1576 = vmatprep.subr.bf16.mxu0 0
        %1577 = vmatpush1.bf16.msra.mxu0 0
        %1578 = vmatprep.subr.bf16.mxu0 0
        %1579 = vmatpush1.bf16.msra.mxu0 0
        %1580 = vmatprep.subr.bf16.mxu0 0
        %1581 = vmatpush1.bf16.msra.mxu0 0
        %1582 = vmatprep.subr.bf16.mxu0 0
        %1583 = vmatpush1.bf16.msra.mxu0 0
        %1584 = vmatprep.subr.bf16.mxu0 0
        %1585 = vmatpush1.bf16.msra.mxu0 0
        %1586 = vmatprep.subr.bf16.mxu0 0
        %1587 = vmatpush1.bf16.msra.mxu0 0
        %1588 = vmatprep.subr.bf16.mxu0 0
        %1589 = vmatpush1.bf16.msra.mxu0 0
        %1590 = vmatprep.subr.bf16.mxu0 0
        %1591 = vmatpush1.bf16.msra.mxu0 0
        %1592 = vmatprep.mubr.bf16.mxu0 0
        %1593 = vmatmul.mubr.bf16.gmra.mrb[0].mxu0 %v1555
        %v1594 = vpop.f32.mrb[0].mxu0
        %v1595 = vadd.f32 0.0, %v1594
        %v1596 = vpop.f32.mrb[0].mxu0
        %v1597 = vpop.f32.mrb[0].mxu0
        %v1598 = vpop.f32.mrb[0].mxu0
        %1599 = vdwg.mxu0
        %v1600 = vcombine.low %v1457, %v1549
        %v1601 = vcombine.high %v1457, %v1549
        %v1603 = vunpack.c.l.s4 1983009808
        %v1604 = vunpack.c.0.s8 %v1603
        %v1605 = vlaneseq
        %v1606 = vshrl.u32 %v1605, 7
        %v1607 = vsub.s32 %v1604, %v1606
        %v1608 = vrot.slane %v1600, %v1607
        %v1610 = vunpack.c.l.s4 1983009808
        %v1611 = vunpack.c.0.s8 %v1610
        %v1612 = vlaneseq
        %v1613 = vshrl.u32 %v1612, 7
        %v1614 = vsub.s32 %v1611, %v1613
        %v1615 = vrot.slane %v1601, %v1614
        %v1616 = vcombine.low %v1503, %v1595
        %v1617 = vcombine.high %v1503, %v1595
        %v1619 = vunpack.c.l.s4 1983009808
        %v1620 = vunpack.c.0.s8 %v1619
        %v1621 = vlaneseq
        %v1622 = vshrl.u32 %v1621, 7
        %v1623 = vsub.s32 %v1620, %v1622
        %v1624 = vrot.slane %v1616, %v1623
        %v1626 = vunpack.c.l.s4 1983009808
        %v1627 = vunpack.c.0.s8 %v1626
        %v1628 = vlaneseq
        %v1629 = vshrl.u32 %v1628, 7
        %v1630 = vsub.s32 %v1627, %v1629
        %v1631 = vrot.slane %v1617, %v1630
        %v1632 = vcombine.low %v1608, %v1624
        %v1633 = vcombine.high %v1608, %v1624
        %v1635 = vunpack.c.l.s4 1934713408
        %v1636 = vunpack.c.0.s8 %v1635
        %v1637 = vlaneseq
        %v1638 = vshrl.u32 %v1637, 7
        %v1639 = vsub.s32 %v1636, %v1638
        %v1640 = vrot.slane %v1632, %v1639
        %v1642 = vunpack.c.l.s4 1934713408
        %v1643 = vunpack.c.0.s8 %v1642
        %v1644 = vlaneseq
        %v1645 = vshrl.u32 %v1644, 7
        %v1646 = vsub.s32 %v1643, %v1645
        %v1647 = vrot.slane %v1633, %v1646
        %v1648 = vcombine.low %v1615, %v1631
        %v1649 = vcombine.high %v1615, %v1631
        %v1651 = vunpack.c.l.s4 1934713408
        %v1652 = vunpack.c.0.s8 %v1651
        %v1653 = vlaneseq
        %v1654 = vshrl.u32 %v1653, 7
        %v1655 = vsub.s32 %v1652, %v1654
        %v1656 = vrot.slane %v1648, %v1655
        %v1658 = vunpack.c.l.s4 1934713408
        %v1659 = vunpack.c.0.s8 %v1658
        %v1660 = vlaneseq
        %v1661 = vshrl.u32 %v1660, 7
        %v1662 = vsub.s32 %v1659, %v1661
        %v1663 = vrot.slane %v1649, %v1662
        %v1664 = vcombine.high %v1640, 0.0
        %v1665 = vcombine.high %v1647, 0.0
        %v1666 = vcombine.high %v1656, 0.0
        %v1667 = vcombine.high %v1663, 0.0
        %v1668 = vcombine.low %v1640, %v1647
        %v1670 = vunpack.c.l.s4 1983009808
        %v1671 = vunpack.c.0.s8 %v1670
        %v1672 = vlaneseq
        %v1673 = vshrl.u32 %v1672, 7
        %v1674 = vsub.s32 %v1671, %v1673
        %v1675 = vrot.slane %v1668, %v1674
        %v1676 = vcombine.low %v1664, %v1665
        %v1678 = vunpack.c.l.s4 1983009808
        %v1679 = vunpack.c.0.s8 %v1678
        %v1680 = vlaneseq
        %v1681 = vshrl.u32 %v1680, 7
        %v1682 = vsub.s32 %v1679, %v1681
        %v1683 = vrot.slane %v1676, %v1682
        %v1684 = vcombine.low %v1656, %v1663
        %v1686 = vunpack.c.l.s4 1983009808
        %v1687 = vunpack.c.0.s8 %v1686
        %v1688 = vlaneseq
        %v1689 = vshrl.u32 %v1688, 7
        %v1690 = vsub.s32 %v1687, %v1689
        %v1691 = vrot.slane %v1684, %v1690
        %v1692 = vcombine.low %v1666, %v1667
        %v1694 = vunpack.c.l.s4 1983009808
        %v1695 = vunpack.c.0.s8 %v1694
        %v1696 = vlaneseq
        %v1697 = vshrl.u32 %v1696, 7
        %v1698 = vsub.s32 %v1695, %v1697
        %v1699 = vrot.slane %v1692, %v1698
        %v1700 = vcombine.low %v1675, %v1683
        %v1701 = vcombine.high %v1675, %v1683
        %v1703 = vunpack.c.l.s4 1934713408
        %v1704 = vunpack.c.0.s8 %v1703
        %v1705 = vlaneseq
        %v1706 = vshrl.u32 %v1705, 7
        %v1707 = vsub.s32 %v1704, %v1706
        %v1708 = vrot.slane %v1700, %v1707
        %v1710 = vunpack.c.l.s4 1934713408
        %v1711 = vunpack.c.0.s8 %v1710
        %v1712 = vlaneseq
        %v1713 = vshrl.u32 %v1712, 7
        %v1714 = vsub.s32 %v1711, %v1713
        %v1715 = vrot.slane %v1701, %v1714
        %v1716 = vcombine.low %v1691, %v1699
        %v1717 = vcombine.high %v1691, %v1699
        %v1719 = vunpack.c.l.s4 1934713408
        %v1720 = vunpack.c.0.s8 %v1719
        %v1721 = vlaneseq
        %v1722 = vshrl.u32 %v1721, 7
        %v1723 = vsub.s32 %v1720, %v1722
        %v1724 = vrot.slane %v1716, %v1723
        %v1726 = vunpack.c.l.s4 1934713408
        %v1727 = vunpack.c.0.s8 %v1726
        %v1728 = vlaneseq
        %v1729 = vshrl.u32 %v1728, 7
        %v1730 = vsub.s32 %v1727, %v1729
        %v1731 = vrot.slane %v1717, %v1730
        %v1732 = vcombine.low %v1708, %v1724
        %v1733 = vcombine.high %v1708, %v1724
        %v1734 = vcombine.low %v1715, %v1731
        %v1735 = vcombine.high %v1715, %v1731
        %1737 = vrot.lane.b32.xlu0 %v1733, 8
        %v1738 = vpop.permute.xlu0 %1737
        %1741 = vrot.lane.b32.xlu0 %v1734, 16
        %v1742 = vpop.permute.xlu0 %1741
        %1745 = vrot.lane.b32.xlu0 %v1735, 24
        %v1746 = vpop.permute.xlu0 %1745
        %v1748 = vsel %vm1182, %v1732, %v1738
        %vm1749 = vcmask 130048
        %v1750 = vsel %vm1749, %v1748, %v1742
        %vm1751 = vcmask 195584
        %v1752 = vsel %vm1751, %v1750, %v1746
        %v1753 = vpack.c.bf16 %v1752, %v1752
        %v1754 = vld [vmem:[#allocation13] sm:$0xf]
        %v1755 = vld [vmem:[#allocation13 + $0x4] sm:$0xf]
        %v1756 = vld [vmem:[#allocation13 + $0x8] sm:$0xf]
        %v1757 = vld [vmem:[#allocation13 + $0xc] sm:$0xf]
        %v1758 = vld [vmem:[#allocation14] sm:$0x1]
        %v1760 = vlaneseq
        %v1761 = vshrl.u32 %v1760, 7
        %v1762 = vsub.s32 0, %v1761
        %v1763 = vrot.slane %v1758, %v1762
        %v1769 = vunpack.c.l.b16 %v1754
        %v1770 = vunpack.c.l.b16 %v1755
        %v1771 = vunpack.c.l.b16 %v1756
        %v1772 = vunpack.c.l.b16 %v1757
        %v1773 = vpack.c.b16 %v1770, %v1769
        %v1774 = vpack.c.b16 %v1772, %v1771
        %v1778 = vsel %vm562, %v1753, 0
        %1780 = vmatprep.subr.bf16.mxu0 0
        %1781 = vmatpush1.bf16.msra.mxu0 %v1773
        %1782 = vmatprep.subr.bf16.mxu0 0
        %1783 = vmatpush1.bf16.msra.mxu0 %v1774
        %1784 = vmatprep.subr.bf16.mxu0 0
        %1785 = vmatpush1.bf16.msra.mxu0 0
        %1786 = vmatprep.subr.bf16.mxu0 0
        %1787 = vmatpush1.bf16.msra.mxu0 0
        %1788 = vmatprep.subr.bf16.mxu0 0
        %1789 = vmatpush1.bf16.msra.mxu0 0
        %1790 = vmatprep.subr.bf16.mxu0 0
        %1791 = vmatpush1.bf16.msra.mxu0 0
        %1792 = vmatprep.subr.bf16.mxu0 0
        %1793 = vmatpush1.bf16.msra.mxu0 0
        %1794 = vmatprep.subr.bf16.mxu0 0
        %1795 = vmatpush1.bf16.msra.mxu0 0
        %1796 = vmatprep.subr.bf16.mxu0 0
        %1797 = vmatpush1.bf16.msra.mxu0 0
        %1798 = vmatprep.subr.bf16.mxu0 0
        %1799 = vmatpush1.bf16.msra.mxu0 0
        %1800 = vmatprep.subr.bf16.mxu0 0
        %1801 = vmatpush1.bf16.msra.mxu0 0
        %1802 = vmatprep.subr.bf16.mxu0 0
        %1803 = vmatpush1.bf16.msra.mxu0 0
        %1804 = vmatprep.subr.bf16.mxu0 0
        %1805 = vmatpush1.bf16.msra.mxu0 0
        %1806 = vmatprep.subr.bf16.mxu0 0
        %1807 = vmatpush1.bf16.msra.mxu0 0
        %1808 = vmatprep.subr.bf16.mxu0 0
        %1809 = vmatpush1.bf16.msra.mxu0 0
        %1810 = vmatprep.subr.bf16.mxu0 0
        %1811 = vmatpush1.bf16.msra.mxu0 0
        %1812 = vmatprep.mubr.bf16.mxu0 0
        %1813 = vmatmul.mubr.bf16.gmra.mrb[0].mxu0 %v1778
        %v1814 = vpop.f32.mrb[0].mxu0
        %v1815 = vadd.f32 %v1763, %v1814
        %v1816 = vpop.f32.mrb[0].mxu0
        %v1817 = vpop.f32.mrb[0].mxu0
        %v1818 = vpop.f32.mrb[0].mxu0
        %1819 = vdwg.mxu0
        %v1820 = vadd.f32 %v536, %v1815
        %v1821 = vld [vmem:[#allocation16] sm:$0x1]
        %v1822 = vld [vmem:[#allocation17] sm:$0x1]
        %v1823 = vsel %vm562, %v1820, 0.0
        %1824 = vadd.xlane.f32.xlu0 %v1823
        %v1825 = vpop.xlane.xlu0 %1824
        %v1826 = vrcp.pop 32.0
        %v1827 = vmul.f32 %v1825, %v1826
        %v1828 = vsub.f32 %v1820, %v1827
        %v1829 = vmul.f32 %v1828, %v1828
        %v1830 = vsel %vm562, %v1829, 0.0
        %1831 = vadd.xlane.f32.xlu0 %v1830
        %v1832 = vpop.xlane.xlu0 %1831
        %v1833 = vmul.f32 %v1832, %v1826
        %v1834 = vadd.f32 %v1833, 1e-05
        %v1835 = vrsqrt.pop %v1834
        %v1836 = vmul.f32 %v1828, %v1835
        %v1838 = vlaneseq
        %v1839 = vshrl.u32 %v1838, 7
        %v1840 = vsub.s32 0, %v1839
        %v1841 = vrot.slane %v1821, %v1840
        %v1843 = vmul.f32 %v1836, %v1841
        %v1845 = vlaneseq
        %v1846 = vshrl.u32 %v1845, 7
        %v1847 = vsub.s32 0, %v1846
        %v1848 = vrot.slane %v1822, %v1847
        %v1850 = vadd.f32 %v1843, %v1848
        %1851 = vst.msk [vmem:[%s534] sm:$0xff] %vm562, %v1850
        %s1852 = sand.u32 %s278, 1
        %s1853 = scalar_lea.sflag [#allocation4], %s1852
        %s1854 = sand.u32 %s278, 1
        %s1855 = smul.addr %s1854, 8
        %s1856 = scalar_lea.vmem [#allocation19], %s1855
        // Predicated region
        $region101: #{decoder.7} parent=59 // pred_check
          %p1857 = pneg %p288
        $region102: #{decoder.7} parent=59 // pred_check_branch
          %1859 = sbr.rel (%p1857) target = $region104
        $region103: #{decoder.7} parent=59 // pred_region
          %s1861 = ssub.s32 128, 128
          %1862 = vsyncadd %s1853, %s1861
          %s1863 = sadd.s32 %s39, %s38
          %s1864 = smul.addr %s1863, 128
          %s1865 = scalar_lea.hbm %s10, %s1864
          %s1867 = sshll.u32 %s1856, 4
          %s1868 = int_to_ptr.vmem [resolvable:$true] %s1867
          %1870 = dma.vmem_to_hbm [thread:$0]  %s1868, 128, %s1865, %s1853
        $region104: #{decoder.7} parent=59 // pred_fallthru
          _
      $region60: #{decoder.7} parent=5 // pred_fallthru
        _
      %p1871 = scmp.le.s32.totalorder 2, %s29
      // Predicated region
      $region105: #{decoder.7} parent=5 // pred_check
        %p1872 = pneg %p1871
      $region106: #{decoder.7} parent=5 // pred_check_branch
        %1874 = sbr.rel (%p1872) target = $region108
      $region107: #{decoder.7} parent=5 // pred_region
        %s1875 = ssub.s32 %s29, 2
        // Predicated region
        $region109: #{decoder.7} parent=107 // pred_check
          %p1876 = pneg %p294
        $region110: #{decoder.7} parent=107 // pred_check_branch
          %1878 = sbr.rel (%p1876) target = $region112
        $region111: #{decoder.7} parent=107 // pred_region
          %s1879 = sand.u32 %s279, 1
          %s1880 = scalar_lea.sflag [#allocation4], %s1879
          %s1881 = sand.u32 %s279, 1
          %s1882 = smul.addr %s1881, 8
          %s1883 = scalar_lea.vmem [#allocation19], %s1882
          %1884 = dma.done %s1880, 128
        $region112: #{decoder.7} parent=107 // pred_fallthru
          _
      $region108: #{decoder.7} parent=5 // pred_fallthru
        _
    $region6: #{decoder.7} parent=1 // loop_footer
      %s33 = sadd.s32 1, %s29
    $region7: #{decoder.7} parent=1 // loop_footer_branch
      %28 = sbr.rel target = $region3
    $region8: #{decoder.7} parent=1 // loop_exit
      _
    %1885 = vsyncpa [#allocation3], 1
    %s1886 = scalar_lea.sflag [#allocation3], 1
    %1887 = vsyncpa %s1886, 1
    %1888 = vsyncpa [#allocation6], 1
    %s1889 = scalar_lea.sflag [#allocation6], 1
    %1890 = vsyncpa %s1889, 1
    %1891 = vsyncpa [#allocation9], 1
    %1892 = vsyncpa [#allocation12], 1
    %1893 = vsyncpa [#allocation15], 1
    %1894 = vsyncpa [#allocation18], 1
    %1895 = vsyncpa [#allocation4], 1
    %s1896 = scalar_lea.sflag [#allocation4], 1
    %1897 = vsyncpa %s1896, 1

</llo_original>
